<compile_context>
chip_gen: v7x
topology: tpu7x:2x2x1
jax: 0.10.0
libtpu: 0.0.40
codegen_flags: <defaults>
</compile_context>

<pallas_src>
import functools

import jax
import jax.numpy as jnp
from jax.experimental import pallas as pl
from jax.experimental.pallas import tpu as pltpu


# ---------------------------------------------------------------------------
# Pallas kernel: fused input-conv matmul + in-kernel 3x3 circular hidden conv
# (9 shifted accumulating MXU dots from the resident halo-padded h image)
# + LSTM gate math, all in VMEM.
# ---------------------------------------------------------------------------
def convlstm_kernel(px_ref, hpad_ref, c_ref, wx_ref, wh_ref, b_ref, out_ref,
                    *, hidden, th, wo):
    ch = hidden
    tm = th * wo
    i0 = pl.program_id(1) * th            # first output image-row of this tile

    # Input-conv contribution: one fused (tm, Kx) x (Kx, 4*Ch) MXU matmul,
    # bf16 operands, f32 accumulation.  Bias added once to the fused slab.
    pre = jnp.dot(px_ref[...], wx_ref[...], preferred_element_type=jnp.float32)
    pre = pre + b_ref[...]                                    # (1, 4*Ch) bcast

    # Hidden 3x3 circular conv: 9 shifted accumulating dots from the resident
    # halo-padded hidden image (no im2col / 9x HBM expansion of h).
    for di in range(3):
        for dj in range(3):
            tap = hpad_ref[pl.ds(i0 + di, th), pl.ds(dj, wo), :]  # (th, wo, Ch)
            tap = tap.reshape(tm, ch)                             # layout no-op (wo % 8 == 0)
            pre = pre + jnp.dot(tap, wh_ref[di * 3 + dj],
                                preferred_element_type=jnp.float32)

    gi = jax.nn.sigmoid(pre[:, 0 * ch:1 * ch])     # input gate
    gf = jax.nn.sigmoid(pre[:, 1 * ch:2 * ch])     # forget gate
    gc = jnp.tanh(pre[:, 2 * ch:3 * ch])           # candidate cell
    go = jax.nn.sigmoid(pre[:, 3 * ch:4 * ch])     # output gate

    cc = gf * c_ref[...] + gi * gc                 # cell state stays f32
    ch_new = go * jnp.tanh(cc)

    # Two slice stores (no in-kernel concatenate): [ch | cc].
    out_ref[:, :ch] = ch_new.astype(out_ref.dtype)
    out_ref[:, ch:] = cc.astype(out_ref.dtype)


# ---------------------------------------------------------------------------
# Wrapper-side data movement (pure layout work, built directly in bf16).
# ---------------------------------------------------------------------------
def circular_im2col(x_nchw, k, stride, pad, dtype=jnp.bfloat16):
    """Circular-padded im2col: NCHW -> (B, Ho*Wo, C*k*k), column order
    (c, ki, kj) matching the fused weight layout.  Built directly in `dtype`
    so no f32 patch matrix ever hits HBM."""
    x = x_nchw.astype(dtype)
    B, C, H, W = x.shape
    xp = jnp.pad(x, ((0, 0), (0, 0), (pad, pad), (pad, pad)), mode="wrap")
    Hp, Wp = H + 2 * pad, W + 2 * pad
    Ho = (Hp - k) // stride + 1
    Wo = (Wp - k) // stride + 1
    cols = []
    for di in range(k):
        for dj in range(k):
            cols.append(xp[:, :,
                           di: di + (Ho - 1) * stride + 1: stride,
                           dj: dj + (Wo - 1) * stride + 1: stride])
    p = jnp.stack(cols, axis=2)               # (B, C, k*k, Ho, Wo)
    p = p.transpose(0, 3, 4, 1, 2)            # (B, Ho, Wo, C, k*k)
    return p.reshape(B, Ho * Wo, C * k * k), Ho, Wo


def _choose_row_block(ho, wo, row_cap=4096):
    """Image rows per grid step.  Largest divisor of Ho whose flattened tile
    (th*Wo rows) stays under `row_cap`; a grid of 1 along this axis is fine
    (single-TC chips) — no forced >=2 split."""
    best = None
    for th in range(1, ho + 1):
        if ho % th:
            continue
        if th != ho and (th * wo) % 8:
            continue                          # (8,128) block constraint
        if th * wo <= row_cap:
            best = th
    return best if best is not None else ho   # whole-image fallback (full dim)


# ---------------------------------------------------------------------------
# Parameter init (deterministic, mirrors ConvLSTMCell.__init__):
# raw PyTorch-layout conv weights (for the reference) + fused bf16 matmul
# weights (for the kernel; cast hoisted out of the per-step call).
# ---------------------------------------------------------------------------
def init_params(key, input_channels, hidden_channels, input_kernel_size,
                input_stride, input_padding):
    kx = input_kernel_size
    cin = input_channels
    ch = hidden_channels
    keys = jax.random.split(key, 8)
    fan_x = cin * kx * kx
    fan_h = ch * 3 * 3
    bx = fan_x ** -0.5
    bh = fan_h ** -0.5

    def u(k, shape, bound):
        return jax.random.uniform(k, shape, jnp.float32, -bound, bound)

    # PyTorch conv weight layout (out, in, kh, kw); gate order (i, f, c, o).
    wx_raw = jnp.stack([u(keys[g], (ch, cin, kx, kx), bx) for g in range(4)])
    wh_raw = jnp.stack([u(keys[4 + g], (ch, ch, 3, 3), bh) for g in range(4)])

    # Kernel-side fused layouts.
    #  wx:  (Cin*kx*kx, 4*Ch)   column order (c, ki, kj), gate blocks (i,f,c,o)
    #  wh:  (9, Ch, 4*Ch)       one (Ch, 4*Ch) tap per (di, dj)
    wx_fused = wx_raw.transpose(2, 3, 4, 0, 1).reshape(fan_x, 4 * ch)
    wh_taps = wh_raw.transpose(3, 4, 2, 0, 1).reshape(9, ch, 4 * ch)

    # Biases: Wxi / Wxf / Wxc zero-initialized, Wxo bias filled with 1.0.
    bias = jnp.concatenate([jnp.zeros((3 * ch,), jnp.float32),
                            jnp.ones((ch,), jnp.float32)]).reshape(1, 4 * ch)

    return dict(
        wx_raw=wx_raw, wh_raw=wh_raw,                 # reference path (f32)
        wx=wx_fused.astype(jnp.bfloat16),             # kernel path (bf16)
        wh=wh_taps.astype(jnp.bfloat16),
        bias=bias,
        kx=kx, stride=input_stride, pad=input_padding, hidden=ch)


# ---------------------------------------------------------------------------
# Forward wrapper (module-facing NCHW in/out).  In a recurrent rollout keep
# h/c in the flattened NHWC forms below and transpose only at the model
# boundary; the fused weights are already stored in bf16 in params.
# ---------------------------------------------------------------------------
def conv_lstm_forward(params, x, h, c, row_cap=4096):
    kx, stride, pad = params["kx"], params["stride"], params["pad"]
    ch = params["hidden"]
    B = x.shape[0]

    # x patches, built directly in bf16 (no f32 HBM materialization of P).
    px, ho, wo = circular_im2col(x, kx, stride, pad, dtype=jnp.bfloat16)
    kx_cols = px.shape[-1]

    assert h.shape == (B, ch, ho, wo), "hidden state must match conv output"
    assert c.shape == (B, ch, ho, wo), "cell state must match conv output"

    # Hidden state: circularly halo-padded NHWC image, bf16 (VMEM-resident).
    h_pad = jnp.pad(h.transpose(0, 2, 3, 1).astype(jnp.bfloat16),
                    ((0, 0), (1, 1), (1, 1), (0, 0)), mode="wrap")
    hp2, wp2 = ho + 2, wo + 2

    # Cell state stays f32.
    c_flat = c.transpose(0, 2, 3, 1).reshape(B, ho * wo, ch)

    th = _choose_row_block(ho, wo, row_cap)
    tm = th * wo
    grid = (B, ho // th)

    n = B * ho * wo
    cost = pl.CostEstimate(
        flops=int(2 * n * kx_cols * 4 * ch + 18 * n * ch * 4 * ch + 10 * n * ch),
        transcendentals=int(5 * n * ch),
        bytes_accessed=int(px.size * 2 + h_pad.size * 2 + c_flat.size * 4
                           + params["wx"].size * 2 + params["wh"].size * 2
                           + params["bias"].size * 4 + n * 2 * ch * 4),
    )

    out = pl.pallas_call(
        functools.partial(convlstm_kernel, hidden=ch, th=th, wo=wo),
        out_shape=jax.ShapeDtypeStruct((B, ho * wo, 2 * ch), jnp.float32),
        grid_spec=pltpu.PrefetchScalarGridSpec(
            num_scalar_prefetch=0,
            grid=grid,
            in_specs=[
                # x patches: (tm, Kx) tile per step
                pl.BlockSpec((None, tm, kx_cols), lambda b, r: (b, r, 0)),
                # halo-padded hidden image: resident per batch element
                pl.BlockSpec((None, hp2, wp2, ch), lambda b, r: (b, 0, 0, 0)),
                # cell-state rows
                pl.BlockSpec((None, tm, ch), lambda b, r: (b, r, 0)),
                # fused input-conv weights (resident)
                pl.BlockSpec((kx_cols, 4 * ch), lambda b, r: (0, 0)),
                # hidden-conv tap weights (resident)
                pl.BlockSpec((9, ch, 4 * ch), lambda b, r: (0, 0, 0)),
                # fused bias (resident)
                pl.BlockSpec((1, 4 * ch), lambda b, r: (0, 0)),
            ],
            out_specs=pl.BlockSpec((None, tm, 2 * ch), lambda b, r: (b, r, 0)),
        ),
        compiler_params=pltpu.CompilerParams(
            dimension_semantics=("parallel", "arbitrary"),
            vmem_limit_bytes=32 * 1024 * 1024),
        cost_estimate=cost,
    )(px, h_pad, c_flat, params["wx"], params["wh"], params["bias"])

    ch_out = out[..., :ch].reshape(B, ho, wo, ch).transpose(0, 3, 1, 2)
    cc_out = out[..., ch:].reshape(B, ho, wo, ch).transpose(0, 3, 1, 2)
    return ch_out, cc_out


# ---------------------------------------------------------------------------
# Pure-JAX reference built from the raw PyTorch-layout conv weights (an
# independent path from the kernel's fused layout).  cast_dtype=bfloat16 gives
# a precision-matched reference (bf16 operands, f32 accumulation).
# ---------------------------------------------------------------------------
def _circular_conv2d(x, w, stride, pad):
    xp = jnp.pad(x, ((0, 0), (0, 0), (pad, pad), (pad, pad)), mode="wrap")
    return jax.lax.conv_general_dilated(
        xp, w, window_strides=(stride, stride), padding="VALID",
        dimension_numbers=("NCHW", "OIHW", "NCHW"),
        precision=jax.lax.Precision.HIGHEST)


def conv_lstm_reference(params, x, h, c, cast_dtype=None):
    def prep(a):
        if cast_dtype is not None:
            a = a.astype(cast_dtype)
        return a.astype(jnp.float32)

    stride, pad = params["stride"], params["pad"]
    xs, hs = prep(x), prep(h)
    wx, wh = prep(params["wx_raw"]), prep(params["wh_raw"])
    bias = (0.0, 0.0, 0.0, 1.0)                   # (i, f, c, o) — ones on Wxo

    pre = [_circular_conv2d(xs, wx[g], stride, pad)
           + _circular_conv2d(hs, wh[g], 1, 1) + bias[g] for g in range(4)]
    ci = jax.nn.sigmoid(pre[0])
    cf = jax.nn.sigmoid(pre[1])
    gc = jnp.tanh(pre[2])
    co = jax.nn.sigmoid(pre[3])
    cc = cf * c + ci * gc
    ch_ = co * jnp.tanh(cc)
    return ch_, cc


if __name__ == "__main__":
    key = jax.random.PRNGKey(0)
    kp, kxk, khk, kck = jax.random.split(key, 4)

    # Small shapes consistent with the module (lstm layer: kernel 3, stride 1,
    # padding 1 -> hidden spatial == input spatial).
    B, Cin, H, W = 2, 4, 16, 16
    Ch = 32

    params = init_params(kp, Cin, Ch, input_kernel_size=3,
                         input_stride=1, input_padding=1)

    x = jax.random.normal(kxk, (B, Cin, H, W), jnp.float32)
    h = jax.random.normal(khk, (B, Ch, H, W), jnp.float32)
    c = jax.random.normal(kck, (B, Ch, H, W), jnp.float32)

    ch_out, cc_out = conv_lstm_forward(params, x, h, c)
    jax.block_until_ready((ch_out, cc_out))
    assert ch_out.shape == (B, Ch, H, W) and cc_out.shape == (B, Ch, H, W)

    # Tight check against a precision-matched (bf16 operand) reference.
    ch_m, cc_m = conv_lstm_reference(params, x, h, c, cast_dtype=jnp.bfloat16)
    assert jnp.allclose(ch_out, ch_m, atol=2e-3, rtol=2e-3), (
        "ch mismatch vs bf16-matched reference: "
        f"{float(jnp.max(jnp.abs(ch_out - ch_m)))}")
    assert jnp.allclose(cc_out, cc_m, atol=2e-3, rtol=2e-3), (
        "cc mismatch vs bf16-matched reference: "
        f"{float(jnp.max(jnp.abs(cc_out - cc_m)))}")

    # Looser semantic check against the full-f32 reference (tolerance covers
    # only the deliberate bf16 operand cast in the kernel).
    ch_ref, cc_ref = conv_lstm_reference(params, x, h, c)
    assert jnp.allclose(ch_out, ch_ref, atol=5e-2, rtol=5e-2)
    assert jnp.allclose(cc_out, cc_ref, atol=5e-2, rtol=5e-2)

    print("KERNEL_OK")
</pallas_src>

<mosaic_0001>
module attributes {stable_mosaic.version = 11 : i64} {
  func.func @convlstm_kernel(%arg0: i32, %arg1: i32, %arg2: memref<1x256x36xbf16, #tpu.memory_space<vmem>>, %arg3: memref<1x18x18x32xbf16, #tpu.memory_space<vmem>>, %arg4: memref<1x256x32xf32, #tpu.memory_space<vmem>>, %arg5: memref<36x128xbf16, #tpu.memory_space<vmem>>, %arg6: memref<9x32x128xbf16, #tpu.memory_space<vmem>>, %arg7: memref<1x128xf32, #tpu.memory_space<vmem>>, %arg8: memref<1x256x64xf32, #tpu.memory_space<vmem>>) attributes {dimension_semantics = [#tpu.dimension_semantics<parallel>, #tpu.dimension_semantics<arbitrary>], iteration_bounds = array<i64: 2, 1>, scalar_prefetch = 0 : i64, scratch_operands = 0 : i64, tpu.core_type = #tpu.core_type<tc>, window_params = [{transform_indices = @transform_0, window_bounds = array<i64: 1, 256, 36>}, {transform_indices = @transform_1, window_bounds = array<i64: 1, 18, 18, 32>}, {transform_indices = @transform_2, window_bounds = array<i64: 1, 256, 32>}, {pipeline_mode = #tpu.pipeline_mode<synchronous>, transform_indices = @transform_3, window_bounds = array<i64: 36, 128>}, {pipeline_mode = #tpu.pipeline_mode<synchronous>, transform_indices = @transform_4, window_bounds = array<i64: 9, 32, 128>}, {pipeline_mode = #tpu.pipeline_mode<synchronous>, transform_indices = @transform_5, window_bounds = array<i64: 1, 128>}, {transform_indices = @transform_6, window_bounds = array<i64: 1, 256, 64>}]} {
    %c16_i32 = arith.constant 16 : i32
    %0 = arith.muli %arg1, %c16_i32 : i32
    %c0 = arith.constant 0 : index
    %c0_0 = arith.constant 0 : index
    %c0_1 = arith.constant 0 : index
    %1 = vector.load %arg2[%c0, %c0_0, %c0_1] : memref<1x256x36xbf16, #tpu.memory_space<vmem>>, vector<1x256x36xbf16>
    %2 = vector.shape_cast %1 : vector<1x256x36xbf16> to vector<256x36xbf16>
    %c0_2 = arith.constant 0 : index
    %c0_3 = arith.constant 0 : index
    %3 = vector.load %arg5[%c0_2, %c0_3] : memref<36x128xbf16, #tpu.memory_space<vmem>>, vector<36x128xbf16>
    %cst = arith.constant dense<0.000000e+00> : vector<256x128xf32>
    %4 = tpu.matmul %2, %3, %cst {dimension_numbers = #tpu.dot_dimension_numbers<[1], [0], [0], [1], [0, 0, 1, 1], [], []>} : vector<256x36xbf16>, vector<36x128xbf16>, vector<256x128xf32> -> vector<256x128xf32>
    %c0_4 = arith.constant 0 : index
    %c0_5 = arith.constant 0 : index
    %5 = vector.load %arg7[%c0_4, %c0_5] : memref<1x128xf32, #tpu.memory_space<vmem>>, vector<1x128xf32>
    %6 = vector.broadcast %5 : vector<1x128xf32> to vector<256x128xf32>
    %7 = arith.addf %4, %6 : vector<256x128xf32>
    %c0_i32 = arith.constant 0 : i32
    %8 = arith.addi %0, %c0_i32 : i32
    %c0_6 = arith.constant 0 : index
    %9 = arith.index_cast %8 : i32 to index
    %c0_7 = arith.constant 0 : index
    %c0_8 = arith.constant 0 : index
    %10 = vector.load %arg3[%c0_6, %9, %c0_7, %c0_8] : memref<1x18x18x32xbf16, #tpu.memory_space<vmem>>, vector<1x16x16x32xbf16>
    %11 = vector.shape_cast %10 : vector<1x16x16x32xbf16> to vector<16x16x32xbf16>
    %12 = vector.shape_cast %11 : vector<16x16x32xbf16> to vector<256x32xbf16>
    %c0_9 = arith.constant 0 : index
    %c0_10 = arith.constant 0 : index
    %c0_11 = arith.constant 0 : index
    %13 = vector.load %arg6[%c0_9, %c0_10, %c0_11] : memref<9x32x128xbf16, #tpu.memory_space<vmem>>, vector<1x32x128xbf16>
    %14 = vector.shape_cast %13 : vector<1x32x128xbf16> to vector<32x128xbf16>
    %cst_12 = arith.constant dense<0.000000e+00> : vector<256x128xf32>
    %15 = tpu.matmul %12, %14, %cst_12 {dimension_numbers = #tpu.dot_dimension_numbers<[1], [0], [0], [1], [0, 0, 1, 1], [], []>} : vector<256x32xbf16>, vector<32x128xbf16>, vector<256x128xf32> -> vector<256x128xf32>
    %16 = arith.addf %7, %15 : vector<256x128xf32>
    %c0_i32_13 = arith.constant 0 : i32
    %17 = arith.addi %0, %c0_i32_13 : i32
    %c0_14 = arith.constant 0 : index
    %18 = arith.index_cast %17 : i32 to index
    %c1 = arith.constant 1 : index
    %c0_15 = arith.constant 0 : index
    %19 = vector.load %arg3[%c0_14, %18, %c1, %c0_15] : memref<1x18x18x32xbf16, #tpu.memory_space<vmem>>, vector<1x16x16x32xbf16>
    %20 = vector.shape_cast %19 : vector<1x16x16x32xbf16> to vector<16x16x32xbf16>
    %21 = vector.shape_cast %20 : vector<16x16x32xbf16> to vector<256x32xbf16>
    %c1_16 = arith.constant 1 : index
    %c0_17 = arith.constant 0 : index
    %c0_18 = arith.constant 0 : index
    %22 = vector.load %arg6[%c1_16, %c0_17, %c0_18] : memref<9x32x128xbf16, #tpu.memory_space<vmem>>, vector<1x32x128xbf16>
    %23 = vector.shape_cast %22 : vector<1x32x128xbf16> to vector<32x128xbf16>
    %cst_19 = arith.constant dense<0.000000e+00> : vector<256x128xf32>
    %24 = tpu.matmul %21, %23, %cst_19 {dimension_numbers = #tpu.dot_dimension_numbers<[1], [0], [0], [1], [0, 0, 1, 1], [], []>} : vector<256x32xbf16>, vector<32x128xbf16>, vector<256x128xf32> -> vector<256x128xf32>
    %25 = arith.addf %16, %24 : vector<256x128xf32>
    %c0_i32_20 = arith.constant 0 : i32
    %26 = arith.addi %0, %c0_i32_20 : i32
    %c0_21 = arith.constant 0 : index
    %27 = arith.index_cast %26 : i32 to index
    %c2 = arith.constant 2 : index
    %c0_22 = arith.constant 0 : index
    %28 = vector.load %arg3[%c0_21, %27, %c2, %c0_22] : memref<1x18x18x32xbf16, #tpu.memory_space<vmem>>, vector<1x16x16x32xbf16>
    %29 = vector.shape_cast %28 : vector<1x16x16x32xbf16> to vector<16x16x32xbf16>
    %30 = vector.shape_cast %29 : vector<16x16x32xbf16> to vector<256x32xbf16>
    %c2_23 = arith.constant 2 : index
    %c0_24 = arith.constant 0 : index
    %c0_25 = arith.constant 0 : index
    %31 = vector.load %arg6[%c2_23, %c0_24, %c0_25] : memref<9x32x128xbf16, #tpu.memory_space<vmem>>, vector<1x32x128xbf16>
    %32 = vector.shape_cast %31 : vector<1x32x128xbf16> to vector<32x128xbf16>
    %cst_26 = arith.constant dense<0.000000e+00> : vector<256x128xf32>
    %33 = tpu.matmul %30, %32, %cst_26 {dimension_numbers = #tpu.dot_dimension_numbers<[1], [0], [0], [1], [0, 0, 1, 1], [], []>} : vector<256x32xbf16>, vector<32x128xbf16>, vector<256x128xf32> -> vector<256x128xf32>
    %34 = arith.addf %25, %33 : vector<256x128xf32>
    %c1_i32 = arith.constant 1 : i32
    %35 = arith.addi %0, %c1_i32 : i32
    %c0_27 = arith.constant 0 : index
    %36 = arith.index_cast %35 : i32 to index
    %c0_28 = arith.constant 0 : index
    %c0_29 = arith.constant 0 : index
    %37 = vector.load %arg3[%c0_27, %36, %c0_28, %c0_29] : memref<1x18x18x32xbf16, #tpu.memory_space<vmem>>, vector<1x16x16x32xbf16>
    %38 = vector.shape_cast %37 : vector<1x16x16x32xbf16> to vector<16x16x32xbf16>
    %39 = vector.shape_cast %38 : vector<16x16x32xbf16> to vector<256x32xbf16>
    %c3 = arith.constant 3 : index
    %c0_30 = arith.constant 0 : index
    %c0_31 = arith.constant 0 : index
    %40 = vector.load %arg6[%c3, %c0_30, %c0_31] : memref<9x32x128xbf16, #tpu.memory_space<vmem>>, vector<1x32x128xbf16>
    %41 = vector.shape_cast %40 : vector<1x32x128xbf16> to vector<32x128xbf16>
    %cst_32 = arith.constant dense<0.000000e+00> : vector<256x128xf32>
    %42 = tpu.matmul %39, %41, %cst_32 {dimension_numbers = #tpu.dot_dimension_numbers<[1], [0], [0], [1], [0, 0, 1, 1], [], []>} : vector<256x32xbf16>, vector<32x128xbf16>, vector<256x128xf32> -> vector<256x128xf32>
    %43 = arith.addf %34, %42 : vector<256x128xf32>
    %c1_i32_33 = arith.constant 1 : i32
    %44 = arith.addi %0, %c1_i32_33 : i32
    %c0_34 = arith.constant 0 : index
    %45 = arith.index_cast %44 : i32 to index
    %c1_35 = arith.constant 1 : index
    %c0_36 = arith.constant 0 : index
    %46 = vector.load %arg3[%c0_34, %45, %c1_35, %c0_36] : memref<1x18x18x32xbf16, #tpu.memory_space<vmem>>, vector<1x16x16x32xbf16>
    %47 = vector.shape_cast %46 : vector<1x16x16x32xbf16> to vector<16x16x32xbf16>
    %48 = vector.shape_cast %47 : vector<16x16x32xbf16> to vector<256x32xbf16>
    %c4 = arith.constant 4 : index
    %c0_37 = arith.constant 0 : index
    %c0_38 = arith.constant 0 : index
    %49 = vector.load %arg6[%c4, %c0_37, %c0_38] : memref<9x32x128xbf16, #tpu.memory_space<vmem>>, vector<1x32x128xbf16>
    %50 = vector.shape_cast %49 : vector<1x32x128xbf16> to vector<32x128xbf16>
    %cst_39 = arith.constant dense<0.000000e+00> : vector<256x128xf32>
    %51 = tpu.matmul %48, %50, %cst_39 {dimension_numbers = #tpu.dot_dimension_numbers<[1], [0], [0], [1], [0, 0, 1, 1], [], []>} : vector<256x32xbf16>, vector<32x128xbf16>, vector<256x128xf32> -> vector<256x128xf32>
    %52 = arith.addf %43, %51 : vector<256x128xf32>
    %c1_i32_40 = arith.constant 1 : i32
    %53 = arith.addi %0, %c1_i32_40 : i32
    %c0_41 = arith.constant 0 : index
    %54 = arith.index_cast %53 : i32 to index
    %c2_42 = arith.constant 2 : index
    %c0_43 = arith.constant 0 : index
    %55 = vector.load %arg3[%c0_41, %54, %c2_42, %c0_43] : memref<1x18x18x32xbf16, #tpu.memory_space<vmem>>, vector<1x16x16x32xbf16>
    %56 = vector.shape_cast %55 : vector<1x16x16x32xbf16> to vector<16x16x32xbf16>
    %57 = vector.shape_cast %56 : vector<16x16x32xbf16> to vector<256x32xbf16>
    %c5 = arith.constant 5 : index
    %c0_44 = arith.constant 0 : index
    %c0_45 = arith.constant 0 : index
    %58 = vector.load %arg6[%c5, %c0_44, %c0_45] : memref<9x32x128xbf16, #tpu.memory_space<vmem>>, vector<1x32x128xbf16>
    %59 = vector.shape_cast %58 : vector<1x32x128xbf16> to vector<32x128xbf16>
    %cst_46 = arith.constant dense<0.000000e+00> : vector<256x128xf32>
    %60 = tpu.matmul %57, %59, %cst_46 {dimension_numbers = #tpu.dot_dimension_numbers<[1], [0], [0], [1], [0, 0, 1, 1], [], []>} : vector<256x32xbf16>, vector<32x128xbf16>, vector<256x128xf32> -> vector<256x128xf32>
    %61 = arith.addf %52, %60 : vector<256x128xf32>
    %c2_i32 = arith.constant 2 : i32
    %62 = arith.addi %0, %c2_i32 : i32
    %c0_47 = arith.constant 0 : index
    %63 = arith.index_cast %62 : i32 to index
    %c0_48 = arith.constant 0 : index
    %c0_49 = arith.constant 0 : index
    %64 = vector.load %arg3[%c0_47, %63, %c0_48, %c0_49] : memref<1x18x18x32xbf16, #tpu.memory_space<vmem>>, vector<1x16x16x32xbf16>
    %65 = vector.shape_cast %64 : vector<1x16x16x32xbf16> to vector<16x16x32xbf16>
    %66 = vector.shape_cast %65 : vector<16x16x32xbf16> to vector<256x32xbf16>
    %c6 = arith.constant 6 : index
    %c0_50 = arith.constant 0 : index
    %c0_51 = arith.constant 0 : index
    %67 = vector.load %arg6[%c6, %c0_50, %c0_51] : memref<9x32x128xbf16, #tpu.memory_space<vmem>>, vector<1x32x128xbf16>
    %68 = vector.shape_cast %67 : vector<1x32x128xbf16> to vector<32x128xbf16>
    %cst_52 = arith.constant dense<0.000000e+00> : vector<256x128xf32>
    %69 = tpu.matmul %66, %68, %cst_52 {dimension_numbers = #tpu.dot_dimension_numbers<[1], [0], [0], [1], [0, 0, 1, 1], [], []>} : vector<256x32xbf16>, vector<32x128xbf16>, vector<256x128xf32> -> vector<256x128xf32>
    %70 = arith.addf %61, %69 : vector<256x128xf32>
    %c2_i32_53 = arith.constant 2 : i32
    %71 = arith.addi %0, %c2_i32_53 : i32
    %c0_54 = arith.constant 0 : index
    %72 = arith.index_cast %71 : i32 to index
    %c1_55 = arith.constant 1 : index
    %c0_56 = arith.constant 0 : index
    %73 = vector.load %arg3[%c0_54, %72, %c1_55, %c0_56] : memref<1x18x18x32xbf16, #tpu.memory_space<vmem>>, vector<1x16x16x32xbf16>
    %74 = vector.shape_cast %73 : vector<1x16x16x32xbf16> to vector<16x16x32xbf16>
    %75 = vector.shape_cast %74 : vector<16x16x32xbf16> to vector<256x32xbf16>
    %c7 = arith.constant 7 : index
    %c0_57 = arith.constant 0 : index
    %c0_58 = arith.constant 0 : index
    %76 = vector.load %arg6[%c7, %c0_57, %c0_58] : memref<9x32x128xbf16, #tpu.memory_space<vmem>>, vector<1x32x128xbf16>
    %77 = vector.shape_cast %76 : vector<1x32x128xbf16> to vector<32x128xbf16>
    %cst_59 = arith.constant dense<0.000000e+00> : vector<256x128xf32>
    %78 = tpu.matmul %75, %77, %cst_59 {dimension_numbers = #tpu.dot_dimension_numbers<[1], [0], [0], [1], [0, 0, 1, 1], [], []>} : vector<256x32xbf16>, vector<32x128xbf16>, vector<256x128xf32> -> vector<256x128xf32>
    %79 = arith.addf %70, %78 : vector<256x128xf32>
    %c2_i32_60 = arith.constant 2 : i32
    %80 = arith.addi %0, %c2_i32_60 : i32
    %c0_61 = arith.constant 0 : index
    %81 = arith.index_cast %80 : i32 to index
    %c2_62 = arith.constant 2 : index
    %c0_63 = arith.constant 0 : index
    %82 = vector.load %arg3[%c0_61, %81, %c2_62, %c0_63] : memref<1x18x18x32xbf16, #tpu.memory_space<vmem>>, vector<1x16x16x32xbf16>
    %83 = vector.shape_cast %82 : vector<1x16x16x32xbf16> to vector<16x16x32xbf16>
    %84 = vector.shape_cast %83 : vector<16x16x32xbf16> to vector<256x32xbf16>
    %c8 = arith.constant 8 : index
    %c0_64 = arith.constant 0 : index
    %c0_65 = arith.constant 0 : index
    %85 = vector.load %arg6[%c8, %c0_64, %c0_65] : memref<9x32x128xbf16, #tpu.memory_space<vmem>>, vector<1x32x128xbf16>
    %86 = vector.shape_cast %85 : vector<1x32x128xbf16> to vector<32x128xbf16>
    %cst_66 = arith.constant dense<0.000000e+00> : vector<256x128xf32>
    %87 = tpu.matmul %84, %86, %cst_66 {dimension_numbers = #tpu.dot_dimension_numbers<[1], [0], [0], [1], [0, 0, 1, 1], [], []>} : vector<256x32xbf16>, vector<32x128xbf16>, vector<256x128xf32> -> vector<256x128xf32>
    %88 = arith.addf %79, %87 : vector<256x128xf32>
    %89 = vector.extract_strided_slice %88 {offsets = [0, 0], sizes = [256, 32], strides = [1, 1]} : vector<256x128xf32> to vector<256x32xf32>
    %90 = arith.negf %89 : vector<256x32xf32>
    %91 = math.exp %90 : vector<256x32xf32>
    %cst_67 = arith.constant 1.000000e+00 : f32
    %92 = vector.broadcast %cst_67 : f32 to vector<256x32xf32>
    %93 = arith.addf %92, %91 : vector<256x32xf32>
    %94 = arith.divf %92, %93 : vector<256x32xf32>
    %95 = vector.extract_strided_slice %88 {offsets = [0, 32], sizes = [256, 32], strides = [1, 1]} : vector<256x128xf32> to vector<256x32xf32>
    %96 = arith.negf %95 : vector<256x32xf32>
    %97 = math.exp %96 : vector<256x32xf32>
    %cst_68 = arith.constant 1.000000e+00 : f32
    %98 = vector.broadcast %cst_68 : f32 to vector<256x32xf32>
    %99 = arith.addf %98, %97 : vector<256x32xf32>
    %100 = arith.divf %98, %99 : vector<256x32xf32>
    %101 = vector.extract_strided_slice %88 {offsets = [0, 64], sizes = [256, 32], strides = [1, 1]} : vector<256x128xf32> to vector<256x32xf32>
    %102 = math.tanh %101 : vector<256x32xf32>
    %103 = vector.extract_strided_slice %88 {offsets = [0, 96], sizes = [256, 32], strides = [1, 1]} : vector<256x128xf32> to vector<256x32xf32>
    %104 = arith.negf %103 : vector<256x32xf32>
    %105 = math.exp %104 : vector<256x32xf32>
    %cst_69 = arith.constant 1.000000e+00 : f32
    %106 = vector.broadcast %cst_69 : f32 to vector<256x32xf32>
    %107 = arith.addf %106, %105 : vector<256x32xf32>
    %108 = arith.divf %106, %107 : vector<256x32xf32>
    %c0_70 = arith.constant 0 : index
    %c0_71 = arith.constant 0 : index
    %c0_72 = arith.constant 0 : index
    %109 = vector.load %arg4[%c0_70, %c0_71, %c0_72] : memref<1x256x32xf32, #tpu.memory_space<vmem>>, vector<1x256x32xf32>
    %110 = vector.shape_cast %109 : vector<1x256x32xf32> to vector<256x32xf32>
    %111 = arith.mulf %100, %110 : vector<256x32xf32>
    %112 = arith.mulf %94, %102 : vector<256x32xf32>
    %113 = arith.addf %111, %112 : vector<256x32xf32>
    %114 = math.tanh %113 : vector<256x32xf32>
    %115 = arith.mulf %108, %114 : vector<256x32xf32>
    %c0_73 = arith.constant 0 : index
    %c0_74 = arith.constant 0 : index
    %c0_75 = arith.constant 0 : index
    %116 = vector.load %arg8[%c0_73, %c0_74, %c0_75] : memref<1x256x64xf32, #tpu.memory_space<vmem>>, vector<1x256x32xf32>
    %117 = vector.shape_cast %116 : vector<1x256x32xf32> to vector<256x32xf32>
    %118 = vector.shape_cast %115 : vector<256x32xf32> to vector<1x256x32xf32>
    tpu.vector_store %arg8[%c0_73, %c0_74, %c0_75], %118 {strides = array<i32>} : memref<1x256x64xf32, #tpu.memory_space<vmem>>, vector<1x256x32xf32>,
    %c0_76 = arith.constant 0 : index
    %c0_77 = arith.constant 0 : index
    %c32 = arith.constant 32 : index
    %119 = vector.load %arg8[%c0_76, %c0_77, %c32] : memref<1x256x64xf32, #tpu.memory_space<vmem>>, vector<1x256x32xf32>
    %120 = vector.shape_cast %119 : vector<1x256x32xf32> to vector<256x32xf32>
    %121 = vector.shape_cast %113 : vector<256x32xf32> to vector<1x256x32xf32>
    tpu.vector_store %arg8[%c0_76, %c0_77, %c32], %121 {strides = array<i32>} : memref<1x256x64xf32, #tpu.memory_space<vmem>>, vector<1x256x32xf32>,
    return
  }
  func.func @transform_0(%arg0: i32, %arg1: i32) -> (i32, i32, i32) {
    %c0_i32 = arith.constant 0 : i32
    %c0_i32_0 = arith.constant 0 : i32
    return %arg0, %arg1, %c0_i32 : i32, i32, i32
  }
  func.func @transform_1(%arg0: i32, %arg1: i32) -> (i32, i32, i32, i32) {
    %c0_i32 = arith.constant 0 : i32
    %c0_i32_0 = arith.constant 0 : i32
    %c0_i32_1 = arith.constant 0 : i32
    %c0_i32_2 = arith.constant 0 : i32
    return %arg0, %c0_i32, %c0_i32_0, %c0_i32_1 : i32, i32, i32, i32
  }
  func.func @transform_2(%arg0: i32, %arg1: i32) -> (i32, i32, i32) {
    %c0_i32 = arith.constant 0 : i32
    %c0_i32_0 = arith.constant 0 : i32
    return %arg0, %arg1, %c0_i32 : i32, i32, i32
  }
  func.func @transform_3(%arg0: i32, %arg1: i32) -> (i32, i32) {
    %c0_i32 = arith.constant 0 : i32
    %c0_i32_0 = arith.constant 0 : i32
    %c0_i32_1 = arith.constant 0 : i32
    return %c0_i32, %c0_i32_0 : i32, i32
  }
  func.func @transform_4(%arg0: i32, %arg1: i32) -> (i32, i32, i32) {
    %c0_i32 = arith.constant 0 : i32
    %c0_i32_0 = arith.constant 0 : i32
    %c0_i32_1 = arith.constant 0 : i32
    %c0_i32_2 = arith.constant 0 : i32
    return %c0_i32, %c0_i32_0, %c0_i32_1 : i32, i32, i32
  }
  func.func @transform_5(%arg0: i32, %arg1: i32) -> (i32, i32) {
    %c0_i32 = arith.constant 0 : i32
    %c0_i32_0 = arith.constant 0 : i32
    %c0_i32_1 = arith.constant 0 : i32
    return %c0_i32, %c0_i32_0 : i32, i32
  }
  func.func @transform_6(%arg0: i32, %arg1: i32) -> (i32, i32, i32) {
    %c0_i32 = arith.constant 0 : i32
    %c0_i32_0 = arith.constant 0 : i32
    return %arg0, %arg1, %c0_i32 : i32, i32, i32
  }
}

</mosaic_0001>

<llo_original>
// kernel: tpu_custom_call.1
$region0: #{tpu_custom_call.1}
  #allocation0 [shape = 'u32[]', space=smem, size = 0x4, offset = 0x4, fixed_abs, tag = 'smem constant byte address 0x4 - core index']
  #allocation1 [shape = 'u32[144,128]{1,0:T(1,128)}', space=vmem, size = 0x12000, scoped, tag = 'internal scratch']
  %s0 = inlined_call_operand.vmem [shape: bf16[2,256,36], index: 0, kind: input, shape index: {}]
  %s1 = inlined_call_operand.vmem [shape: bf16[2,18,18,32], index: 1, kind: input, shape index: {}]
  %s2 = inlined_call_operand.vmem [shape: f32[2,256,32], index: 2, kind: input, shape index: {}]
  %s3 = inlined_call_operand.vmem [shape: bf16[36,128], index: 3, kind: input, shape index: {}]
  %s4 = inlined_call_operand.vmem [shape: bf16[9,32,128], index: 4, kind: input, shape index: {}]
  %s5 = inlined_call_operand.vmem [shape: f32[1,128], index: 5, kind: input, shape index: {}]
  %s6 = inlined_call_operand.vmem [shape: f32[2,256,64], index: 6, kind: output, shape index: {}]
  %s7 = sld [smem:[#allocation0]]
  $region57: #{tpu_custom_call.1} parent=0
    _
  %s9 = ssub.s32 1, %s7
  %s10 = scalar_select 0, %s9, %s7
  loop: start=0, step=1, limit=4
  $region2: #{tpu_custom_call.1} parent=0 // loop_pre_header
    _
  $region3: #{tpu_custom_call.1} parent=0 // loop_header
    %s12 = sphi 0, %s16
    %p13 = scmp.ge.s32.totalorder %s12, 4
    %s19 = sphi 0, %s31
    %s20 = sphi 0, %s27
    %s21 = sphi 0, %s19
    %s22 = sphi 0, %s20
    %s23 = sphi 0, %s21
    %s24 = sphi 0, %s22
    %s36 = sphi 0, %s38
    %s39 = sphi 0, %s36
    %s40 = sphi 0, %s39
    %s56 = sphi 0, %s40
    %s62 = sphi 0, %s64
    %s65 = sphi 0, %s62
    %s66 = sphi 0, %s65
    %s82 = sphi 0, %s66
    %s90 = sphi 0, %s92
    %s93 = sphi 0, %s90
    %s94 = sphi 0, %s93
    %s110 = sphi 0, %s94
    %s114 = sphi 0, %s114
    %s116 = sphi 0, %s114
    %s117 = sphi 0, %s116
    %s131 = sphi 0, %s117
    %s135 = sphi 0, %s135
    %s137 = sphi 0, %s135
    %s138 = sphi 0, %s137
    %s152 = sphi 0, %s138
    %s156 = sphi 0, %s156
    %s158 = sphi 0, %s156
    %s159 = sphi 0, %s158
    %s173 = sphi 0, %s159
    %s181 = sphi 0, %s183
    %s184 = sphi 0, %s181
    %s185 = sphi 0, %s184
    %s201 = sphi 0, %s185
  $region4: #{tpu_custom_call.1} parent=0 // loop_header_branch
    %15 = sbr.rel (%p13) target = $region8
  $region5: #{tpu_custom_call.1} parent=0 // loop_body
    %s17 = ssub.s32 %s12, 1
    %s18 = ssub.s32 %s12, 2
    %s25 = sadd.s32 1, %s20
    %p26 = scmp.ge.s32.totalorder %s25, 1
    %s27 = scalar_select %p26, 0, %s25
    %s28 = sadd.s32 1, %s19
    %s29 = scalar_select %p26, %s28, %s19
    %p30 = scmp.ge.s32.totalorder %s29, 2
    %s31 = scalar_select %p30, 0, %s29
    %s32 = ssub.s32 %s19, %s31
    %s33 = ssub.s32 %s20, %s27
    %s34 = sor.u32 %s32, %s33
    %p35 = scmp.eq.s32.totalorder %s34, 0
    %s37 = sadd.s32 %s36, 1
    %s38 = scalar_select %p35, %s36, %s37
    %p41 = pneg %p35
    %p42 = scmp.eq.s32.totalorder %s12, 1
    %p43 = por %p41, %p42
    %p44 = scmp.ne.s32.totalorder %s36, %s39
    %p45 = scmp.eq.s32.totalorder %s12, 0
    %p46 = por %p44, %p45
    %p47 = scmp.ne.s32.totalorder %s36, %s39
    %p48 = scmp.eq.s32.totalorder %s17, 1
    %p49 = por %p47, %p48
    %p50 = scmp.ne.s32.totalorder %s39, %s40
    %p51 = scmp.eq.s32.totalorder %s17, 0
    %p52 = por %p50, %p51
    %p53 = scmp.ne.s32.totalorder %s39, %s40
    %p54 = scmp.eq.s32.totalorder %s18, 1
    %p55 = por %p53, %p54
    %p57 = scmp.ne.s32.totalorder %s40, %s56
    %p58 = scmp.eq.s32.totalorder %s18, 0
    %p59 = por %p57, %p58
    %s60 = ssub.s32 %s19, %s31
    %p61 = scmp.eq.s32.totalorder %s60, 0
    %s63 = sadd.s32 %s62, 1
    %s64 = scalar_select %p61, %s62, %s63
    %p67 = pneg %p61
    %p68 = scmp.eq.s32.totalorder %s12, 1
    %p69 = por %p67, %p68
    %p70 = scmp.ne.s32.totalorder %s62, %s65
    %p71 = scmp.eq.s32.totalorder %s12, 0
    %p72 = por %p70, %p71
    %p73 = scmp.ne.s32.totalorder %s62, %s65
    %p74 = scmp.eq.s32.totalorder %s17, 1
    %p75 = por %p73, %p74
    %p76 = scmp.ne.s32.totalorder %s65, %s66
    %p77 = scmp.eq.s32.totalorder %s17, 0
    %p78 = por %p76, %p77
    %p79 = scmp.ne.s32.totalorder %s65, %s66
    %p80 = scmp.eq.s32.totalorder %s18, 1
    %p81 = por %p79, %p80
    %p83 = scmp.ne.s32.totalorder %s66, %s82
    %p84 = scmp.eq.s32.totalorder %s18, 0
    %p85 = por %p83, %p84
    %s86 = ssub.s32 %s19, %s31
    %s87 = ssub.s32 %s20, %s27
    %s88 = sor.u32 %s86, %s87
    %p89 = scmp.eq.s32.totalorder %s88, 0
    %s91 = sadd.s32 %s90, 1
    %s92 = scalar_select %p89, %s90, %s91
    %p95 = pneg %p89
    %p96 = scmp.eq.s32.totalorder %s12, 1
    %p97 = por %p95, %p96
    %p98 = scmp.ne.s32.totalorder %s90, %s93
    %p99 = scmp.eq.s32.totalorder %s12, 0
    %p100 = por %p98, %p99
    %p101 = scmp.ne.s32.totalorder %s90, %s93
    %p102 = scmp.eq.s32.totalorder %s17, 1
    %p103 = por %p101, %p102
    %p104 = scmp.ne.s32.totalorder %s93, %s94
    %p105 = scmp.eq.s32.totalorder %s17, 0
    %p106 = por %p104, %p105
    %p107 = scmp.ne.s32.totalorder %s93, %s94
    %p108 = scmp.eq.s32.totalorder %s18, 1
    %p109 = por %p107, %p108
    %p111 = scmp.ne.s32.totalorder %s94, %s110
    %p112 = scmp.eq.s32.totalorder %s18, 0
    %p113 = por %p111, %p112
    %s115 = sadd.s32 %s114, 1
    %p118 = scmp.eq.s32.totalorder %s12, 1
    %p119 = scmp.ne.s32.totalorder %s114, %s116
    %p120 = scmp.eq.s32.totalorder %s12, 0
    %p121 = por %p119, %p120
    %p122 = scmp.ne.s32.totalorder %s114, %s116
    %p123 = scmp.eq.s32.totalorder %s17, 1
    %p124 = por %p122, %p123
    %p125 = scmp.ne.s32.totalorder %s116, %s117
    %p126 = scmp.eq.s32.totalorder %s17, 0
    %p127 = por %p125, %p126
    %p128 = scmp.ne.s32.totalorder %s116, %s117
    %p129 = scmp.eq.s32.totalorder %s18, 1
    %p130 = por %p128, %p129
    %p132 = scmp.ne.s32.totalorder %s117, %s131
    %p133 = scmp.eq.s32.totalorder %s18, 0
    %p134 = por %p132, %p133
    %s136 = sadd.s32 %s135, 1
    %p139 = scmp.eq.s32.totalorder %s12, 1
    %p140 = scmp.ne.s32.totalorder %s135, %s137
    %p141 = scmp.eq.s32.totalorder %s12, 0
    %p142 = por %p140, %p141
    %p143 = scmp.ne.s32.totalorder %s135, %s137
    %p144 = scmp.eq.s32.totalorder %s17, 1
    %p145 = por %p143, %p144
    %p146 = scmp.ne.s32.totalorder %s137, %s138
    %p147 = scmp.eq.s32.totalorder %s17, 0
    %p148 = por %p146, %p147
    %p149 = scmp.ne.s32.totalorder %s137, %s138
    %p150 = scmp.eq.s32.totalorder %s18, 1
    %p151 = por %p149, %p150
    %p153 = scmp.ne.s32.totalorder %s138, %s152
    %p154 = scmp.eq.s32.totalorder %s18, 0
    %p155 = por %p153, %p154
    %s157 = sadd.s32 %s156, 1
    %p160 = scmp.eq.s32.totalorder %s12, 1
    %p161 = scmp.ne.s32.totalorder %s156, %s158
    %p162 = scmp.eq.s32.totalorder %s12, 0
    %p163 = por %p161, %p162
    %p164 = scmp.ne.s32.totalorder %s156, %s158
    %p165 = scmp.eq.s32.totalorder %s17, 1
    %p166 = por %p164, %p165
    %p167 = scmp.ne.s32.totalorder %s158, %s159
    %p168 = scmp.eq.s32.totalorder %s17, 0
    %p169 = por %p167, %p168
    %p170 = scmp.ne.s32.totalorder %s158, %s159
    %p171 = scmp.eq.s32.totalorder %s18, 1
    %p172 = por %p170, %p171
    %p174 = scmp.ne.s32.totalorder %s159, %s173
    %p175 = scmp.eq.s32.totalorder %s18, 0
    %p176 = por %p174, %p175
    %s177 = ssub.s32 %s19, %s31
    %s178 = ssub.s32 %s20, %s27
    %s179 = sor.u32 %s177, %s178
    %p180 = scmp.eq.s32.totalorder %s179, 0
    %s182 = sadd.s32 %s181, 1
    %s183 = scalar_select %p180, %s181, %s182
    %p186 = pneg %p180
    %p187 = scmp.eq.s32.totalorder %s12, 1
    %p188 = por %p186, %p187
    %p189 = scmp.ne.s32.totalorder %s181, %s184
    %p190 = scmp.eq.s32.totalorder %s12, 0
    %p191 = por %p189, %p190
    %p192 = scmp.ne.s32.totalorder %s181, %s184
    %p193 = scmp.eq.s32.totalorder %s17, 1
    %p194 = por %p192, %p193
    %p195 = scmp.ne.s32.totalorder %s184, %s185
    %p196 = scmp.eq.s32.totalorder %s17, 0
    %p197 = por %p195, %p196
    %p198 = scmp.ne.s32.totalorder %s184, %s185
    %p199 = scmp.eq.s32.totalorder %s18, 1
    %p200 = por %p198, %p199
    %p202 = scmp.ne.s32.totalorder %s185, %s201
    %p203 = scmp.eq.s32.totalorder %s18, 0
    %p204 = por %p202, %p203
    %p205 = scmp.le.s32.totalorder 1, %s12
    %p206 = scmp.lt.s32.totalorder %s12, 3
    %p207 = pnand %p205, %p206
    %p208 = pneg %p207
    // Predicated region
    $region9: #{tpu_custom_call.1} parent=5 // pred_check
      _
    $region10: #{tpu_custom_call.1} parent=5 // pred_check_branch
      %210 = sbr.rel (%p207) target = $region12
    $region11: #{tpu_custom_call.1} parent=5 // pred_region
      %s211 = ssub.s32 %s12, 1
      // Predicated region
      $region13: #{tpu_custom_call.1} parent=11 // pred_check
        %p212 = pneg %p127
      $region14: #{tpu_custom_call.1} parent=11 // pred_check_branch
        %214 = sbr.rel (%p212) target = $region16
      $region15: #{tpu_custom_call.1} parent=11 // pred_region
        _
      $region16: #{tpu_custom_call.1} parent=11 // pred_fallthru
        _
      // Predicated region
      $region17: #{tpu_custom_call.1} parent=11 // pred_check
        %p215 = pneg %p148
      $region18: #{tpu_custom_call.1} parent=11 // pred_check_branch
        %217 = sbr.rel (%p215) target = $region20
      $region19: #{tpu_custom_call.1} parent=11 // pred_region
        _
      $region20: #{tpu_custom_call.1} parent=11 // pred_fallthru
        _
      // Predicated region
      $region21: #{tpu_custom_call.1} parent=11 // pred_check
        %p218 = pneg %p169
      $region22: #{tpu_custom_call.1} parent=11 // pred_check_branch
        %220 = sbr.rel (%p218) target = $region24
      $region23: #{tpu_custom_call.1} parent=11 // pred_region
        _
      $region24: #{tpu_custom_call.1} parent=11 // pred_fallthru
        _
    $region12: #{tpu_custom_call.1} parent=5 // pred_fallthru
      _
    %p221 = scmp.lt.s32.totalorder %s12, 2
    // Predicated region
    $region25: #{tpu_custom_call.1} parent=5 // pred_check
      %p222 = pneg %p221
    $region26: #{tpu_custom_call.1} parent=5 // pred_check_branch
      %224 = sbr.rel (%p222) target = $region28
    $region27: #{tpu_custom_call.1} parent=5 // pred_region
      // Predicated region
      $region29: #{tpu_custom_call.1} parent=27 // pred_check
        %p225 = pneg %p46
      $region30: #{tpu_custom_call.1} parent=27 // pred_check_branch
        %227 = sbr.rel (%p225) target = $region32
      $region31: #{tpu_custom_call.1} parent=27 // pred_region
        %s228 = smul.u32 32, %s20
        %p229 = scmp.lt.s32.totalorder %s19, 1
        %s230 = scalar_select %p229, %s19, 1
        %p231 = scmp.lt.s32.totalorder %s228, 31
        %s232 = scalar_select %p231, %s228, 31
        %s233 = smul.addr %s230, 32
        %s234 = sadd.s32 %s232, %s233
        %s235 = smul.addr %s234, 4
        %s236 = scalar_lea.vmem %s0, %s235
        %s237 = smul.u32 32, %s20
      $region32: #{tpu_custom_call.1} parent=27 // pred_fallthru
        _
      // Predicated region
      $region33: #{tpu_custom_call.1} parent=27 // pred_check
        %p238 = pneg %p72
      $region34: #{tpu_custom_call.1} parent=27 // pred_check_branch
        %240 = sbr.rel (%p238) target = $region36
      $region35: #{tpu_custom_call.1} parent=27 // pred_region
        %p241 = scmp.lt.s32.totalorder %s19, 1
        %s242 = scalar_select %p241, %s19, 1
        %s243 = smul.addr %s242, 54
        %s244 = smul.addr %s243, 4
        %s245 = scalar_lea.vmem %s1, %s244
      $region36: #{tpu_custom_call.1} parent=27 // pred_fallthru
        _
      // Predicated region
      $region37: #{tpu_custom_call.1} parent=27 // pred_check
        %p246 = pneg %p100
      $region38: #{tpu_custom_call.1} parent=27 // pred_check_branch
        %248 = sbr.rel (%p246) target = $region40
      $region39: #{tpu_custom_call.1} parent=27 // pred_region
        %s249 = smul.u32 32, %s20
        %p250 = scmp.lt.s32.totalorder %s19, 1
        %s251 = scalar_select %p250, %s19, 1
        %p252 = scmp.lt.s32.totalorder %s249, 31
        %s253 = scalar_select %p252, %s249, 31
        %s254 = smul.addr %s251, 32
        %s255 = sadd.s32 %s253, %s254
        %s256 = smul.addr %s255, 8
        %s257 = scalar_lea.vmem %s2, %s256
        %s258 = smul.u32 32, %s20
      $region40: #{tpu_custom_call.1} parent=27 // pred_fallthru
        _
    $region28: #{tpu_custom_call.1} parent=5 // pred_fallthru
      _
    %p259 = scmp.le.s32.totalorder 1, %s12
    %p260 = scmp.lt.s32.totalorder %s12, 3
    %p261 = pnand %p259, %p260
    %p262 = pneg %p261
    // Predicated region
    $region41: #{tpu_custom_call.1} parent=5 // pred_check
      _
    $region42: #{tpu_custom_call.1} parent=5 // pred_check_branch
      %264 = sbr.rel (%p261) target = $region44
    $region43: #{tpu_custom_call.1} parent=5 // pred_region
      %s265 = ssub.s32 %s12, 1
      %s266 = smul.u32 32, %s22
      %p267 = scmp.lt.s32.totalorder %s21, 1
      %s268 = scalar_select %p267, %s21, 1
      %p269 = scmp.lt.s32.totalorder %s266, 31
      %s270 = scalar_select %p269, %s266, 31
      %s271 = smul.addr %s268, 32
      %s272 = sadd.s32 %s270, %s271
      %s273 = smul.addr %s272, 4
      %s274 = scalar_lea.vmem %s0, %s273
      %p275 = pneg %p52
      %p276 = pneg %p49
      %p277 = scmp.lt.s32.totalorder %s21, 1
      %s278 = scalar_select %p277, %s21, 1
      %s279 = smul.addr %s278, 54
      %s280 = smul.addr %s279, 4
      %s281 = scalar_lea.vmem %s1, %s280
      %p282 = pneg %p78
      %p283 = pneg %p75
      %s284 = smul.u32 32, %s22
      %p285 = scmp.lt.s32.totalorder %s21, 1
      %s286 = scalar_select %p285, %s21, 1
      %p287 = scmp.lt.s32.totalorder %s284, 31
      %s288 = scalar_select %p287, %s284, 31
      %s289 = smul.addr %s286, 32
      %s290 = sadd.s32 %s288, %s289
      %s291 = smul.addr %s290, 8
      %s292 = scalar_lea.vmem %s2, %s291
      %p293 = pneg %p106
      %p294 = pneg %p103
      %p295 = pneg %p127
      %p296 = pneg %p124
      %p297 = pneg %p148
      %p298 = pneg %p145
      %p299 = pneg %p169
      %p300 = pneg %p166
      %p301 = pneg %p197
      %p302 = pneg %p194
      %s303 = smul.u32 32, %s22
      %p304 = scmp.lt.s32.totalorder %s21, 1
      %s305 = scalar_select %p304, %s21, 1
      %p306 = scmp.lt.s32.totalorder %s303, 31
      %s307 = scalar_select %p306, %s303, 31
      %s308 = smul.addr %s305, 32
      %s309 = sadd.s32 %s307, %s308
      %s310 = smul.addr %s309, 8
      %s311 = scalar_lea.vmem %s6, %s310
      %s312 = smul.u32 32, %s22
      %p313 = scmp.lt.s32.totalorder %s21, 1
      %s314 = scalar_select %p313, %s21, 1
      %p315 = scmp.lt.s32.totalorder %s312, 31
      %s316 = scalar_select %p315, %s312, 31
      %s317 = smul.addr %s314, 32
      %s318 = sadd.s32 %s316, %s317
      %s319 = smul.addr %s318, 4
      %s320 = scalar_lea.vmem %s0, %s319
      %s321 = smul.u32 32, %s22
      %p322 = scmp.lt.s32.totalorder %s21, 1
      %s323 = scalar_select %p322, %s21, 1
      %s324 = smul.addr %s323, 54
      %s325 = smul.addr %s324, 4
      %s326 = scalar_lea.vmem %s1, %s325
      %s327 = smul.u32 32, %s22
      %p328 = scmp.lt.s32.totalorder %s21, 1
      %s329 = scalar_select %p328, %s21, 1
      %p330 = scmp.lt.s32.totalorder %s327, 31
      %s331 = scalar_select %p330, %s327, 31
      %s332 = smul.addr %s329, 32
      %s333 = sadd.s32 %s331, %s332
      %s334 = smul.addr %s333, 8
      %s335 = scalar_lea.vmem %s2, %s334
      %s336 = smul.u32 32, %s22
      %s337 = smul.u32 32, %s22
      %p338 = scmp.lt.s32.totalorder %s21, 1
      %s339 = scalar_select %p338, %s21, 1
      %p340 = scmp.lt.s32.totalorder %s337, 31
      %s341 = scalar_select %p340, %s337, 31
      %s342 = smul.addr %s339, 32
      %s343 = sadd.s32 %s341, %s342
      %s344 = smul.addr %s343, 8
      %s345 = scalar_lea.vmem %s6, %s344
      %s346 = smul.u32 32, %s22
      %s348 = smul.u32 %s22, 16
      %v349 = vld [vmem:[%s320] sm:$0xf]
      %v350 = vld [vmem:[%s320 + $0x4] sm:$0xf]
      %v351 = vld [vmem:[%s320 + $0x8] sm:$0xf]
      %v352 = vld [vmem:[%s320 + $0xc] sm:$0xf]
      %v353 = vld [vmem:[%s320 + $0x10] sm:$0xf]
      %v354 = vld [vmem:[%s320 + $0x14] sm:$0xf]
      %v355 = vld [vmem:[%s320 + $0x18] sm:$0xf]
      %v356 = vld [vmem:[%s320 + $0x1c] sm:$0xf]
      %v357 = vld [vmem:[%s320 + $0x20] sm:$0xf]
      %v358 = vld [vmem:[%s320 + $0x24] sm:$0xf]
      %v359 = vld [vmem:[%s320 + $0x28] sm:$0xf]
      %v360 = vld [vmem:[%s320 + $0x2c] sm:$0xf]
      %v361 = vld [vmem:[%s320 + $0x30] sm:$0xf]
      %v362 = vld [vmem:[%s320 + $0x34] sm:$0xf]
      %v363 = vld [vmem:[%s320 + $0x38] sm:$0xf]
      %v364 = vld [vmem:[%s320 + $0x3c] sm:$0xf]
      %v365 = vld [vmem:[%s320 + $0x40] sm:$0xf]
      %v366 = vld [vmem:[%s320 + $0x44] sm:$0xf]
      %v367 = vld [vmem:[%s320 + $0x48] sm:$0xf]
      %v368 = vld [vmem:[%s320 + $0x4c] sm:$0xf]
      %v369 = vld [vmem:[%s320 + $0x50] sm:$0xf]
      %v370 = vld [vmem:[%s320 + $0x54] sm:$0xf]
      %v371 = vld [vmem:[%s320 + $0x58] sm:$0xf]
      %v372 = vld [vmem:[%s320 + $0x5c] sm:$0xf]
      %v373 = vld [vmem:[%s320 + $0x60] sm:$0xf]
      %v374 = vld [vmem:[%s320 + $0x64] sm:$0xf]
      %v375 = vld [vmem:[%s320 + $0x68] sm:$0xf]
      %v376 = vld [vmem:[%s320 + $0x6c] sm:$0xf]
      %v377 = vld [vmem:[%s320 + $0x70] sm:$0xf]
      %v378 = vld [vmem:[%s320 + $0x74] sm:$0xf]
      %v379 = vld [vmem:[%s320 + $0x78] sm:$0xf]
      %v380 = vld [vmem:[%s320 + $0x7c] sm:$0xf]
      %v381 = vld [vmem:[%s3] sm:$0xf]
      %v382 = vld [vmem:[%s3 + $0x4] sm:$0xf]
      %v383 = vld [vmem:[%s3 + $0x8] sm:$0xf]
      %v384 = vld [vmem:[%s3 + $0xc] sm:$0xf]
      %v385 = vld [vmem:[%s3 + $0x10] sm:$0x3]
      %v386 = vld [vmem:[%s5] sm:$0x1]
      %v388 = vlaneseq
      %v389 = vshrl.u32 %v388, 7
      %v390 = vsub.s32 0, %v389
      %v391 = vrot.slane %v386, %v390
      %v425 = vunpack.c.l.b16 %v349
      %v426 = vunpack.c.l.b16 %v350
      %v427 = vunpack.c.l.b16 %v351
      %v428 = vunpack.c.l.b16 %v352
      %v429 = vunpack.c.l.b16 %v353
      %v430 = vunpack.c.l.b16 %v354
      %v431 = vunpack.c.l.b16 %v355
      %v432 = vunpack.c.l.b16 %v356
      %v433 = vunpack.c.l.b16 %v357
      %v434 = vunpack.c.l.b16 %v358
      %v435 = vunpack.c.l.b16 %v359
      %v436 = vunpack.c.l.b16 %v360
      %v437 = vunpack.c.l.b16 %v361
      %v438 = vunpack.c.l.b16 %v362
      %v439 = vunpack.c.l.b16 %v363
      %v440 = vunpack.c.l.b16 %v364
      %v441 = vunpack.c.l.b16 %v365
      %v442 = vunpack.c.l.b16 %v366
      %v443 = vunpack.c.l.b16 %v367
      %v444 = vunpack.c.l.b16 %v368
      %v445 = vunpack.c.l.b16 %v369
      %v446 = vunpack.c.l.b16 %v370
      %v447 = vunpack.c.l.b16 %v371
      %v448 = vunpack.c.l.b16 %v372
      %v449 = vunpack.c.l.b16 %v373
      %v450 = vunpack.c.l.b16 %v374
      %v451 = vunpack.c.l.b16 %v375
      %v452 = vunpack.c.l.b16 %v376
      %v453 = vunpack.c.l.b16 %v377
      %v454 = vunpack.c.l.b16 %v378
      %v455 = vunpack.c.l.b16 %v379
      %v456 = vunpack.c.l.b16 %v380
      %v457 = vpack.c.b16 %v426, %v425
      %v458 = vpack.c.b16 %v428, %v427
      %v459 = vpack.c.b16 %v430, %v429
      %v460 = vpack.c.b16 %v432, %v431
      %v461 = vpack.c.b16 %v434, %v433
      %v462 = vpack.c.b16 %v436, %v435
      %v463 = vpack.c.b16 %v438, %v437
      %v464 = vpack.c.b16 %v440, %v439
      %v465 = vpack.c.b16 %v442, %v441
      %v466 = vpack.c.b16 %v444, %v443
      %v467 = vpack.c.b16 %v446, %v445
      %v468 = vpack.c.b16 %v448, %v447
      %v469 = vpack.c.b16 %v450, %v449
      %v470 = vpack.c.b16 %v452, %v451
      %v471 = vpack.c.b16 %v454, %v453
      %v472 = vpack.c.b16 %v456, %v455
      %v478 = vunpack.c.l.b16 %v381
      %v479 = vunpack.c.l.b16 %v382
      %v480 = vunpack.c.l.b16 %v383
      %v481 = vunpack.c.l.b16 %v384
      %v482 = vunpack.c.l.b16 %v385
      %v483 = vpack.c.b16 %v479, %v478
      %v484 = vpack.c.b16 %v481, %v480
      %v485 = vpack.c.b16 %v482, %v482
      %vm488 = vcmask 293888
      %v490 = vsel %vm488, %v457, 0
      %v493 = vsel %vm488, %v458, 0
      %v496 = vsel %vm488, %v459, 0
      %v499 = vsel %vm488, %v460, 0
      %v502 = vsel %vm488, %v461, 0
      %v505 = vsel %vm488, %v462, 0
      %v508 = vsel %vm488, %v463, 0
      %v511 = vsel %vm488, %v464, 0
      %v514 = vsel %vm488, %v465, 0
      %v517 = vsel %vm488, %v466, 0
      %v520 = vsel %vm488, %v467, 0
      %v523 = vsel %vm488, %v468, 0
      %v526 = vsel %vm488, %v469, 0
      %v529 = vsel %vm488, %v470, 0
      %v532 = vsel %vm488, %v471, 0
      %v535 = vsel %vm488, %v472, 0
      %vm537 = vcmask 1041408
      %v539 = vsel %vm537, %v485, 0
      %541 = vmatprep.subr.bf16.mxu0 0
      %542 = vmatpush1.bf16.msra.mxu0 %v483
      %543 = vmatprep.subr.bf16.mxu0 0
      %544 = vmatpush1.bf16.msra.mxu0 %v484
      %545 = vmatprep.subr.bf16.mxu0 0
      %546 = vmatpush1.bf16.msra.mxu0 %v539
      %547 = vmatprep.subr.bf16.mxu0 0
      %548 = vmatpush1.bf16.msra.mxu0 0
      %549 = vmatprep.subr.bf16.mxu0 0
      %550 = vmatpush1.bf16.msra.mxu0 0
      %551 = vmatprep.subr.bf16.mxu0 0
      %552 = vmatpush1.bf16.msra.mxu0 0
      %553 = vmatprep.subr.bf16.mxu0 0
      %554 = vmatpush1.bf16.msra.mxu0 0
      %555 = vmatprep.subr.bf16.mxu0 0
      %556 = vmatpush1.bf16.msra.mxu0 0
      %557 = vmatprep.subr.bf16.mxu0 0
      %558 = vmatpush1.bf16.msra.mxu0 0
      %559 = vmatprep.subr.bf16.mxu0 0
      %560 = vmatpush1.bf16.msra.mxu0 0
      %561 = vmatprep.subr.bf16.mxu0 0
      %562 = vmatpush1.bf16.msra.mxu0 0
      %563 = vmatprep.subr.bf16.mxu0 0
      %564 = vmatpush1.bf16.msra.mxu0 0
      %565 = vmatprep.subr.bf16.mxu0 0
      %566 = vmatpush1.bf16.msra.mxu0 0
      %567 = vmatprep.subr.bf16.mxu0 0
      %568 = vmatpush1.bf16.msra.mxu0 0
      %569 = vmatprep.subr.bf16.mxu0 0
      %570 = vmatpush1.bf16.msra.mxu0 0
      %571 = vmatprep.subr.bf16.mxu0 0
      %572 = vmatpush1.bf16.msra.mxu0 0
      %573 = vmatprep.mubr.bf16.mxu0 0
      %574 = vmatmul.mubr.bf16.gmra.mrb[0].mxu0 %v490
      %v575 = vpop.f32.mrb[0].mxu0
      %v576 = vadd.f32 %v391, %v575
      %v577 = vpop.f32.mrb[0].mxu0
      %v578 = vpop.f32.mrb[0].mxu0
      %v579 = vadd.f32 %v391, %v578
      %v580 = vpop.f32.mrb[0].mxu0
      %581 = vmatprep.mubr.bf16.mxu0 0
      %582 = vmatmul.mubr.bf16.gmra.mrb[0].mxu0 %v493
      %v583 = vpop.f32.mrb[0].mxu0
      %v584 = vadd.f32 %v391, %v583
      %v585 = vpop.f32.mrb[0].mxu0
      %v586 = vpop.f32.mrb[0].mxu0
      %v587 = vadd.f32 %v391, %v586
      %v588 = vpop.f32.mrb[0].mxu0
      %589 = vmatprep.mubr.bf16.mxu0 0
      %590 = vmatmul.mubr.bf16.gmra.mrb[0].mxu0 %v496
      %v591 = vpop.f32.mrb[0].mxu0
      %v592 = vadd.f32 %v391, %v591
      %v593 = vpop.f32.mrb[0].mxu0
      %v594 = vpop.f32.mrb[0].mxu0
      %v595 = vadd.f32 %v391, %v594
      %v596 = vpop.f32.mrb[0].mxu0
      %597 = vmatprep.mubr.bf16.mxu0 0
      %598 = vmatmul.mubr.bf16.gmra.mrb[0].mxu0 %v499
      %v599 = vpop.f32.mrb[0].mxu0
      %v600 = vadd.f32 %v391, %v599
      %v601 = vpop.f32.mrb[0].mxu0
      %v602 = vpop.f32.mrb[0].mxu0
      %v603 = vadd.f32 %v391, %v602
      %v604 = vpop.f32.mrb[0].mxu0
      %605 = vmatprep.mubr.bf16.mxu0 0
      %606 = vmatmul.mubr.bf16.gmra.mrb[0].mxu0 %v502
      %v607 = vpop.f32.mrb[0].mxu0
      %v608 = vadd.f32 %v391, %v607
      %v609 = vpop.f32.mrb[0].mxu0
      %v610 = vpop.f32.mrb[0].mxu0
      %v611 = vadd.f32 %v391, %v610
      %v612 = vpop.f32.mrb[0].mxu0
      %613 = vmatprep.mubr.bf16.mxu0 0
      %614 = vmatmul.mubr.bf16.gmra.mrb[0].mxu0 %v505
      %v615 = vpop.f32.mrb[0].mxu0
      %v616 = vadd.f32 %v391, %v615
      %v617 = vpop.f32.mrb[0].mxu0
      %v618 = vpop.f32.mrb[0].mxu0
      %v619 = vadd.f32 %v391, %v618
      %v620 = vpop.f32.mrb[0].mxu0
      %621 = vmatprep.mubr.bf16.mxu0 0
      %622 = vmatmul.mubr.bf16.gmra.mrb[0].mxu0 %v508
      %v623 = vpop.f32.mrb[0].mxu0
      %v624 = vadd.f32 %v391, %v623
      %v625 = vpop.f32.mrb[0].mxu0
      %v626 = vpop.f32.mrb[0].mxu0
      %v627 = vadd.f32 %v391, %v626
      %v628 = vpop.f32.mrb[0].mxu0
      %629 = vmatprep.mubr.bf16.mxu0 0
      %630 = vmatmul.mubr.bf16.gmra.mrb[0].mxu0 %v511
      %v631 = vpop.f32.mrb[0].mxu0
      %v632 = vadd.f32 %v391, %v631
      %v633 = vpop.f32.mrb[0].mxu0
      %v634 = vpop.f32.mrb[0].mxu0
      %v635 = vadd.f32 %v391, %v634
      %v636 = vpop.f32.mrb[0].mxu0
      %637 = vmatprep.mubr.bf16.mxu0 0
      %638 = vmatmul.mubr.bf16.gmra.mrb[0].mxu0 %v514
      %v639 = vpop.f32.mrb[0].mxu0
      %v640 = vadd.f32 %v391, %v639
      %v641 = vpop.f32.mrb[0].mxu0
      %v642 = vpop.f32.mrb[0].mxu0
      %v643 = vadd.f32 %v391, %v642
      %v644 = vpop.f32.mrb[0].mxu0
      %645 = vmatprep.mubr.bf16.mxu0 0
      %646 = vmatmul.mubr.bf16.gmra.mrb[0].mxu0 %v517
      %v647 = vpop.f32.mrb[0].mxu0
      %v648 = vadd.f32 %v391, %v647
      %v649 = vpop.f32.mrb[0].mxu0
      %v650 = vpop.f32.mrb[0].mxu0
      %v651 = vadd.f32 %v391, %v650
      %v652 = vpop.f32.mrb[0].mxu0
      %653 = vmatprep.mubr.bf16.mxu0 0
      %654 = vmatmul.mubr.bf16.gmra.mrb[0].mxu0 %v520
      %v655 = vpop.f32.mrb[0].mxu0
      %v656 = vadd.f32 %v391, %v655
      %v657 = vpop.f32.mrb[0].mxu0
      %v658 = vpop.f32.mrb[0].mxu0
      %v659 = vadd.f32 %v391, %v658
      %v660 = vpop.f32.mrb[0].mxu0
      %661 = vmatprep.mubr.bf16.mxu0 0
      %662 = vmatmul.mubr.bf16.gmra.mrb[0].mxu0 %v523
      %v663 = vpop.f32.mrb[0].mxu0
      %v664 = vadd.f32 %v391, %v663
      %v665 = vpop.f32.mrb[0].mxu0
      %v666 = vpop.f32.mrb[0].mxu0
      %v667 = vadd.f32 %v391, %v666
      %v668 = vpop.f32.mrb[0].mxu0
      %669 = vmatprep.mubr.bf16.mxu0 0
      %670 = vmatmul.mubr.bf16.gmra.mrb[0].mxu0 %v526
      %v671 = vpop.f32.mrb[0].mxu0
      %v672 = vadd.f32 %v391, %v671
      %v673 = vpop.f32.mrb[0].mxu0
      %v674 = vpop.f32.mrb[0].mxu0
      %v675 = vadd.f32 %v391, %v674
      %v676 = vpop.f32.mrb[0].mxu0
      %677 = vmatprep.mubr.bf16.mxu0 0
      %678 = vmatmul.mubr.bf16.gmra.mrb[0].mxu0 %v529
      %v679 = vpop.f32.mrb[0].mxu0
      %v680 = vadd.f32 %v391, %v679
      %v681 = vpop.f32.mrb[0].mxu0
      %v682 = vpop.f32.mrb[0].mxu0
      %v683 = vadd.f32 %v391, %v682
      %v684 = vpop.f32.mrb[0].mxu0
      %685 = vmatprep.mubr.bf16.mxu0 0
      %686 = vmatmul.mubr.bf16.gmra.mrb[0].mxu0 %v532
      %v687 = vpop.f32.mrb[0].mxu0
      %v688 = vadd.f32 %v391, %v687
      %v689 = vpop.f32.mrb[0].mxu0
      %v690 = vpop.f32.mrb[0].mxu0
      %v691 = vadd.f32 %v391, %v690
      %v692 = vpop.f32.mrb[0].mxu0
      %693 = vmatprep.mubr.bf16.mxu0 0
      %694 = vmatmul.mubr.bf16.gmra.mrb[0].mxu0 %v535
      %v695 = vpop.f32.mrb[0].mxu0
      %v696 = vadd.f32 %v391, %v695
      %v697 = vpop.f32.mrb[0].mxu0
      %v698 = vpop.f32.mrb[0].mxu0
      %v699 = vadd.f32 %v391, %v698
      %v700 = vpop.f32.mrb[0].mxu0
      %701 = vdwg.mxu0
      %s702 = smul.u32 %s348, 3
      %s703 = smul.addr %s702, 4
      %s704 = scalar_lea.vmem %s326, %s703
      %v705 = vld [vmem:[%s704] sm:$0xf]
      %v706 = vld [vmem:[%s704 + $0x4] sm:$0xf]
      %v707 = vld [vmem:[%s704 + $0xc] sm:$0xf]
      %v708 = vld [vmem:[%s704 + $0x10] sm:$0xf]
      %v709 = vld [vmem:[%s704 + $0x18] sm:$0xf]
      %v710 = vld [vmem:[%s704 + $0x1c] sm:$0xf]
      %v711 = vld [vmem:[%s704 + $0x24] sm:$0xf]
      %v712 = vld [vmem:[%s704 + $0x28] sm:$0xf]
      %v713 = vld [vmem:[%s704 + $0x30] sm:$0xf]
      %v714 = vld [vmem:[%s704 + $0x34] sm:$0xf]
      %v715 = vld [vmem:[%s704 + $0x3c] sm:$0xf]
      %v716 = vld [vmem:[%s704 + $0x40] sm:$0xf]
      %v717 = vld [vmem:[%s704 + $0x48] sm:$0xf]
      %v718 = vld [vmem:[%s704 + $0x4c] sm:$0xf]
      %v719 = vld [vmem:[%s704 + $0x54] sm:$0xf]
      %v720 = vld [vmem:[%s704 + $0x58] sm:$0xf]
      %v721 = vld [vmem:[%s704 + $0x60] sm:$0xf]
      %v722 = vld [vmem:[%s704 + $0x64] sm:$0xf]
      %v723 = vld [vmem:[%s704 + $0x6c] sm:$0xf]
      %v724 = vld [vmem:[%s704 + $0x70] sm:$0xf]
      %v725 = vld [vmem:[%s704 + $0x78] sm:$0xf]
      %v726 = vld [vmem:[%s704 + $0x7c] sm:$0xf]
      %v727 = vld [vmem:[%s704 + $0x84] sm:$0xf]
      %v728 = vld [vmem:[%s704 + $0x88] sm:$0xf]
      %v729 = vld [vmem:[%s704 + $0x90] sm:$0xf]
      %v730 = vld [vmem:[%s704 + $0x94] sm:$0xf]
      %v731 = vld [vmem:[%s704 + $0x9c] sm:$0xf]
      %v732 = vld [vmem:[%s704 + $0xa0] sm:$0xf]
      %v733 = vld [vmem:[%s704 + $0xa8] sm:$0xf]
      %v734 = vld [vmem:[%s704 + $0xac] sm:$0xf]
      %v735 = vld [vmem:[%s704 + $0xb4] sm:$0xf]
      %v736 = vld [vmem:[%s704 + $0xb8] sm:$0xf]
      %v737 = vld [vmem:[%s4] sm:$0xf]
      %v738 = vld [vmem:[%s4 + $0x4] sm:$0xf]
      %v739 = vld [vmem:[%s4 + $0x8] sm:$0xf]
      %v740 = vld [vmem:[%s4 + $0xc] sm:$0xf]
      %v773 = vunpack.c.l.b16 %v705
      %v774 = vunpack.c.l.b16 %v706
      %v775 = vunpack.c.l.b16 %v707
      %v776 = vunpack.c.l.b16 %v708
      %v777 = vunpack.c.l.b16 %v709
      %v778 = vunpack.c.l.b16 %v710
      %v779 = vunpack.c.l.b16 %v711
      %v780 = vunpack.c.l.b16 %v712
      %v781 = vunpack.c.l.b16 %v713
      %v782 = vunpack.c.l.b16 %v714
      %v783 = vunpack.c.l.b16 %v715
      %v784 = vunpack.c.l.b16 %v716
      %v785 = vunpack.c.l.b16 %v717
      %v786 = vunpack.c.l.b16 %v718
      %v787 = vunpack.c.l.b16 %v719
      %v788 = vunpack.c.l.b16 %v720
      %v789 = vunpack.c.l.b16 %v721
      %v790 = vunpack.c.l.b16 %v722
      %v791 = vunpack.c.l.b16 %v723
      %v792 = vunpack.c.l.b16 %v724
      %v793 = vunpack.c.l.b16 %v725
      %v794 = vunpack.c.l.b16 %v726
      %v795 = vunpack.c.l.b16 %v727
      %v796 = vunpack.c.l.b16 %v728
      %v797 = vunpack.c.l.b16 %v729
      %v798 = vunpack.c.l.b16 %v730
      %v799 = vunpack.c.l.b16 %v731
      %v800 = vunpack.c.l.b16 %v732
      %v801 = vunpack.c.l.b16 %v733
      %v802 = vunpack.c.l.b16 %v734
      %v803 = vunpack.c.l.b16 %v735
      %v804 = vunpack.c.l.b16 %v736
      %v805 = vpack.c.b16 %v774, %v773
      %v806 = vpack.c.b16 %v776, %v775
      %v807 = vpack.c.b16 %v778, %v777
      %v808 = vpack.c.b16 %v780, %v779
      %v809 = vpack.c.b16 %v782, %v781
      %v810 = vpack.c.b16 %v784, %v783
      %v811 = vpack.c.b16 %v786, %v785
      %v812 = vpack.c.b16 %v788, %v787
      %v813 = vpack.c.b16 %v790, %v789
      %v814 = vpack.c.b16 %v792, %v791
      %v815 = vpack.c.b16 %v794, %v793
      %v816 = vpack.c.b16 %v796, %v795
      %v817 = vpack.c.b16 %v798, %v797
      %v818 = vpack.c.b16 %v800, %v799
      %v819 = vpack.c.b16 %v802, %v801
      %v820 = vpack.c.b16 %v804, %v803
      %v825 = vunpack.c.l.b16 %v737
      %v826 = vunpack.c.l.b16 %v738
      %v827 = vunpack.c.l.b16 %v739
      %v828 = vunpack.c.l.b16 %v740
      %v829 = vpack.c.b16 %v826, %v825
      %v830 = vpack.c.b16 %v828, %v827
      %vm833 = vcmask 261120
      %v835 = vsel %vm833, %v805, 0
      %v838 = vsel %vm833, %v806, 0
      %v841 = vsel %vm833, %v807, 0
      %v844 = vsel %vm833, %v808, 0
      %v847 = vsel %vm833, %v809, 0
      %v850 = vsel %vm833, %v810, 0
      %v853 = vsel %vm833, %v811, 0
      %v856 = vsel %vm833, %v812, 0
      %v859 = vsel %vm833, %v813, 0
      %v862 = vsel %vm833, %v814, 0
      %v865 = vsel %vm833, %v815, 0
      %v868 = vsel %vm833, %v816, 0
      %v871 = vsel %vm833, %v817, 0
      %v874 = vsel %vm833, %v818, 0
      %v877 = vsel %vm833, %v819, 0
      %v880 = vsel %vm833, %v820, 0
      %882 = vmatprep.subr.bf16.mxu0 0
      %883 = vmatpush1.bf16.msra.mxu0 %v829
      %884 = vmatprep.subr.bf16.mxu0 0
      %885 = vmatpush1.bf16.msra.mxu0 %v830
      %886 = vmatprep.subr.bf16.mxu0 0
      %887 = vmatpush1.bf16.msra.mxu0 0
      %888 = vmatprep.subr.bf16.mxu0 0
      %889 = vmatpush1.bf16.msra.mxu0 0
      %890 = vmatprep.subr.bf16.mxu0 0
      %891 = vmatpush1.bf16.msra.mxu0 0
      %892 = vmatprep.subr.bf16.mxu0 0
      %893 = vmatpush1.bf16.msra.mxu0 0
      %894 = vmatprep.subr.bf16.mxu0 0
      %895 = vmatpush1.bf16.msra.mxu0 0
      %896 = vmatprep.subr.bf16.mxu0 0
      %897 = vmatpush1.bf16.msra.mxu0 0
      %898 = vmatprep.subr.bf16.mxu0 0
      %899 = vmatpush1.bf16.msra.mxu0 0
      %900 = vmatprep.subr.bf16.mxu0 0
      %901 = vmatpush1.bf16.msra.mxu0 0
      %902 = vmatprep.subr.bf16.mxu0 0
      %903 = vmatpush1.bf16.msra.mxu0 0
      %904 = vmatprep.subr.bf16.mxu0 0
      %905 = vmatpush1.bf16.msra.mxu0 0
      %906 = vmatprep.subr.bf16.mxu0 0
      %907 = vmatpush1.bf16.msra.mxu0 0
      %908 = vmatprep.subr.bf16.mxu0 0
      %909 = vmatpush1.bf16.msra.mxu0 0
      %910 = vmatprep.subr.bf16.mxu0 0
      %911 = vmatpush1.bf16.msra.mxu0 0
      %912 = vmatprep.subr.bf16.mxu0 0
      %913 = vmatpush1.bf16.msra.mxu0 0
      %914 = vmatprep.mubr.bf16.mxu0 0
      %915 = vmatmul.mubr.bf16.gmra.mrb[0].mxu0 %v835
      %v916 = vpop.f32.mrb[0].mxu0
      %v917 = vadd.f32 0.0, %v916
      %v918 = vpop.f32.mrb[0].mxu0
      %v919 = vpop.f32.mrb[0].mxu0
      %v920 = vadd.f32 0.0, %v919
      %v921 = vpop.f32.mrb[0].mxu0
      %922 = vmatprep.mubr.bf16.mxu0 0
      %923 = vmatmul.mubr.bf16.gmra.mrb[0].mxu0 %v838
      %v924 = vpop.f32.mrb[0].mxu0
      %v925 = vadd.f32 0.0, %v924
      %v926 = vpop.f32.mrb[0].mxu0
      %v927 = vpop.f32.mrb[0].mxu0
      %v928 = vadd.f32 0.0, %v927
      %v929 = vpop.f32.mrb[0].mxu0
      %930 = vmatprep.mubr.bf16.mxu0 0
      %931 = vmatmul.mubr.bf16.gmra.mrb[0].mxu0 %v841
      %v932 = vpop.f32.mrb[0].mxu0
      %v933 = vadd.f32 0.0, %v932
      %v934 = vpop.f32.mrb[0].mxu0
      %v935 = vpop.f32.mrb[0].mxu0
      %v936 = vadd.f32 0.0, %v935
      %v937 = vpop.f32.mrb[0].mxu0
      %938 = vmatprep.mubr.bf16.mxu0 0
      %939 = vmatmul.mubr.bf16.gmra.mrb[0].mxu0 %v844
      %v940 = vpop.f32.mrb[0].mxu0
      %v941 = vadd.f32 0.0, %v940
      %v942 = vpop.f32.mrb[0].mxu0
      %v943 = vpop.f32.mrb[0].mxu0
      %v944 = vadd.f32 0.0, %v943
      %v945 = vpop.f32.mrb[0].mxu0
      %946 = vmatprep.mubr.bf16.mxu0 0
      %947 = vmatmul.mubr.bf16.gmra.mrb[0].mxu0 %v847
      %v948 = vpop.f32.mrb[0].mxu0
      %v949 = vadd.f32 0.0, %v948
      %v950 = vpop.f32.mrb[0].mxu0
      %v951 = vpop.f32.mrb[0].mxu0
      %v952 = vadd.f32 0.0, %v951
      %v953 = vpop.f32.mrb[0].mxu0
      %954 = vmatprep.mubr.bf16.mxu0 0
      %955 = vmatmul.mubr.bf16.gmra.mrb[0].mxu0 %v850
      %v956 = vpop.f32.mrb[0].mxu0
      %v957 = vadd.f32 0.0, %v956
      %v958 = vpop.f32.mrb[0].mxu0
      %v959 = vpop.f32.mrb[0].mxu0
      %v960 = vadd.f32 0.0, %v959
      %v961 = vpop.f32.mrb[0].mxu0
      %962 = vmatprep.mubr.bf16.mxu0 0
      %963 = vmatmul.mubr.bf16.gmra.mrb[0].mxu0 %v853
      %v964 = vpop.f32.mrb[0].mxu0
      %v965 = vadd.f32 0.0, %v964
      %v966 = vpop.f32.mrb[0].mxu0
      %v967 = vpop.f32.mrb[0].mxu0
      %v968 = vadd.f32 0.0, %v967
      %v969 = vpop.f32.mrb[0].mxu0
      %970 = vmatprep.mubr.bf16.mxu0 0
      %971 = vmatmul.mubr.bf16.gmra.mrb[0].mxu0 %v856
      %v972 = vpop.f32.mrb[0].mxu0
      %v973 = vadd.f32 0.0, %v972
      %v974 = vpop.f32.mrb[0].mxu0
      %v975 = vpop.f32.mrb[0].mxu0
      %v976 = vadd.f32 0.0, %v975
      %v977 = vpop.f32.mrb[0].mxu0
      %978 = vmatprep.mubr.bf16.mxu0 0
      %979 = vmatmul.mubr.bf16.gmra.mrb[0].mxu0 %v859
      %v980 = vpop.f32.mrb[0].mxu0
      %v981 = vadd.f32 0.0, %v980
      %v982 = vpop.f32.mrb[0].mxu0
      %v983 = vpop.f32.mrb[0].mxu0
      %v984 = vadd.f32 0.0, %v983
      %v985 = vpop.f32.mrb[0].mxu0
      %986 = vmatprep.mubr.bf16.mxu0 0
      %987 = vmatmul.mubr.bf16.gmra.mrb[0].mxu0 %v862
      %v988 = vpop.f32.mrb[0].mxu0
      %v989 = vadd.f32 0.0, %v988
      %v990 = vpop.f32.mrb[0].mxu0
      %v991 = vpop.f32.mrb[0].mxu0
      %v992 = vadd.f32 0.0, %v991
      %v993 = vpop.f32.mrb[0].mxu0
      %994 = vmatprep.mubr.bf16.mxu0 0
      %995 = vmatmul.mubr.bf16.gmra.mrb[0].mxu0 %v865
      %v996 = vpop.f32.mrb[0].mxu0
      %v997 = vadd.f32 0.0, %v996
      %v998 = vpop.f32.mrb[0].mxu0
      %v999 = vpop.f32.mrb[0].mxu0
      %v1000 = vadd.f32 0.0, %v999
      %v1001 = vpop.f32.mrb[0].mxu0
      %1002 = vmatprep.mubr.bf16.mxu0 0
      %1003 = vmatmul.mubr.bf16.gmra.mrb[0].mxu0 %v868
      %v1004 = vpop.f32.mrb[0].mxu0
      %v1005 = vadd.f32 0.0, %v1004
      %v1006 = vpop.f32.mrb[0].mxu0
      %v1007 = vpop.f32.mrb[0].mxu0
      %v1008 = vadd.f32 0.0, %v1007
      %v1009 = vpop.f32.mrb[0].mxu0
      %1010 = vmatprep.mubr.bf16.mxu0 0
      %1011 = vmatmul.mubr.bf16.gmra.mrb[0].mxu0 %v871
      %v1012 = vpop.f32.mrb[0].mxu0
      %v1013 = vadd.f32 0.0, %v1012
      %v1014 = vpop.f32.mrb[0].mxu0
      %v1015 = vpop.f32.mrb[0].mxu0
      %v1016 = vadd.f32 0.0, %v1015
      %v1017 = vpop.f32.mrb[0].mxu0
      %1018 = vmatprep.mubr.bf16.mxu0 0
      %1019 = vmatmul.mubr.bf16.gmra.mrb[0].mxu0 %v874
      %v1020 = vpop.f32.mrb[0].mxu0
      %v1021 = vadd.f32 0.0, %v1020
      %v1022 = vpop.f32.mrb[0].mxu0
      %v1023 = vpop.f32.mrb[0].mxu0
      %v1024 = vadd.f32 0.0, %v1023
      %v1025 = vpop.f32.mrb[0].mxu0
      %1026 = vmatprep.mubr.bf16.mxu0 0
      %1027 = vmatmul.mubr.bf16.gmra.mrb[0].mxu0 %v877
      %v1028 = vpop.f32.mrb[0].mxu0
      %v1029 = vadd.f32 0.0, %v1028
      %v1030 = vpop.f32.mrb[0].mxu0
      %v1031 = vpop.f32.mrb[0].mxu0
      %v1032 = vadd.f32 0.0, %v1031
      %v1033 = vpop.f32.mrb[0].mxu0
      %1034 = vmatprep.mubr.bf16.mxu0 0
      %1035 = vmatmul.mubr.bf16.gmra.mrb[0].mxu0 %v880
      %v1036 = vpop.f32.mrb[0].mxu0
      %v1037 = vadd.f32 0.0, %v1036
      %v1038 = vpop.f32.mrb[0].mxu0
      %v1039 = vpop.f32.mrb[0].mxu0
      %v1040 = vadd.f32 0.0, %v1039
      %v1041 = vpop.f32.mrb[0].mxu0
      %1042 = vdwg.mxu0
      %v1043 = vadd.f32 %v576, %v917
      %v1044 = vadd.f32 %v579, %v920
      %v1045 = vadd.f32 %v584, %v925
      %v1046 = vadd.f32 %v587, %v928
      %v1047 = vadd.f32 %v592, %v933
      %v1048 = vadd.f32 %v595, %v936
      %v1049 = vadd.f32 %v600, %v941
      %v1050 = vadd.f32 %v603, %v944
      %v1051 = vadd.f32 %v608, %v949
      %v1052 = vadd.f32 %v611, %v952
      %v1053 = vadd.f32 %v616, %v957
      %v1054 = vadd.f32 %v619, %v960
      %v1055 = vadd.f32 %v624, %v965
      %v1056 = vadd.f32 %v627, %v968
      %v1057 = vadd.f32 %v632, %v973
      %v1058 = vadd.f32 %v635, %v976
      %v1059 = vadd.f32 %v640, %v981
      %v1060 = vadd.f32 %v643, %v984
      %v1061 = vadd.f32 %v648, %v989
      %v1062 = vadd.f32 %v651, %v992
      %v1063 = vadd.f32 %v656, %v997
      %v1064 = vadd.f32 %v659, %v1000
      %v1065 = vadd.f32 %v664, %v1005
      %v1066 = vadd.f32 %v667, %v1008
      %v1067 = vadd.f32 %v672, %v1013
      %v1068 = vadd.f32 %v675, %v1016
      %v1069 = vadd.f32 %v680, %v1021
      %v1070 = vadd.f32 %v683, %v1024
      %v1071 = vadd.f32 %v688, %v1029
      %v1072 = vadd.f32 %v691, %v1032
      %v1073 = vadd.f32 %v696, %v1037
      %v1074 = vadd.f32 %v699, %v1040
      %v1075 = vld [vmem:[%s704] sm:$0xf]
      %v1076 = vld [vmem:[%s704 + $0x4] sm:$0xf]
      %v1077 = vld [vmem:[%s704 + $0x8] sm:$0x1]
      %v1078 = vld [vmem:[%s704 + $0xc] sm:$0xf]
      %v1079 = vld [vmem:[%s704 + $0x10] sm:$0xf]
      %v1080 = vld [vmem:[%s704 + $0x14] sm:$0x1]
      %v1081 = vld [vmem:[%s704 + $0x18] sm:$0xf]
      %v1082 = vld [vmem:[%s704 + $0x1c] sm:$0xf]
      %v1083 = vld [vmem:[%s704 + $0x20] sm:$0x1]
      %v1084 = vld [vmem:[%s704 + $0x24] sm:$0xf]
      %v1085 = vld [vmem:[%s704 + $0x28] sm:$0xf]
      %v1086 = vld [vmem:[%s704 + $0x2c] sm:$0x1]
      %v1087 = vld [vmem:[%s704 + $0x30] sm:$0xf]
      %v1088 = vld [vmem:[%s704 + $0x34] sm:$0xf]
      %v1089 = vld [vmem:[%s704 + $0x38] sm:$0x1]
      %v1090 = vld [vmem:[%s704 + $0x3c] sm:$0xf]
      %v1091 = vld [vmem:[%s704 + $0x40] sm:$0xf]
      %v1092 = vld [vmem:[%s704 + $0x44] sm:$0x1]
      %v1093 = vld [vmem:[%s704 + $0x48] sm:$0xf]
      %v1094 = vld [vmem:[%s704 + $0x4c] sm:$0xf]
      %v1095 = vld [vmem:[%s704 + $0x50] sm:$0x1]
      %v1096 = vld [vmem:[%s704 + $0x54] sm:$0xf]
      %v1097 = vld [vmem:[%s704 + $0x58] sm:$0xf]
      %v1098 = vld [vmem:[%s704 + $0x5c] sm:$0x1]
      %v1099 = vld [vmem:[%s704 + $0x60] sm:$0xf]
      %v1100 = vld [vmem:[%s704 + $0x64] sm:$0xf]
      %v1101 = vld [vmem:[%s704 + $0x68] sm:$0x1]
      %v1102 = vld [vmem:[%s704 + $0x6c] sm:$0xf]
      %v1103 = vld [vmem:[%s704 + $0x70] sm:$0xf]
      %v1104 = vld [vmem:[%s704 + $0x74] sm:$0x1]
      %v1105 = vld [vmem:[%s704 + $0x78] sm:$0xf]
      %v1106 = vld [vmem:[%s704 + $0x7c] sm:$0xf]
      %v1107 = vld [vmem:[%s704 + $0x80] sm:$0x1]
      %v1108 = vld [vmem:[%s704 + $0x84] sm:$0xf]
      %v1109 = vld [vmem:[%s704 + $0x88] sm:$0xf]
      %v1110 = vld [vmem:[%s704 + $0x8c] sm:$0x1]
      %v1111 = vld [vmem:[%s704 + $0x90] sm:$0xf]
      %v1112 = vld [vmem:[%s704 + $0x94] sm:$0xf]
      %v1113 = vld [vmem:[%s704 + $0x98] sm:$0x1]
      %v1114 = vld [vmem:[%s704 + $0x9c] sm:$0xf]
      %v1115 = vld [vmem:[%s704 + $0xa0] sm:$0xf]
      %v1116 = vld [vmem:[%s704 + $0xa4] sm:$0x1]
      %v1117 = vld [vmem:[%s704 + $0xa8] sm:$0xf]
      %v1118 = vld [vmem:[%s704 + $0xac] sm:$0xf]
      %v1119 = vld [vmem:[%s704 + $0xb0] sm:$0x1]
      %v1120 = vld [vmem:[%s704 + $0xb4] sm:$0xf]
      %v1121 = vld [vmem:[%s704 + $0xb8] sm:$0xf]
      %v1122 = vld [vmem:[%s704 + $0xbc] sm:$0x1]
      %vm1123 = vsmask.f32 3328
      %vm1124 = vsmask.f32 7440
      %vm1125 = vmor %vm1123, %vm1124
      %v1127 = vshrl.u32 %v1075, 16
      %v1129 = vrot.slane %v1127, 4
      %v1130 = vshll.u32 %v1075, 16
      %v1132 = vrot.slane %v1130, 5
      %v1133 = vor.u32 %v1129, %v1132
      %v1134 = vrot.slane %v1133, 4
      %v1136 = vshll.u32 %v1076, 16
      %v1138 = vrot.slane %v1136, 5
      %v1139 = vsel %vm1125, %v1134, %v1138
      %v1140 = vshrl.u32 %v1076, 16
      %v1142 = vrot.slane %v1140, 4
      %v1143 = vor.u32 %v1142, %v1138
      %v1144 = vrot.slane %v1143, 4
      %v1146 = vshll.u32 %v1077, 16
      %v1148 = vrot.slane %v1146, 5
      %v1149 = vsel %vm1125, %v1144, %v1148
      %v1151 = vshrl.u32 %v1078, 16
      %v1153 = vrot.slane %v1151, 4
      %v1154 = vshll.u32 %v1078, 16
      %v1156 = vrot.slane %v1154, 5
      %v1157 = vor.u32 %v1153, %v1156
      %v1158 = vrot.slane %v1157, 4
      %v1160 = vshll.u32 %v1079, 16
      %v1162 = vrot.slane %v1160, 5
      %v1163 = vsel %vm1125, %v1158, %v1162
      %v1164 = vshrl.u32 %v1079, 16
      %v1166 = vrot.slane %v1164, 4
      %v1167 = vor.u32 %v1166, %v1162
      %v1168 = vrot.slane %v1167, 4
      %v1170 = vshll.u32 %v1080, 16
      %v1172 = vrot.slane %v1170, 5
      %v1173 = vsel %vm1125, %v1168, %v1172
      %v1175 = vshrl.u32 %v1081, 16
      %v1177 = vrot.slane %v1175, 4
      %v1178 = vshll.u32 %v1081, 16
      %v1180 = vrot.slane %v1178, 5
      %v1181 = vor.u32 %v1177, %v1180
      %v1182 = vrot.slane %v1181, 4
      %v1184 = vshll.u32 %v1082, 16
      %v1186 = vrot.slane %v1184, 5
      %v1187 = vsel %vm1125, %v1182, %v1186
      %v1188 = vshrl.u32 %v1082, 16
      %v1190 = vrot.slane %v1188, 4
      %v1191 = vor.u32 %v1190, %v1186
      %v1192 = vrot.slane %v1191, 4
      %v1194 = vshll.u32 %v1083, 16
      %v1196 = vrot.slane %v1194, 5
      %v1197 = vsel %vm1125, %v1192, %v1196
      %v1199 = vshrl.u32 %v1084, 16
      %v1201 = vrot.slane %v1199, 4
      %v1202 = vshll.u32 %v1084, 16
      %v1204 = vrot.slane %v1202, 5
      %v1205 = vor.u32 %v1201, %v1204
      %v1206 = vrot.slane %v1205, 4
      %v1208 = vshll.u32 %v1085, 16
      %v1210 = vrot.slane %v1208, 5
      %v1211 = vsel %vm1125, %v1206, %v1210
      %v1212 = vshrl.u32 %v1085, 16
      %v1214 = vrot.slane %v1212, 4
      %v1215 = vor.u32 %v1214, %v1210
      %v1216 = vrot.slane %v1215, 4
      %v1218 = vshll.u32 %v1086, 16
      %v1220 = vrot.slane %v1218, 5
      %v1221 = vsel %vm1125, %v1216, %v1220
      %v1223 = vshrl.u32 %v1087, 16
      %v1225 = vrot.slane %v1223, 4
      %v1226 = vshll.u32 %v1087, 16
      %v1228 = vrot.slane %v1226, 5
      %v1229 = vor.u32 %v1225, %v1228
      %v1230 = vrot.slane %v1229, 4
      %v1232 = vshll.u32 %v1088, 16
      %v1234 = vrot.slane %v1232, 5
      %v1235 = vsel %vm1125, %v1230, %v1234
      %v1236 = vshrl.u32 %v1088, 16
      %v1238 = vrot.slane %v1236, 4
      %v1239 = vor.u32 %v1238, %v1234
      %v1240 = vrot.slane %v1239, 4
      %v1242 = vshll.u32 %v1089, 16
      %v1244 = vrot.slane %v1242, 5
      %v1245 = vsel %vm1125, %v1240, %v1244
      %v1247 = vshrl.u32 %v1090, 16
      %v1249 = vrot.slane %v1247, 4
      %v1250 = vshll.u32 %v1090, 16
      %v1252 = vrot.slane %v1250, 5
      %v1253 = vor.u32 %v1249, %v1252
      %v1254 = vrot.slane %v1253, 4
      %v1256 = vshll.u32 %v1091, 16
      %v1258 = vrot.slane %v1256, 5
      %v1259 = vsel %vm1125, %v1254, %v1258
      %v1260 = vshrl.u32 %v1091, 16
      %v1262 = vrot.slane %v1260, 4
      %v1263 = vor.u32 %v1262, %v1258
      %v1264 = vrot.slane %v1263, 4
      %v1266 = vshll.u32 %v1092, 16
      %v1268 = vrot.slane %v1266, 5
      %v1269 = vsel %vm1125, %v1264, %v1268
      %v1271 = vshrl.u32 %v1093, 16
      %v1273 = vrot.slane %v1271, 4
      %v1274 = vshll.u32 %v1093, 16
      %v1276 = vrot.slane %v1274, 5
      %v1277 = vor.u32 %v1273, %v1276
      %v1278 = vrot.slane %v1277, 4
      %v1280 = vshll.u32 %v1094, 16
      %v1282 = vrot.slane %v1280, 5
      %v1283 = vsel %vm1125, %v1278, %v1282
      %v1284 = vshrl.u32 %v1094, 16
      %v1286 = vrot.slane %v1284, 4
      %v1287 = vor.u32 %v1286, %v1282
      %v1288 = vrot.slane %v1287, 4
      %v1290 = vshll.u32 %v1095, 16
      %v1292 = vrot.slane %v1290, 5
      %v1293 = vsel %vm1125, %v1288, %v1292
      %v1295 = vshrl.u32 %v1096, 16
      %v1297 = vrot.slane %v1295, 4
      %v1298 = vshll.u32 %v1096, 16
      %v1300 = vrot.slane %v1298, 5
      %v1301 = vor.u32 %v1297, %v1300
      %v1302 = vrot.slane %v1301, 4
      %v1304 = vshll.u32 %v1097, 16
      %v1306 = vrot.slane %v1304, 5
      %v1307 = vsel %vm1125, %v1302, %v1306
      %v1308 = vshrl.u32 %v1097, 16
      %v1310 = vrot.slane %v1308, 4
      %v1311 = vor.u32 %v1310, %v1306
      %v1312 = vrot.slane %v1311, 4
      %v1314 = vshll.u32 %v1098, 16
      %v1316 = vrot.slane %v1314, 5
      %v1317 = vsel %vm1125, %v1312, %v1316
      %v1319 = vshrl.u32 %v1099, 16
      %v1321 = vrot.slane %v1319, 4
      %v1322 = vshll.u32 %v1099, 16
      %v1324 = vrot.slane %v1322, 5
      %v1325 = vor.u32 %v1321, %v1324
      %v1326 = vrot.slane %v1325, 4
      %v1328 = vshll.u32 %v1100, 16
      %v1330 = vrot.slane %v1328, 5
      %v1331 = vsel %vm1125, %v1326, %v1330
      %v1332 = vshrl.u32 %v1100, 16
      %v1334 = vrot.slane %v1332, 4
      %v1335 = vor.u32 %v1334, %v1330
      %v1336 = vrot.slane %v1335, 4
      %v1338 = vshll.u32 %v1101, 16
      %v1340 = vrot.slane %v1338, 5
      %v1341 = vsel %vm1125, %v1336, %v1340
      %v1343 = vshrl.u32 %v1102, 16
      %v1345 = vrot.slane %v1343, 4
      %v1346 = vshll.u32 %v1102, 16
      %v1348 = vrot.slane %v1346, 5
      %v1349 = vor.u32 %v1345, %v1348
      %v1350 = vrot.slane %v1349, 4
      %v1352 = vshll.u32 %v1103, 16
      %v1354 = vrot.slane %v1352, 5
      %v1355 = vsel %vm1125, %v1350, %v1354
      %v1356 = vshrl.u32 %v1103, 16
      %v1358 = vrot.slane %v1356, 4
      %v1359 = vor.u32 %v1358, %v1354
      %v1360 = vrot.slane %v1359, 4
      %v1362 = vshll.u32 %v1104, 16
      %v1364 = vrot.slane %v1362, 5
      %v1365 = vsel %vm1125, %v1360, %v1364
      %v1367 = vshrl.u32 %v1105, 16
      %v1369 = vrot.slane %v1367, 4
      %v1370 = vshll.u32 %v1105, 16
      %v1372 = vrot.slane %v1370, 5
      %v1373 = vor.u32 %v1369, %v1372
      %v1374 = vrot.slane %v1373, 4
      %v1376 = vshll.u32 %v1106, 16
      %v1378 = vrot.slane %v1376, 5
      %v1379 = vsel %vm1125, %v1374, %v1378
      %v1380 = vshrl.u32 %v1106, 16
      %v1382 = vrot.slane %v1380, 4
      %v1383 = vor.u32 %v1382, %v1378
      %v1384 = vrot.slane %v1383, 4
      %v1386 = vshll.u32 %v1107, 16
      %v1388 = vrot.slane %v1386, 5
      %v1389 = vsel %vm1125, %v1384, %v1388
      %v1391 = vshrl.u32 %v1108, 16
      %v1393 = vrot.slane %v1391, 4
      %v1394 = vshll.u32 %v1108, 16
      %v1396 = vrot.slane %v1394, 5
      %v1397 = vor.u32 %v1393, %v1396
      %v1398 = vrot.slane %v1397, 4
      %v1400 = vshll.u32 %v1109, 16
      %v1402 = vrot.slane %v1400, 5
      %v1403 = vsel %vm1125, %v1398, %v1402
      %v1404 = vshrl.u32 %v1109, 16
      %v1406 = vrot.slane %v1404, 4
      %v1407 = vor.u32 %v1406, %v1402
      %v1408 = vrot.slane %v1407, 4
      %v1410 = vshll.u32 %v1110, 16
      %v1412 = vrot.slane %v1410, 5
      %v1413 = vsel %vm1125, %v1408, %v1412
      %v1415 = vshrl.u32 %v1111, 16
      %v1417 = vrot.slane %v1415, 4
      %v1418 = vshll.u32 %v1111, 16
      %v1420 = vrot.slane %v1418, 5
      %v1421 = vor.u32 %v1417, %v1420
      %v1422 = vrot.slane %v1421, 4
      %v1424 = vshll.u32 %v1112, 16
      %v1426 = vrot.slane %v1424, 5
      %v1427 = vsel %vm1125, %v1422, %v1426
      %v1428 = vshrl.u32 %v1112, 16
      %v1430 = vrot.slane %v1428, 4
      %v1431 = vor.u32 %v1430, %v1426
      %v1432 = vrot.slane %v1431, 4
      %v1434 = vshll.u32 %v1113, 16
      %v1436 = vrot.slane %v1434, 5
      %v1437 = vsel %vm1125, %v1432, %v1436
      %v1439 = vshrl.u32 %v1114, 16
      %v1441 = vrot.slane %v1439, 4
      %v1442 = vshll.u32 %v1114, 16
      %v1444 = vrot.slane %v1442, 5
      %v1445 = vor.u32 %v1441, %v1444
      %v1446 = vrot.slane %v1445, 4
      %v1448 = vshll.u32 %v1115, 16
      %v1450 = vrot.slane %v1448, 5
      %v1451 = vsel %vm1125, %v1446, %v1450
      %v1452 = vshrl.u32 %v1115, 16
      %v1454 = vrot.slane %v1452, 4
      %v1455 = vor.u32 %v1454, %v1450
      %v1456 = vrot.slane %v1455, 4
      %v1458 = vshll.u32 %v1116, 16
      %v1460 = vrot.slane %v1458, 5
      %v1461 = vsel %vm1125, %v1456, %v1460
      %v1463 = vshrl.u32 %v1117, 16
      %v1465 = vrot.slane %v1463, 4
      %v1466 = vshll.u32 %v1117, 16
      %v1468 = vrot.slane %v1466, 5
      %v1469 = vor.u32 %v1465, %v1468
      %v1470 = vrot.slane %v1469, 4
      %v1472 = vshll.u32 %v1118, 16
      %v1474 = vrot.slane %v1472, 5
      %v1475 = vsel %vm1125, %v1470, %v1474
      %v1476 = vshrl.u32 %v1118, 16
      %v1478 = vrot.slane %v1476, 4
      %v1479 = vor.u32 %v1478, %v1474
      %v1480 = vrot.slane %v1479, 4
      %v1482 = vshll.u32 %v1119, 16
      %v1484 = vrot.slane %v1482, 5
      %v1485 = vsel %vm1125, %v1480, %v1484
      %v1487 = vshrl.u32 %v1120, 16
      %v1489 = vrot.slane %v1487, 4
      %v1490 = vshll.u32 %v1120, 16
      %v1492 = vrot.slane %v1490, 5
      %v1493 = vor.u32 %v1489, %v1492
      %v1494 = vrot.slane %v1493, 4
      %v1496 = vshll.u32 %v1121, 16
      %v1498 = vrot.slane %v1496, 5
      %v1499 = vsel %vm1125, %v1494, %v1498
      %v1500 = vshrl.u32 %v1121, 16
      %v1502 = vrot.slane %v1500, 4
      %v1503 = vor.u32 %v1502, %v1498
      %v1504 = vrot.slane %v1503, 4
      %v1506 = vshll.u32 %v1122, 16
      %v1508 = vrot.slane %v1506, 5
      %v1509 = vsel %vm1125, %v1504, %v1508
      %s1510 = scalar_lea.vmem %s4, 16
      %v1511 = vld [vmem:[%s1510] sm:$0xf]
      %v1512 = vld [vmem:[%s1510 + $0x4] sm:$0xf]
      %v1513 = vld [vmem:[%s1510 + $0x8] sm:$0xf]
      %v1514 = vld [vmem:[%s1510 + $0xc] sm:$0xf]
      %v1515 = vunpack.c.l.b16 %v1139
      %v1516 = vunpack.c.l.b16 %v1149
      %v1517 = vunpack.c.l.b16 %v1163
      %v1518 = vunpack.c.l.b16 %v1173
      %v1519 = vunpack.c.l.b16 %v1187
      %v1520 = vunpack.c.l.b16 %v1197
      %v1521 = vunpack.c.l.b16 %v1211
      %v1522 = vunpack.c.l.b16 %v1221
      %v1523 = vunpack.c.l.b16 %v1235
      %v1524 = vunpack.c.l.b16 %v1245
      %v1525 = vunpack.c.l.b16 %v1259
      %v1526 = vunpack.c.l.b16 %v1269
      %v1527 = vunpack.c.l.b16 %v1283
      %v1528 = vunpack.c.l.b16 %v1293
      %v1529 = vunpack.c.l.b16 %v1307
      %v1530 = vunpack.c.l.b16 %v1317
      %v1531 = vunpack.c.l.b16 %v1331
      %v1532 = vunpack.c.l.b16 %v1341
      %v1533 = vunpack.c.l.b16 %v1355
      %v1534 = vunpack.c.l.b16 %v1365
      %v1535 = vunpack.c.l.b16 %v1379
      %v1536 = vunpack.c.l.b16 %v1389
      %v1537 = vunpack.c.l.b16 %v1403
      %v1538 = vunpack.c.l.b16 %v1413
      %v1539 = vunpack.c.l.b16 %v1427
      %v1540 = vunpack.c.l.b16 %v1437
      %v1541 = vunpack.c.l.b16 %v1451
      %v1542 = vunpack.c.l.b16 %v1461
      %v1543 = vunpack.c.l.b16 %v1475
      %v1544 = vunpack.c.l.b16 %v1485
      %v1545 = vunpack.c.l.b16 %v1499
      %v1546 = vunpack.c.l.b16 %v1509
      %v1547 = vpack.c.b16 %v1516, %v1515
      %v1548 = vpack.c.b16 %v1518, %v1517
      %v1549 = vpack.c.b16 %v1520, %v1519
      %v1550 = vpack.c.b16 %v1522, %v1521
      %v1551 = vpack.c.b16 %v1524, %v1523
      %v1552 = vpack.c.b16 %v1526, %v1525
      %v1553 = vpack.c.b16 %v1528, %v1527
      %v1554 = vpack.c.b16 %v1530, %v1529
      %v1555 = vpack.c.b16 %v1532, %v1531
      %v1556 = vpack.c.b16 %v1534, %v1533
      %v1557 = vpack.c.b16 %v1536, %v1535
      %v1558 = vpack.c.b16 %v1538, %v1537
      %v1559 = vpack.c.b16 %v1540, %v1539
      %v1560 = vpack.c.b16 %v1542, %v1541
      %v1561 = vpack.c.b16 %v1544, %v1543
      %v1562 = vpack.c.b16 %v1546, %v1545
      %v1567 = vunpack.c.l.b16 %v1511
      %v1568 = vunpack.c.l.b16 %v1512
      %v1569 = vunpack.c.l.b16 %v1513
      %v1570 = vunpack.c.l.b16 %v1514
      %v1571 = vpack.c.b16 %v1568, %v1567
      %v1572 = vpack.c.b16 %v1570, %v1569
      %v1576 = vsel %vm833, %v1547, 0
      %v1579 = vsel %vm833, %v1548, 0
      %v1582 = vsel %vm833, %v1549, 0
      %v1585 = vsel %vm833, %v1550, 0
      %v1588 = vsel %vm833, %v1551, 0
      %v1591 = vsel %vm833, %v1552, 0
      %v1594 = vsel %vm833, %v1553, 0
      %v1597 = vsel %vm833, %v1554, 0
      %v1600 = vsel %vm833, %v1555, 0
      %v1603 = vsel %vm833, %v1556, 0
      %v1606 = vsel %vm833, %v1557, 0
      %v1609 = vsel %vm833, %v1558, 0
      %v1612 = vsel %vm833, %v1559, 0
      %v1615 = vsel %vm833, %v1560, 0
      %v1618 = vsel %vm833, %v1561, 0
      %v1621 = vsel %vm833, %v1562, 0
      %1623 = vmatprep.subr.bf16.mxu0 0
      %1624 = vmatpush1.bf16.msra.mxu0 %v1571
      %1625 = vmatprep.subr.bf16.mxu0 0
      %1626 = vmatpush1.bf16.msra.mxu0 %v1572
      %1627 = vmatprep.subr.bf16.mxu0 0
      %1628 = vmatpush1.bf16.msra.mxu0 0
      %1629 = vmatprep.subr.bf16.mxu0 0
      %1630 = vmatpush1.bf16.msra.mxu0 0
      %1631 = vmatprep.subr.bf16.mxu0 0
      %1632 = vmatpush1.bf16.msra.mxu0 0
      %1633 = vmatprep.subr.bf16.mxu0 0
      %1634 = vmatpush1.bf16.msra.mxu0 0
      %1635 = vmatprep.subr.bf16.mxu0 0
      %1636 = vmatpush1.bf16.msra.mxu0 0
      %1637 = vmatprep.subr.bf16.mxu0 0
      %1638 = vmatpush1.bf16.msra.mxu0 0
      %1639 = vmatprep.subr.bf16.mxu0 0
      %1640 = vmatpush1.bf16.msra.mxu0 0
      %1641 = vmatprep.subr.bf16.mxu0 0
      %1642 = vmatpush1.bf16.msra.mxu0 0
      %1643 = vmatprep.subr.bf16.mxu0 0
      %1644 = vmatpush1.bf16.msra.mxu0 0
      %1645 = vmatprep.subr.bf16.mxu0 0
      %1646 = vmatpush1.bf16.msra.mxu0 0
      %1647 = vmatprep.subr.bf16.mxu0 0
      %1648 = vmatpush1.bf16.msra.mxu0 0
      %1649 = vmatprep.subr.bf16.mxu0 0
      %1650 = vmatpush1.bf16.msra.mxu0 0
      %1651 = vmatprep.subr.bf16.mxu0 0
      %1652 = vmatpush1.bf16.msra.mxu0 0
      %1653 = vmatprep.subr.bf16.mxu0 0
      %1654 = vmatpush1.bf16.msra.mxu0 0
      %1655 = vmatprep.mubr.bf16.mxu0 0
      %1656 = vmatmul.mubr.bf16.gmra.mrb[0].mxu0 %v1576
      %v1657 = vpop.f32.mrb[0].mxu0
      %v1658 = vadd.f32 0.0, %v1657
      %v1659 = vpop.f32.mrb[0].mxu0
      %v1660 = vpop.f32.mrb[0].mxu0
      %v1661 = vadd.f32 0.0, %v1660
      %v1662 = vpop.f32.mrb[0].mxu0
      %1663 = vmatprep.mubr.bf16.mxu0 0
      %1664 = vmatmul.mubr.bf16.gmra.mrb[0].mxu0 %v1579
      %v1665 = vpop.f32.mrb[0].mxu0
      %v1666 = vadd.f32 0.0, %v1665
      %v1667 = vpop.f32.mrb[0].mxu0
      %v1668 = vpop.f32.mrb[0].mxu0
      %v1669 = vadd.f32 0.0, %v1668
      %v1670 = vpop.f32.mrb[0].mxu0
      %1671 = vmatprep.mubr.bf16.mxu0 0
      %1672 = vmatmul.mubr.bf16.gmra.mrb[0].mxu0 %v1582
      %v1673 = vpop.f32.mrb[0].mxu0
      %v1674 = vadd.f32 0.0, %v1673
      %v1675 = vpop.f32.mrb[0].mxu0
      %v1676 = vpop.f32.mrb[0].mxu0
      %v1677 = vadd.f32 0.0, %v1676
      %v1678 = vpop.f32.mrb[0].mxu0
      %1679 = vmatprep.mubr.bf16.mxu0 0
      %1680 = vmatmul.mubr.bf16.gmra.mrb[0].mxu0 %v1585
      %v1681 = vpop.f32.mrb[0].mxu0
      %v1682 = vadd.f32 0.0, %v1681
      %v1683 = vpop.f32.mrb[0].mxu0
      %v1684 = vpop.f32.mrb[0].mxu0
      %v1685 = vadd.f32 0.0, %v1684
      %v1686 = vpop.f32.mrb[0].mxu0
      %1687 = vmatprep.mubr.bf16.mxu0 0
      %1688 = vmatmul.mubr.bf16.gmra.mrb[0].mxu0 %v1588
      %v1689 = vpop.f32.mrb[0].mxu0
      %v1690 = vadd.f32 0.0, %v1689
      %v1691 = vpop.f32.mrb[0].mxu0
      %v1692 = vpop.f32.mrb[0].mxu0
      %v1693 = vadd.f32 0.0, %v1692
      %v1694 = vpop.f32.mrb[0].mxu0
      %1695 = vmatprep.mubr.bf16.mxu0 0
      %1696 = vmatmul.mubr.bf16.gmra.mrb[0].mxu0 %v1591
      %v1697 = vpop.f32.mrb[0].mxu0
      %v1698 = vadd.f32 0.0, %v1697
      %v1699 = vpop.f32.mrb[0].mxu0
      %v1700 = vpop.f32.mrb[0].mxu0
      %v1701 = vadd.f32 0.0, %v1700
      %v1702 = vpop.f32.mrb[0].mxu0
      %1703 = vmatprep.mubr.bf16.mxu0 0
      %1704 = vmatmul.mubr.bf16.gmra.mrb[0].mxu0 %v1594
      %v1705 = vpop.f32.mrb[0].mxu0
      %v1706 = vadd.f32 0.0, %v1705
      %v1707 = vpop.f32.mrb[0].mxu0
      %v1708 = vpop.f32.mrb[0].mxu0
      %v1709 = vadd.f32 0.0, %v1708
      %v1710 = vpop.f32.mrb[0].mxu0
      %1711 = vmatprep.mubr.bf16.mxu0 0
      %1712 = vmatmul.mubr.bf16.gmra.mrb[0].mxu0 %v1597
      %v1713 = vpop.f32.mrb[0].mxu0
      %v1714 = vadd.f32 0.0, %v1713
      %v1715 = vpop.f32.mrb[0].mxu0
      %v1716 = vpop.f32.mrb[0].mxu0
      %v1717 = vadd.f32 0.0, %v1716
      %v1718 = vpop.f32.mrb[0].mxu0
      %1719 = vmatprep.mubr.bf16.mxu0 0
      %1720 = vmatmul.mubr.bf16.gmra.mrb[0].mxu0 %v1600
      %v1721 = vpop.f32.mrb[0].mxu0
      %v1722 = vadd.f32 0.0, %v1721
      %v1723 = vpop.f32.mrb[0].mxu0
      %v1724 = vpop.f32.mrb[0].mxu0
      %v1725 = vadd.f32 0.0, %v1724
      %v1726 = vpop.f32.mrb[0].mxu0
      %1727 = vmatprep.mubr.bf16.mxu0 0
      %1728 = vmatmul.mubr.bf16.gmra.mrb[0].mxu0 %v1603
      %v1729 = vpop.f32.mrb[0].mxu0
      %v1730 = vadd.f32 0.0, %v1729
      %v1731 = vpop.f32.mrb[0].mxu0
      %v1732 = vpop.f32.mrb[0].mxu0
      %v1733 = vadd.f32 0.0, %v1732
      %v1734 = vpop.f32.mrb[0].mxu0
      %1735 = vmatprep.mubr.bf16.mxu0 0
      %1736 = vmatmul.mubr.bf16.gmra.mrb[0].mxu0 %v1606
      %v1737 = vpop.f32.mrb[0].mxu0
      %v1738 = vadd.f32 0.0, %v1737
      %v1739 = vpop.f32.mrb[0].mxu0
      %v1740 = vpop.f32.mrb[0].mxu0
      %v1741 = vadd.f32 0.0, %v1740
      %v1742 = vpop.f32.mrb[0].mxu0
      %1743 = vmatprep.mubr.bf16.mxu0 0
      %1744 = vmatmul.mubr.bf16.gmra.mrb[0].mxu0 %v1609
      %v1745 = vpop.f32.mrb[0].mxu0
      %v1746 = vadd.f32 0.0, %v1745
      %v1747 = vpop.f32.mrb[0].mxu0
      %v1748 = vpop.f32.mrb[0].mxu0
      %v1749 = vadd.f32 0.0, %v1748
      %v1750 = vpop.f32.mrb[0].mxu0
      %1751 = vmatprep.mubr.bf16.mxu0 0
      %1752 = vmatmul.mubr.bf16.gmra.mrb[0].mxu0 %v1612
      %v1753 = vpop.f32.mrb[0].mxu0
      %v1754 = vadd.f32 0.0, %v1753
      %v1755 = vpop.f32.mrb[0].mxu0
      %v1756 = vpop.f32.mrb[0].mxu0
      %v1757 = vadd.f32 0.0, %v1756
      %v1758 = vpop.f32.mrb[0].mxu0
      %1759 = vmatprep.mubr.bf16.mxu0 0
      %1760 = vmatmul.mubr.bf16.gmra.mrb[0].mxu0 %v1615
      %v1761 = vpop.f32.mrb[0].mxu0
      %v1762 = vadd.f32 0.0, %v1761
      %v1763 = vpop.f32.mrb[0].mxu0
      %v1764 = vpop.f32.mrb[0].mxu0
      %v1765 = vadd.f32 0.0, %v1764
      %v1766 = vpop.f32.mrb[0].mxu0
      %1767 = vmatprep.mubr.bf16.mxu0 0
      %1768 = vmatmul.mubr.bf16.gmra.mrb[0].mxu0 %v1618
      %v1769 = vpop.f32.mrb[0].mxu0
      %v1770 = vadd.f32 0.0, %v1769
      %v1771 = vpop.f32.mrb[0].mxu0
      %v1772 = vpop.f32.mrb[0].mxu0
      %v1773 = vadd.f32 0.0, %v1772
      %v1774 = vpop.f32.mrb[0].mxu0
      %1775 = vmatprep.mubr.bf16.mxu0 0
      %1776 = vmatmul.mubr.bf16.gmra.mrb[0].mxu0 %v1621
      %v1777 = vpop.f32.mrb[0].mxu0
      %v1778 = vadd.f32 0.0, %v1777
      %v1779 = vpop.f32.mrb[0].mxu0
      %v1780 = vpop.f32.mrb[0].mxu0
      %v1781 = vadd.f32 0.0, %v1780
      %v1782 = vpop.f32.mrb[0].mxu0
      %1783 = vdwg.mxu0
      %v1784 = vadd.f32 %v1043, %v1658
      %v1785 = vadd.f32 %v1044, %v1661
      %v1786 = vadd.f32 %v1045, %v1666
      %v1787 = vadd.f32 %v1046, %v1669
      %v1788 = vadd.f32 %v1047, %v1674
      %v1789 = vadd.f32 %v1048, %v1677
      %v1790 = vadd.f32 %v1049, %v1682
      %v1791 = vadd.f32 %v1050, %v1685
      %v1792 = vadd.f32 %v1051, %v1690
      %v1793 = vadd.f32 %v1052, %v1693
      %v1794 = vadd.f32 %v1053, %v1698
      %v1795 = vadd.f32 %v1054, %v1701
      %v1796 = vadd.f32 %v1055, %v1706
      %v1797 = vadd.f32 %v1056, %v1709
      %v1798 = vadd.f32 %v1057, %v1714
      %v1799 = vadd.f32 %v1058, %v1717
      %v1800 = vadd.f32 %v1059, %v1722
      %v1801 = vadd.f32 %v1060, %v1725
      %v1802 = vadd.f32 %v1061, %v1730
      %v1803 = vadd.f32 %v1062, %v1733
      %v1804 = vadd.f32 %v1063, %v1738
      %v1805 = vadd.f32 %v1064, %v1741
      %v1806 = vadd.f32 %v1065, %v1746
      %v1807 = vadd.f32 %v1066, %v1749
      %v1808 = vadd.f32 %v1067, %v1754
      %v1809 = vadd.f32 %v1068, %v1757
      %v1810 = vadd.f32 %v1069, %v1762
      %v1811 = vadd.f32 %v1070, %v1765
      %v1812 = vadd.f32 %v1071, %v1770
      %v1813 = vadd.f32 %v1072, %v1773
      %v1814 = vadd.f32 %v1073, %v1778
      %v1815 = vadd.f32 %v1074, %v1781
      %v1816 = vld [vmem:[%s704] sm:$0xe]
      %v1817 = vld [vmem:[%s704 + $0xc] sm:$0xe]
      %v1818 = vld [vmem:[%s704 + $0x18] sm:$0xe]
      %v1819 = vld [vmem:[%s704 + $0x24] sm:$0xe]
      %v1820 = vld [vmem:[%s704 + $0x30] sm:$0xe]
      %v1821 = vld [vmem:[%s704 + $0x3c] sm:$0xe]
      %v1822 = vld [vmem:[%s704 + $0x48] sm:$0xe]
      %v1823 = vld [vmem:[%s704 + $0x54] sm:$0xe]
      %v1824 = vld [vmem:[%s704 + $0x60] sm:$0xe]
      %v1825 = vld [vmem:[%s704 + $0x6c] sm:$0xe]
      %v1826 = vld [vmem:[%s704 + $0x78] sm:$0xe]
      %v1827 = vld [vmem:[%s704 + $0x84] sm:$0xe]
      %v1828 = vld [vmem:[%s704 + $0x90] sm:$0xe]
      %v1829 = vld [vmem:[%s704 + $0x9c] sm:$0xe]
      %v1830 = vld [vmem:[%s704 + $0xa8] sm:$0xe]
      %v1831 = vld [vmem:[%s704 + $0xb4] sm:$0xe]
      %vm1880 = vcmask 1042432
      %vm1881 = vcmask 1046532
      %vm1882 = vmor %vm1880, %vm1881
      %v1883 = vrot.slane %v1816, 5
      %v1884 = vrot.slane %v1883, 4
      %v1885 = vrot.slane %v1076, 5
      %v1886 = vsel %vm1882, %v1884, %v1885
      %v1887 = vrot.slane %v1885, 4
      %v1888 = vrot.slane %v1077, 5
      %v1889 = vsel %vm1882, %v1887, %v1888
      %v1890 = vrot.slane %v1817, 5
      %v1891 = vrot.slane %v1890, 4
      %v1892 = vrot.slane %v1079, 5
      %v1893 = vsel %vm1882, %v1891, %v1892
      %v1894 = vrot.slane %v1892, 4
      %v1895 = vrot.slane %v1080, 5
      %v1896 = vsel %vm1882, %v1894, %v1895
      %v1897 = vrot.slane %v1818, 5
      %v1898 = vrot.slane %v1897, 4
      %v1899 = vrot.slane %v1082, 5
      %v1900 = vsel %vm1882, %v1898, %v1899
      %v1901 = vrot.slane %v1899, 4
      %v1902 = vrot.slane %v1083, 5
      %v1903 = vsel %vm1882, %v1901, %v1902
      %v1904 = vrot.slane %v1819, 5
      %v1905 = vrot.slane %v1904, 4
      %v1906 = vrot.slane %v1085, 5
      %v1907 = vsel %vm1882, %v1905, %v1906
      %v1908 = vrot.slane %v1906, 4
      %v1909 = vrot.slane %v1086, 5
      %v1910 = vsel %vm1882, %v1908, %v1909
      %v1911 = vrot.slane %v1820, 5
      %v1912 = vrot.slane %v1911, 4
      %v1913 = vrot.slane %v1088, 5
      %v1914 = vsel %vm1882, %v1912, %v1913
      %v1915 = vrot.slane %v1913, 4
      %v1916 = vrot.slane %v1089, 5
      %v1917 = vsel %vm1882, %v1915, %v1916
      %v1918 = vrot.slane %v1821, 5
      %v1919 = vrot.slane %v1918, 4
      %v1920 = vrot.slane %v1091, 5
      %v1921 = vsel %vm1882, %v1919, %v1920
      %v1922 = vrot.slane %v1920, 4
      %v1923 = vrot.slane %v1092, 5
      %v1924 = vsel %vm1882, %v1922, %v1923
      %v1925 = vrot.slane %v1822, 5
      %v1926 = vrot.slane %v1925, 4
      %v1927 = vrot.slane %v1094, 5
      %v1928 = vsel %vm1882, %v1926, %v1927
      %v1929 = vrot.slane %v1927, 4
      %v1930 = vrot.slane %v1095, 5
      %v1931 = vsel %vm1882, %v1929, %v1930
      %v1932 = vrot.slane %v1823, 5
      %v1933 = vrot.slane %v1932, 4
      %v1934 = vrot.slane %v1097, 5
      %v1935 = vsel %vm1882, %v1933, %v1934
      %v1936 = vrot.slane %v1934, 4
      %v1937 = vrot.slane %v1098, 5
      %v1938 = vsel %vm1882, %v1936, %v1937
      %v1939 = vrot.slane %v1824, 5
      %v1940 = vrot.slane %v1939, 4
      %v1941 = vrot.slane %v1100, 5
      %v1942 = vsel %vm1882, %v1940, %v1941
      %v1943 = vrot.slane %v1941, 4
      %v1944 = vrot.slane %v1101, 5
      %v1945 = vsel %vm1882, %v1943, %v1944
      %v1946 = vrot.slane %v1825, 5
      %v1947 = vrot.slane %v1946, 4
      %v1948 = vrot.slane %v1103, 5
      %v1949 = vsel %vm1882, %v1947, %v1948
      %v1950 = vrot.slane %v1948, 4
      %v1951 = vrot.slane %v1104, 5
      %v1952 = vsel %vm1882, %v1950, %v1951
      %v1953 = vrot.slane %v1826, 5
      %v1954 = vrot.slane %v1953, 4
      %v1955 = vrot.slane %v1106, 5
      %v1956 = vsel %vm1882, %v1954, %v1955
      %v1957 = vrot.slane %v1955, 4
      %v1958 = vrot.slane %v1107, 5
      %v1959 = vsel %vm1882, %v1957, %v1958
      %v1960 = vrot.slane %v1827, 5
      %v1961 = vrot.slane %v1960, 4
      %v1962 = vrot.slane %v1109, 5
      %v1963 = vsel %vm1882, %v1961, %v1962
      %v1964 = vrot.slane %v1962, 4
      %v1965 = vrot.slane %v1110, 5
      %v1966 = vsel %vm1882, %v1964, %v1965
      %v1967 = vrot.slane %v1828, 5
      %v1968 = vrot.slane %v1967, 4
      %v1969 = vrot.slane %v1112, 5
      %v1970 = vsel %vm1882, %v1968, %v1969
      %v1971 = vrot.slane %v1969, 4
      %v1972 = vrot.slane %v1113, 5
      %v1973 = vsel %vm1882, %v1971, %v1972
      %v1974 = vrot.slane %v1829, 5
      %v1975 = vrot.slane %v1974, 4
      %v1976 = vrot.slane %v1115, 5
      %v1977 = vsel %vm1882, %v1975, %v1976
      %v1978 = vrot.slane %v1976, 4
      %v1979 = vrot.slane %v1116, 5
      %v1980 = vsel %vm1882, %v1978, %v1979
      %v1981 = vrot.slane %v1830, 5
      %v1982 = vrot.slane %v1981, 4
      %v1983 = vrot.slane %v1118, 5
      %v1984 = vsel %vm1882, %v1982, %v1983
      %v1985 = vrot.slane %v1983, 4
      %v1986 = vrot.slane %v1119, 5
      %v1987 = vsel %vm1882, %v1985, %v1986
      %v1988 = vrot.slane %v1831, 5
      %v1989 = vrot.slane %v1988, 4
      %v1990 = vrot.slane %v1121, 5
      %v1991 = vsel %vm1882, %v1989, %v1990
      %v1992 = vrot.slane %v1990, 4
      %v1993 = vrot.slane %v1122, 5
      %v1994 = vsel %vm1882, %v1992, %v1993
      %s1995 = scalar_lea.vmem %s4, 32
      %v1996 = vld [vmem:[%s1995] sm:$0xf]
      %v1997 = vld [vmem:[%s1995 + $0x4] sm:$0xf]
      %v1998 = vld [vmem:[%s1995 + $0x8] sm:$0xf]
      %v1999 = vld [vmem:[%s1995 + $0xc] sm:$0xf]
      %v2000 = vunpack.c.l.b16 %v1886
      %v2001 = vunpack.c.l.b16 %v1889
      %v2002 = vunpack.c.l.b16 %v1893
      %v2003 = vunpack.c.l.b16 %v1896
      %v2004 = vunpack.c.l.b16 %v1900
      %v2005 = vunpack.c.l.b16 %v1903
      %v2006 = vunpack.c.l.b16 %v1907
      %v2007 = vunpack.c.l.b16 %v1910
      %v2008 = vunpack.c.l.b16 %v1914
      %v2009 = vunpack.c.l.b16 %v1917
      %v2010 = vunpack.c.l.b16 %v1921
      %v2011 = vunpack.c.l.b16 %v1924
      %v2012 = vunpack.c.l.b16 %v1928
      %v2013 = vunpack.c.l.b16 %v1931
      %v2014 = vunpack.c.l.b16 %v1935
      %v2015 = vunpack.c.l.b16 %v1938
      %v2016 = vunpack.c.l.b16 %v1942
      %v2017 = vunpack.c.l.b16 %v1945
      %v2018 = vunpack.c.l.b16 %v1949
      %v2019 = vunpack.c.l.b16 %v1952
      %v2020 = vunpack.c.l.b16 %v1956
      %v2021 = vunpack.c.l.b16 %v1959
      %v2022 = vunpack.c.l.b16 %v1963
      %v2023 = vunpack.c.l.b16 %v1966
      %v2024 = vunpack.c.l.b16 %v1970
      %v2025 = vunpack.c.l.b16 %v1973
      %v2026 = vunpack.c.l.b16 %v1977
      %v2027 = vunpack.c.l.b16 %v1980
      %v2028 = vunpack.c.l.b16 %v1984
      %v2029 = vunpack.c.l.b16 %v1987
      %v2030 = vunpack.c.l.b16 %v1991
      %v2031 = vunpack.c.l.b16 %v1994
      %v2032 = vpack.c.b16 %v2001, %v2000
      %v2033 = vpack.c.b16 %v2003, %v2002
      %v2034 = vpack.c.b16 %v2005, %v2004
      %v2035 = vpack.c.b16 %v2007, %v2006
      %v2036 = vpack.c.b16 %v2009, %v2008
      %v2037 = vpack.c.b16 %v2011, %v2010
      %v2038 = vpack.c.b16 %v2013, %v2012
      %v2039 = vpack.c.b16 %v2015, %v2014
      %v2040 = vpack.c.b16 %v2017, %v2016
      %v2041 = vpack.c.b16 %v2019, %v2018
      %v2042 = vpack.c.b16 %v2021, %v2020
      %v2043 = vpack.c.b16 %v2023, %v2022
      %v2044 = vpack.c.b16 %v2025, %v2024
      %v2045 = vpack.c.b16 %v2027, %v2026
      %v2046 = vpack.c.b16 %v2029, %v2028
      %v2047 = vpack.c.b16 %v2031, %v2030
      %v2052 = vunpack.c.l.b16 %v1996
      %v2053 = vunpack.c.l.b16 %v1997
      %v2054 = vunpack.c.l.b16 %v1998
      %v2055 = vunpack.c.l.b16 %v1999
      %v2056 = vpack.c.b16 %v2053, %v2052
      %v2057 = vpack.c.b16 %v2055, %v2054
      %v2061 = vsel %vm833, %v2032, 0
      %v2064 = vsel %vm833, %v2033, 0
      %v2067 = vsel %vm833, %v2034, 0
      %v2070 = vsel %vm833, %v2035, 0
      %v2073 = vsel %vm833, %v2036, 0
      %v2076 = vsel %vm833, %v2037, 0
      %v2079 = vsel %vm833, %v2038, 0
      %v2082 = vsel %vm833, %v2039, 0
      %v2085 = vsel %vm833, %v2040, 0
      %v2088 = vsel %vm833, %v2041, 0
      %v2091 = vsel %vm833, %v2042, 0
      %v2094 = vsel %vm833, %v2043, 0
      %v2097 = vsel %vm833, %v2044, 0
      %v2100 = vsel %vm833, %v2045, 0
      %v2103 = vsel %vm833, %v2046, 0
      %v2106 = vsel %vm833, %v2047, 0
      %2108 = vmatprep.subr.bf16.mxu0 0
      %2109 = vmatpush1.bf16.msra.mxu0 %v2056
      %2110 = vmatprep.subr.bf16.mxu0 0
      %2111 = vmatpush1.bf16.msra.mxu0 %v2057
      %2112 = vmatprep.subr.bf16.mxu0 0
      %2113 = vmatpush1.bf16.msra.mxu0 0
      %2114 = vmatprep.subr.bf16.mxu0 0
      %2115 = vmatpush1.bf16.msra.mxu0 0
      %2116 = vmatprep.subr.bf16.mxu0 0
      %2117 = vmatpush1.bf16.msra.mxu0 0
      %2118 = vmatprep.subr.bf16.mxu0 0
      %2119 = vmatpush1.bf16.msra.mxu0 0
      %2120 = vmatprep.subr.bf16.mxu0 0
      %2121 = vmatpush1.bf16.msra.mxu0 0
      %2122 = vmatprep.subr.bf16.mxu0 0
      %2123 = vmatpush1.bf16.msra.mxu0 0
      %2124 = vmatprep.subr.bf16.mxu0 0
      %2125 = vmatpush1.bf16.msra.mxu0 0
      %2126 = vmatprep.subr.bf16.mxu0 0
      %2127 = vmatpush1.bf16.msra.mxu0 0
      %2128 = vmatprep.subr.bf16.mxu0 0
      %2129 = vmatpush1.bf16.msra.mxu0 0
      %2130 = vmatprep.subr.bf16.mxu0 0
      %2131 = vmatpush1.bf16.msra.mxu0 0
      %2132 = vmatprep.subr.bf16.mxu0 0
      %2133 = vmatpush1.bf16.msra.mxu0 0
      %2134 = vmatprep.subr.bf16.mxu0 0
      %2135 = vmatpush1.bf16.msra.mxu0 0
      %2136 = vmatprep.subr.bf16.mxu0 0
      %2137 = vmatpush1.bf16.msra.mxu0 0
      %2138 = vmatprep.subr.bf16.mxu0 0
      %2139 = vmatpush1.bf16.msra.mxu0 0
      %2140 = vmatprep.mubr.bf16.mxu0 0
      %2141 = vmatmul.mubr.bf16.gmra.mrb[0].mxu0 %v2061
      %v2142 = vpop.f32.mrb[0].mxu0
      %v2143 = vadd.f32 0.0, %v2142
      %v2144 = vpop.f32.mrb[0].mxu0
      %v2145 = vpop.f32.mrb[0].mxu0
      %v2146 = vadd.f32 0.0, %v2145
      %v2147 = vpop.f32.mrb[0].mxu0
      %2148 = vmatprep.mubr.bf16.mxu0 0
      %2149 = vmatmul.mubr.bf16.gmra.mrb[0].mxu0 %v2064
      %v2150 = vpop.f32.mrb[0].mxu0
      %v2151 = vadd.f32 0.0, %v2150
      %v2152 = vpop.f32.mrb[0].mxu0
      %v2153 = vpop.f32.mrb[0].mxu0
      %v2154 = vadd.f32 0.0, %v2153
      %v2155 = vpop.f32.mrb[0].mxu0
      %2156 = vmatprep.mubr.bf16.mxu0 0
      %2157 = vmatmul.mubr.bf16.gmra.mrb[0].mxu0 %v2067
      %v2158 = vpop.f32.mrb[0].mxu0
      %v2159 = vadd.f32 0.0, %v2158
      %v2160 = vpop.f32.mrb[0].mxu0
      %v2161 = vpop.f32.mrb[0].mxu0
      %v2162 = vadd.f32 0.0, %v2161
      %v2163 = vpop.f32.mrb[0].mxu0
      %2164 = vmatprep.mubr.bf16.mxu0 0
      %2165 = vmatmul.mubr.bf16.gmra.mrb[0].mxu0 %v2070
      %v2166 = vpop.f32.mrb[0].mxu0
      %v2167 = vadd.f32 0.0, %v2166
      %v2168 = vpop.f32.mrb[0].mxu0
      %v2169 = vpop.f32.mrb[0].mxu0
      %v2170 = vadd.f32 0.0, %v2169
      %v2171 = vpop.f32.mrb[0].mxu0
      %2172 = vmatprep.mubr.bf16.mxu0 0
      %2173 = vmatmul.mubr.bf16.gmra.mrb[0].mxu0 %v2073
      %v2174 = vpop.f32.mrb[0].mxu0
      %v2175 = vadd.f32 0.0, %v2174
      %v2176 = vpop.f32.mrb[0].mxu0
      %v2177 = vpop.f32.mrb[0].mxu0
      %v2178 = vadd.f32 0.0, %v2177
      %v2179 = vpop.f32.mrb[0].mxu0
      %2180 = vmatprep.mubr.bf16.mxu0 0
      %2181 = vmatmul.mubr.bf16.gmra.mrb[0].mxu0 %v2076
      %v2182 = vpop.f32.mrb[0].mxu0
      %v2183 = vadd.f32 0.0, %v2182
      %v2184 = vpop.f32.mrb[0].mxu0
      %v2185 = vpop.f32.mrb[0].mxu0
      %v2186 = vadd.f32 0.0, %v2185
      %v2187 = vpop.f32.mrb[0].mxu0
      %2188 = vmatprep.mubr.bf16.mxu0 0
      %2189 = vmatmul.mubr.bf16.gmra.mrb[0].mxu0 %v2079
      %v2190 = vpop.f32.mrb[0].mxu0
      %v2191 = vadd.f32 0.0, %v2190
      %v2192 = vpop.f32.mrb[0].mxu0
      %v2193 = vpop.f32.mrb[0].mxu0
      %v2194 = vadd.f32 0.0, %v2193
      %v2195 = vpop.f32.mrb[0].mxu0
      %2196 = vmatprep.mubr.bf16.mxu0 0
      %2197 = vmatmul.mubr.bf16.gmra.mrb[0].mxu0 %v2082
      %v2198 = vpop.f32.mrb[0].mxu0
      %v2199 = vadd.f32 0.0, %v2198
      %v2200 = vpop.f32.mrb[0].mxu0
      %v2201 = vpop.f32.mrb[0].mxu0
      %v2202 = vadd.f32 0.0, %v2201
      %v2203 = vpop.f32.mrb[0].mxu0
      %2204 = vmatprep.mubr.bf16.mxu0 0
      %2205 = vmatmul.mubr.bf16.gmra.mrb[0].mxu0 %v2085
      %v2206 = vpop.f32.mrb[0].mxu0
      %v2207 = vadd.f32 0.0, %v2206
      %v2208 = vpop.f32.mrb[0].mxu0
      %v2209 = vpop.f32.mrb[0].mxu0
      %v2210 = vadd.f32 0.0, %v2209
      %v2211 = vpop.f32.mrb[0].mxu0
      %2212 = vmatprep.mubr.bf16.mxu0 0
      %2213 = vmatmul.mubr.bf16.gmra.mrb[0].mxu0 %v2088
      %v2214 = vpop.f32.mrb[0].mxu0
      %v2215 = vadd.f32 0.0, %v2214
      %v2216 = vpop.f32.mrb[0].mxu0
      %v2217 = vpop.f32.mrb[0].mxu0
      %v2218 = vadd.f32 0.0, %v2217
      %v2219 = vpop.f32.mrb[0].mxu0
      %2220 = vmatprep.mubr.bf16.mxu0 0
      %2221 = vmatmul.mubr.bf16.gmra.mrb[0].mxu0 %v2091
      %v2222 = vpop.f32.mrb[0].mxu0
      %v2223 = vadd.f32 0.0, %v2222
      %v2224 = vpop.f32.mrb[0].mxu0
      %v2225 = vpop.f32.mrb[0].mxu0
      %v2226 = vadd.f32 0.0, %v2225
      %v2227 = vpop.f32.mrb[0].mxu0
      %2228 = vmatprep.mubr.bf16.mxu0 0
      %2229 = vmatmul.mubr.bf16.gmra.mrb[0].mxu0 %v2094
      %v2230 = vpop.f32.mrb[0].mxu0
      %v2231 = vadd.f32 0.0, %v2230
      %v2232 = vpop.f32.mrb[0].mxu0
      %v2233 = vpop.f32.mrb[0].mxu0
      %v2234 = vadd.f32 0.0, %v2233
      %v2235 = vpop.f32.mrb[0].mxu0
      %2236 = vmatprep.mubr.bf16.mxu0 0
      %2237 = vmatmul.mubr.bf16.gmra.mrb[0].mxu0 %v2097
      %v2238 = vpop.f32.mrb[0].mxu0
      %v2239 = vadd.f32 0.0, %v2238
      %v2240 = vpop.f32.mrb[0].mxu0
      %v2241 = vpop.f32.mrb[0].mxu0
      %v2242 = vadd.f32 0.0, %v2241
      %v2243 = vpop.f32.mrb[0].mxu0
      %2244 = vmatprep.mubr.bf16.mxu0 0
      %2245 = vmatmul.mubr.bf16.gmra.mrb[0].mxu0 %v2100
      %v2246 = vpop.f32.mrb[0].mxu0
      %v2247 = vadd.f32 0.0, %v2246
      %v2248 = vpop.f32.mrb[0].mxu0
      %v2249 = vpop.f32.mrb[0].mxu0
      %v2250 = vadd.f32 0.0, %v2249
      %v2251 = vpop.f32.mrb[0].mxu0
      %2252 = vmatprep.mubr.bf16.mxu0 0
      %2253 = vmatmul.mubr.bf16.gmra.mrb[0].mxu0 %v2103
      %v2254 = vpop.f32.mrb[0].mxu0
      %v2255 = vadd.f32 0.0, %v2254
      %v2256 = vpop.f32.mrb[0].mxu0
      %v2257 = vpop.f32.mrb[0].mxu0
      %v2258 = vadd.f32 0.0, %v2257
      %v2259 = vpop.f32.mrb[0].mxu0
      %2260 = vmatprep.mubr.bf16.mxu0 0
      %2261 = vmatmul.mubr.bf16.gmra.mrb[0].mxu0 %v2106
      %v2262 = vpop.f32.mrb[0].mxu0
      %v2263 = vadd.f32 0.0, %v2262
      %v2264 = vpop.f32.mrb[0].mxu0
      %v2265 = vpop.f32.mrb[0].mxu0
      %v2266 = vadd.f32 0.0, %v2265
      %v2267 = vpop.f32.mrb[0].mxu0
      %2268 = vdwg.mxu0
      %v2269 = vadd.f32 %v1784, %v2143
      %v2270 = vadd.f32 %v1785, %v2146
      %v2271 = vadd.f32 %v1786, %v2151
      %v2272 = vadd.f32 %v1787, %v2154
      %v2273 = vadd.f32 %v1788, %v2159
      %v2274 = vadd.f32 %v1789, %v2162
      %v2275 = vadd.f32 %v1790, %v2167
      %v2276 = vadd.f32 %v1791, %v2170
      %v2277 = vadd.f32 %v1792, %v2175
      %v2278 = vadd.f32 %v1793, %v2178
      %v2279 = vadd.f32 %v1794, %v2183
      %v2280 = vadd.f32 %v1795, %v2186
      %v2281 = vadd.f32 %v1796, %v2191
      %v2282 = vadd.f32 %v1797, %v2194
      %v2283 = vadd.f32 %v1798, %v2199
      %v2284 = vadd.f32 %v1799, %v2202
      %v2285 = vadd.f32 %v1800, %v2207
      %v2286 = vadd.f32 %v1801, %v2210
      %v2287 = vadd.f32 %v1802, %v2215
      %v2288 = vadd.f32 %v1803, %v2218
      %v2289 = vadd.f32 %v1804, %v2223
      %v2290 = vadd.f32 %v1805, %v2226
      %v2291 = vadd.f32 %v1806, %v2231
      %v2292 = vadd.f32 %v1807, %v2234
      %v2293 = vadd.f32 %v1808, %v2239
      %v2294 = vadd.f32 %v1809, %v2242
      %v2295 = vadd.f32 %v1810, %v2247
      %v2296 = vadd.f32 %v1811, %v2250
      %v2297 = vadd.f32 %v1812, %v2255
      %v2298 = vadd.f32 %v1813, %v2258
      %v2299 = vadd.f32 %v1814, %v2263
      %v2300 = vadd.f32 %v1815, %v2266
      %s2301 = sadd.s32 %s348, 1
      %s2302 = smul.u32 %s2301, 3
      %s2303 = smul.addr %s2302, 4
      %s2304 = scalar_lea.vmem %s326, %s2303
      %v2305 = vld [vmem:[%s2304] sm:$0xf]
      %v2306 = vld [vmem:[%s2304 + $0x4] sm:$0xf]
      %v2307 = vld [vmem:[%s2304 + $0xc] sm:$0xf]
      %v2308 = vld [vmem:[%s2304 + $0x10] sm:$0xf]
      %v2309 = vld [vmem:[%s2304 + $0x18] sm:$0xf]
      %v2310 = vld [vmem:[%s2304 + $0x1c] sm:$0xf]
      %v2311 = vld [vmem:[%s2304 + $0x24] sm:$0xf]
      %v2312 = vld [vmem:[%s2304 + $0x28] sm:$0xf]
      %v2313 = vld [vmem:[%s2304 + $0x30] sm:$0xf]
      %v2314 = vld [vmem:[%s2304 + $0x34] sm:$0xf]
      %v2315 = vld [vmem:[%s2304 + $0x3c] sm:$0xf]
      %v2316 = vld [vmem:[%s2304 + $0x40] sm:$0xf]
      %v2317 = vld [vmem:[%s2304 + $0x48] sm:$0xf]
      %v2318 = vld [vmem:[%s2304 + $0x4c] sm:$0xf]
      %v2319 = vld [vmem:[%s2304 + $0x54] sm:$0xf]
      %v2320 = vld [vmem:[%s2304 + $0x58] sm:$0xf]
      %v2321 = vld [vmem:[%s2304 + $0x60] sm:$0xf]
      %v2322 = vld [vmem:[%s2304 + $0x64] sm:$0xf]
      %v2323 = vld [vmem:[%s2304 + $0x6c] sm:$0xf]
      %v2324 = vld [vmem:[%s2304 + $0x70] sm:$0xf]
      %v2325 = vld [vmem:[%s2304 + $0x78] sm:$0xf]
      %v2326 = vld [vmem:[%s2304 + $0x7c] sm:$0xf]
      %v2327 = vld [vmem:[%s2304 + $0x84] sm:$0xf]
      %v2328 = vld [vmem:[%s2304 + $0x88] sm:$0xf]
      %v2329 = vld [vmem:[%s2304 + $0x90] sm:$0xf]
      %v2330 = vld [vmem:[%s2304 + $0x94] sm:$0xf]
      %v2331 = vld [vmem:[%s2304 + $0x9c] sm:$0xf]
      %v2332 = vld [vmem:[%s2304 + $0xa0] sm:$0xf]
      %v2333 = vld [vmem:[%s2304 + $0xa8] sm:$0xf]
      %v2334 = vld [vmem:[%s2304 + $0xac] sm:$0xf]
      %v2335 = vld [vmem:[%s2304 + $0xb4] sm:$0xf]
      %v2336 = vld [vmem:[%s2304 + $0xb8] sm:$0xf]
      %s2337 = scalar_lea.vmem %s4, 48
      %v2338 = vld [vmem:[%s2337] sm:$0xf]
      %v2339 = vld [vmem:[%s2337 + $0x4] sm:$0xf]
      %v2340 = vld [vmem:[%s2337 + $0x8] sm:$0xf]
      %v2341 = vld [vmem:[%s2337 + $0xc] sm:$0xf]
      %v2374 = vunpack.c.l.b16 %v2305
      %v2375 = vunpack.c.l.b16 %v2306
      %v2376 = vunpack.c.l.b16 %v2307
      %v2377 = vunpack.c.l.b16 %v2308
      %v2378 = vunpack.c.l.b16 %v2309
      %v2379 = vunpack.c.l.b16 %v2310
      %v2380 = vunpack.c.l.b16 %v2311
      %v2381 = vunpack.c.l.b16 %v2312
      %v2382 = vunpack.c.l.b16 %v2313
      %v2383 = vunpack.c.l.b16 %v2314
      %v2384 = vunpack.c.l.b16 %v2315
      %v2385 = vunpack.c.l.b16 %v2316
      %v2386 = vunpack.c.l.b16 %v2317
      %v2387 = vunpack.c.l.b16 %v2318
      %v2388 = vunpack.c.l.b16 %v2319
      %v2389 = vunpack.c.l.b16 %v2320
      %v2390 = vunpack.c.l.b16 %v2321
      %v2391 = vunpack.c.l.b16 %v2322
      %v2392 = vunpack.c.l.b16 %v2323
      %v2393 = vunpack.c.l.b16 %v2324
      %v2394 = vunpack.c.l.b16 %v2325
      %v2395 = vunpack.c.l.b16 %v2326
      %v2396 = vunpack.c.l.b16 %v2327
      %v2397 = vunpack.c.l.b16 %v2328
      %v2398 = vunpack.c.l.b16 %v2329
      %v2399 = vunpack.c.l.b16 %v2330
      %v2400 = vunpack.c.l.b16 %v2331
      %v2401 = vunpack.c.l.b16 %v2332
      %v2402 = vunpack.c.l.b16 %v2333
      %v2403 = vunpack.c.l.b16 %v2334
      %v2404 = vunpack.c.l.b16 %v2335
      %v2405 = vunpack.c.l.b16 %v2336
      %v2406 = vpack.c.b16 %v2375, %v2374
      %v2407 = vpack.c.b16 %v2377, %v2376
      %v2408 = vpack.c.b16 %v2379, %v2378
      %v2409 = vpack.c.b16 %v2381, %v2380
      %v2410 = vpack.c.b16 %v2383, %v2382
      %v2411 = vpack.c.b16 %v2385, %v2384
      %v2412 = vpack.c.b16 %v2387, %v2386
      %v2413 = vpack.c.b16 %v2389, %v2388
      %v2414 = vpack.c.b16 %v2391, %v2390
      %v2415 = vpack.c.b16 %v2393, %v2392
      %v2416 = vpack.c.b16 %v2395, %v2394
      %v2417 = vpack.c.b16 %v2397, %v2396
      %v2418 = vpack.c.b16 %v2399, %v2398
      %v2419 = vpack.c.b16 %v2401, %v2400
      %v2420 = vpack.c.b16 %v2403, %v2402
      %v2421 = vpack.c.b16 %v2405, %v2404
      %v2426 = vunpack.c.l.b16 %v2338
      %v2427 = vunpack.c.l.b16 %v2339
      %v2428 = vunpack.c.l.b16 %v2340
      %v2429 = vunpack.c.l.b16 %v2341
      %v2430 = vpack.c.b16 %v2427, %v2426
      %v2431 = vpack.c.b16 %v2429, %v2428
      %v2435 = vsel %vm833, %v2406, 0
      %v2438 = vsel %vm833, %v2407, 0
      %v2441 = vsel %vm833, %v2408, 0
      %v2444 = vsel %vm833, %v2409, 0
      %v2447 = vsel %vm833, %v2410, 0
      %v2450 = vsel %vm833, %v2411, 0
      %v2453 = vsel %vm833, %v2412, 0
      %v2456 = vsel %vm833, %v2413, 0
      %v2459 = vsel %vm833, %v2414, 0
      %v2462 = vsel %vm833, %v2415, 0
      %v2465 = vsel %vm833, %v2416, 0
      %v2468 = vsel %vm833, %v2417, 0
      %v2471 = vsel %vm833, %v2418, 0
      %v2474 = vsel %vm833, %v2419, 0
      %v2477 = vsel %vm833, %v2420, 0
      %v2480 = vsel %vm833, %v2421, 0
      %2482 = vmatprep.subr.bf16.mxu0 0
      %2483 = vmatpush1.bf16.msra.mxu0 %v2430
      %2484 = vmatprep.subr.bf16.mxu0 0
      %2485 = vmatpush1.bf16.msra.mxu0 %v2431
      %2486 = vmatprep.subr.bf16.mxu0 0
      %2487 = vmatpush1.bf16.msra.mxu0 0
      %2488 = vmatprep.subr.bf16.mxu0 0
      %2489 = vmatpush1.bf16.msra.mxu0 0
      %2490 = vmatprep.subr.bf16.mxu0 0
      %2491 = vmatpush1.bf16.msra.mxu0 0
      %2492 = vmatprep.subr.bf16.mxu0 0
      %2493 = vmatpush1.bf16.msra.mxu0 0
      %2494 = vmatprep.subr.bf16.mxu0 0
      %2495 = vmatpush1.bf16.msra.mxu0 0
      %2496 = vmatprep.subr.bf16.mxu0 0
      %2497 = vmatpush1.bf16.msra.mxu0 0
      %2498 = vmatprep.subr.bf16.mxu0 0
      %2499 = vmatpush1.bf16.msra.mxu0 0
      %2500 = vmatprep.subr.bf16.mxu0 0
      %2501 = vmatpush1.bf16.msra.mxu0 0
      %2502 = vmatprep.subr.bf16.mxu0 0
      %2503 = vmatpush1.bf16.msra.mxu0 0
      %2504 = vmatprep.subr.bf16.mxu0 0
      %2505 = vmatpush1.bf16.msra.mxu0 0
      %2506 = vmatprep.subr.bf16.mxu0 0
      %2507 = vmatpush1.bf16.msra.mxu0 0
      %2508 = vmatprep.subr.bf16.mxu0 0
      %2509 = vmatpush1.bf16.msra.mxu0 0
      %2510 = vmatprep.subr.bf16.mxu0 0
      %2511 = vmatpush1.bf16.msra.mxu0 0
      %2512 = vmatprep.subr.bf16.mxu0 0
      %2513 = vmatpush1.bf16.msra.mxu0 0
      %2514 = vmatprep.mubr.bf16.mxu0 0
      %2515 = vmatmul.mubr.bf16.gmra.mrb[0].mxu0 %v2435
      %v2516 = vpop.f32.mrb[0].mxu0
      %v2517 = vadd.f32 0.0, %v2516
      %v2518 = vpop.f32.mrb[0].mxu0
      %v2519 = vpop.f32.mrb[0].mxu0
      %v2520 = vadd.f32 0.0, %v2519
      %v2521 = vpop.f32.mrb[0].mxu0
      %2522 = vmatprep.mubr.bf16.mxu0 0
      %2523 = vmatmul.mubr.bf16.gmra.mrb[0].mxu0 %v2438
      %v2524 = vpop.f32.mrb[0].mxu0
      %v2525 = vadd.f32 0.0, %v2524
      %v2526 = vpop.f32.mrb[0].mxu0
      %v2527 = vpop.f32.mrb[0].mxu0
      %v2528 = vadd.f32 0.0, %v2527
      %v2529 = vpop.f32.mrb[0].mxu0
      %2530 = vmatprep.mubr.bf16.mxu0 0
      %2531 = vmatmul.mubr.bf16.gmra.mrb[0].mxu0 %v2441
      %v2532 = vpop.f32.mrb[0].mxu0
      %v2533 = vadd.f32 0.0, %v2532
      %v2534 = vpop.f32.mrb[0].mxu0
      %v2535 = vpop.f32.mrb[0].mxu0
      %v2536 = vadd.f32 0.0, %v2535
      %v2537 = vpop.f32.mrb[0].mxu0
      %2538 = vmatprep.mubr.bf16.mxu0 0
      %2539 = vmatmul.mubr.bf16.gmra.mrb[0].mxu0 %v2444
      %v2540 = vpop.f32.mrb[0].mxu0
      %v2541 = vadd.f32 0.0, %v2540
      %v2542 = vpop.f32.mrb[0].mxu0
      %v2543 = vpop.f32.mrb[0].mxu0
      %v2544 = vadd.f32 0.0, %v2543
      %v2545 = vpop.f32.mrb[0].mxu0
      %2546 = vmatprep.mubr.bf16.mxu0 0
      %2547 = vmatmul.mubr.bf16.gmra.mrb[0].mxu0 %v2447
      %v2548 = vpop.f32.mrb[0].mxu0
      %v2549 = vadd.f32 0.0, %v2548
      %v2550 = vpop.f32.mrb[0].mxu0
      %v2551 = vpop.f32.mrb[0].mxu0
      %v2552 = vadd.f32 0.0, %v2551
      %v2553 = vpop.f32.mrb[0].mxu0
      %2554 = vmatprep.mubr.bf16.mxu0 0
      %2555 = vmatmul.mubr.bf16.gmra.mrb[0].mxu0 %v2450
      %v2556 = vpop.f32.mrb[0].mxu0
      %v2557 = vadd.f32 0.0, %v2556
      %v2558 = vpop.f32.mrb[0].mxu0
      %v2559 = vpop.f32.mrb[0].mxu0
      %v2560 = vadd.f32 0.0, %v2559
      %v2561 = vpop.f32.mrb[0].mxu0
      %2562 = vmatprep.mubr.bf16.mxu0 0
      %2563 = vmatmul.mubr.bf16.gmra.mrb[0].mxu0 %v2453
      %v2564 = vpop.f32.mrb[0].mxu0
      %v2565 = vadd.f32 0.0, %v2564
      %v2566 = vpop.f32.mrb[0].mxu0
      %v2567 = vpop.f32.mrb[0].mxu0
      %v2568 = vadd.f32 0.0, %v2567
      %v2569 = vpop.f32.mrb[0].mxu0
      %2570 = vmatprep.mubr.bf16.mxu0 0
      %2571 = vmatmul.mubr.bf16.gmra.mrb[0].mxu0 %v2456
      %v2572 = vpop.f32.mrb[0].mxu0
      %v2573 = vadd.f32 0.0, %v2572
      %v2574 = vpop.f32.mrb[0].mxu0
      %v2575 = vpop.f32.mrb[0].mxu0
      %v2576 = vadd.f32 0.0, %v2575
      %v2577 = vpop.f32.mrb[0].mxu0
      %2578 = vmatprep.mubr.bf16.mxu0 0
      %2579 = vmatmul.mubr.bf16.gmra.mrb[0].mxu0 %v2459
      %v2580 = vpop.f32.mrb[0].mxu0
      %v2581 = vadd.f32 0.0, %v2580
      %v2582 = vpop.f32.mrb[0].mxu0
      %v2583 = vpop.f32.mrb[0].mxu0
      %v2584 = vadd.f32 0.0, %v2583
      %v2585 = vpop.f32.mrb[0].mxu0
      %2586 = vmatprep.mubr.bf16.mxu0 0
      %2587 = vmatmul.mubr.bf16.gmra.mrb[0].mxu0 %v2462
      %v2588 = vpop.f32.mrb[0].mxu0
      %v2589 = vadd.f32 0.0, %v2588
      %v2590 = vpop.f32.mrb[0].mxu0
      %v2591 = vpop.f32.mrb[0].mxu0
      %v2592 = vadd.f32 0.0, %v2591
      %v2593 = vpop.f32.mrb[0].mxu0
      %2594 = vmatprep.mubr.bf16.mxu0 0
      %2595 = vmatmul.mubr.bf16.gmra.mrb[0].mxu0 %v2465
      %v2596 = vpop.f32.mrb[0].mxu0
      %v2597 = vadd.f32 0.0, %v2596
      %v2598 = vpop.f32.mrb[0].mxu0
      %v2599 = vpop.f32.mrb[0].mxu0
      %v2600 = vadd.f32 0.0, %v2599
      %v2601 = vpop.f32.mrb[0].mxu0
      %2602 = vmatprep.mubr.bf16.mxu0 0
      %2603 = vmatmul.mubr.bf16.gmra.mrb[0].mxu0 %v2468
      %v2604 = vpop.f32.mrb[0].mxu0
      %v2605 = vadd.f32 0.0, %v2604
      %v2606 = vpop.f32.mrb[0].mxu0
      %v2607 = vpop.f32.mrb[0].mxu0
      %v2608 = vadd.f32 0.0, %v2607
      %v2609 = vpop.f32.mrb[0].mxu0
      %2610 = vmatprep.mubr.bf16.mxu0 0
      %2611 = vmatmul.mubr.bf16.gmra.mrb[0].mxu0 %v2471
      %v2612 = vpop.f32.mrb[0].mxu0
      %v2613 = vadd.f32 0.0, %v2612
      %v2614 = vpop.f32.mrb[0].mxu0
      %v2615 = vpop.f32.mrb[0].mxu0
      %v2616 = vadd.f32 0.0, %v2615
      %v2617 = vpop.f32.mrb[0].mxu0
      %2618 = vmatprep.mubr.bf16.mxu0 0
      %2619 = vmatmul.mubr.bf16.gmra.mrb[0].mxu0 %v2474
      %v2620 = vpop.f32.mrb[0].mxu0
      %v2621 = vadd.f32 0.0, %v2620
      %v2622 = vpop.f32.mrb[0].mxu0
      %v2623 = vpop.f32.mrb[0].mxu0
      %v2624 = vadd.f32 0.0, %v2623
      %v2625 = vpop.f32.mrb[0].mxu0
      %2626 = vmatprep.mubr.bf16.mxu0 0
      %2627 = vmatmul.mubr.bf16.gmra.mrb[0].mxu0 %v2477
      %v2628 = vpop.f32.mrb[0].mxu0
      %v2629 = vadd.f32 0.0, %v2628
      %v2630 = vpop.f32.mrb[0].mxu0
      %v2631 = vpop.f32.mrb[0].mxu0
      %v2632 = vadd.f32 0.0, %v2631
      %v2633 = vpop.f32.mrb[0].mxu0
      %2634 = vmatprep.mubr.bf16.mxu0 0
      %2635 = vmatmul.mubr.bf16.gmra.mrb[0].mxu0 %v2480
      %v2636 = vpop.f32.mrb[0].mxu0
      %v2637 = vadd.f32 0.0, %v2636
      %v2638 = vpop.f32.mrb[0].mxu0
      %v2639 = vpop.f32.mrb[0].mxu0
      %v2640 = vadd.f32 0.0, %v2639
      %v2641 = vpop.f32.mrb[0].mxu0
      %2642 = vdwg.mxu0
      %v2643 = vadd.f32 %v2269, %v2517
      %v2644 = vadd.f32 %v2270, %v2520
      %v2645 = vadd.f32 %v2271, %v2525
      %v2646 = vadd.f32 %v2272, %v2528
      %v2647 = vadd.f32 %v2273, %v2533
      %v2648 = vadd.f32 %v2274, %v2536
      %v2649 = vadd.f32 %v2275, %v2541
      %v2650 = vadd.f32 %v2276, %v2544
      %v2651 = vadd.f32 %v2277, %v2549
      %v2652 = vadd.f32 %v2278, %v2552
      %v2653 = vadd.f32 %v2279, %v2557
      %v2654 = vadd.f32 %v2280, %v2560
      %v2655 = vadd.f32 %v2281, %v2565
      %v2656 = vadd.f32 %v2282, %v2568
      %v2657 = vadd.f32 %v2283, %v2573
      %v2658 = vadd.f32 %v2284, %v2576
      %v2659 = vadd.f32 %v2285, %v2581
      %v2660 = vadd.f32 %v2286, %v2584
      %v2661 = vadd.f32 %v2287, %v2589
      %v2662 = vadd.f32 %v2288, %v2592
      %v2663 = vadd.f32 %v2289, %v2597
      %v2664 = vadd.f32 %v2290, %v2600
      %v2665 = vadd.f32 %v2291, %v2605
      %v2666 = vadd.f32 %v2292, %v2608
      %v2667 = vadd.f32 %v2293, %v2613
      %v2668 = vadd.f32 %v2294, %v2616
      %v2669 = vadd.f32 %v2295, %v2621
      %v2670 = vadd.f32 %v2296, %v2624
      %v2671 = vadd.f32 %v2297, %v2629
      %v2672 = vadd.f32 %v2298, %v2632
      %v2673 = vadd.f32 %v2299, %v2637
      %v2674 = vadd.f32 %v2300, %v2640
      %v2675 = vld [vmem:[%s2304] sm:$0xf]
      %v2676 = vld [vmem:[%s2304 + $0x4] sm:$0xf]
      %v2677 = vld [vmem:[%s2304 + $0x8] sm:$0x1]
      %v2678 = vld [vmem:[%s2304 + $0xc] sm:$0xf]
      %v2679 = vld [vmem:[%s2304 + $0x10] sm:$0xf]
      %v2680 = vld [vmem:[%s2304 + $0x14] sm:$0x1]
      %v2681 = vld [vmem:[%s2304 + $0x18] sm:$0xf]
      %v2682 = vld [vmem:[%s2304 + $0x1c] sm:$0xf]
      %v2683 = vld [vmem:[%s2304 + $0x20] sm:$0x1]
      %v2684 = vld [vmem:[%s2304 + $0x24] sm:$0xf]
      %v2685 = vld [vmem:[%s2304 + $0x28] sm:$0xf]
      %v2686 = vld [vmem:[%s2304 + $0x2c] sm:$0x1]
      %v2687 = vld [vmem:[%s2304 + $0x30] sm:$0xf]
      %v2688 = vld [vmem:[%s2304 + $0x34] sm:$0xf]
      %v2689 = vld [vmem:[%s2304 + $0x38] sm:$0x1]
      %v2690 = vld [vmem:[%s2304 + $0x3c] sm:$0xf]
      %v2691 = vld [vmem:[%s2304 + $0x40] sm:$0xf]
      %v2692 = vld [vmem:[%s2304 + $0x44] sm:$0x1]
      %v2693 = vld [vmem:[%s2304 + $0x48] sm:$0xf]
      %v2694 = vld [vmem:[%s2304 + $0x4c] sm:$0xf]
      %v2695 = vld [vmem:[%s2304 + $0x50] sm:$0x1]
      %v2696 = vld [vmem:[%s2304 + $0x54] sm:$0xf]
      %v2697 = vld [vmem:[%s2304 + $0x58] sm:$0xf]
      %v2698 = vld [vmem:[%s2304 + $0x5c] sm:$0x1]
      %v2699 = vld [vmem:[%s2304 + $0x60] sm:$0xf]
      %v2700 = vld [vmem:[%s2304 + $0x64] sm:$0xf]
      %v2701 = vld [vmem:[%s2304 + $0x68] sm:$0x1]
      %v2702 = vld [vmem:[%s2304 + $0x6c] sm:$0xf]
      %v2703 = vld [vmem:[%s2304 + $0x70] sm:$0xf]
      %v2704 = vld [vmem:[%s2304 + $0x74] sm:$0x1]
      %v2705 = vld [vmem:[%s2304 + $0x78] sm:$0xf]
      %v2706 = vld [vmem:[%s2304 + $0x7c] sm:$0xf]
      %v2707 = vld [vmem:[%s2304 + $0x80] sm:$0x1]
      %v2708 = vld [vmem:[%s2304 + $0x84] sm:$0xf]
      %v2709 = vld [vmem:[%s2304 + $0x88] sm:$0xf]
      %v2710 = vld [vmem:[%s2304 + $0x8c] sm:$0x1]
      %v2711 = vld [vmem:[%s2304 + $0x90] sm:$0xf]
      %v2712 = vld [vmem:[%s2304 + $0x94] sm:$0xf]
      %v2713 = vld [vmem:[%s2304 + $0x98] sm:$0x1]
      %v2714 = vld [vmem:[%s2304 + $0x9c] sm:$0xf]
      %v2715 = vld [vmem:[%s2304 + $0xa0] sm:$0xf]
      %v2716 = vld [vmem:[%s2304 + $0xa4] sm:$0x1]
      %v2717 = vld [vmem:[%s2304 + $0xa8] sm:$0xf]
      %v2718 = vld [vmem:[%s2304 + $0xac] sm:$0xf]
      %v2719 = vld [vmem:[%s2304 + $0xb0] sm:$0x1]
      %v2720 = vld [vmem:[%s2304 + $0xb4] sm:$0xf]
      %v2721 = vld [vmem:[%s2304 + $0xb8] sm:$0xf]
      %v2722 = vld [vmem:[%s2304 + $0xbc] sm:$0x1]
      %v2724 = vshrl.u32 %v2675, 16
      %v2726 = vrot.slane %v2724, 4
      %v2727 = vshll.u32 %v2675, 16
      %v2729 = vrot.slane %v2727, 5
      %v2730 = vor.u32 %v2726, %v2729
      %v2731 = vrot.slane %v2730, 4
      %v2733 = vshll.u32 %v2676, 16
      %v2735 = vrot.slane %v2733, 5
      %v2736 = vsel %vm1125, %v2731, %v2735
      %v2737 = vshrl.u32 %v2676, 16
      %v2739 = vrot.slane %v2737, 4
      %v2740 = vor.u32 %v2739, %v2735
      %v2741 = vrot.slane %v2740, 4
      %v2743 = vshll.u32 %v2677, 16
      %v2745 = vrot.slane %v2743, 5
      %v2746 = vsel %vm1125, %v2741, %v2745
      %v2748 = vshrl.u32 %v2678, 16
      %v2750 = vrot.slane %v2748, 4
      %v2751 = vshll.u32 %v2678, 16
      %v2753 = vrot.slane %v2751, 5
      %v2754 = vor.u32 %v2750, %v2753
      %v2755 = vrot.slane %v2754, 4
      %v2757 = vshll.u32 %v2679, 16
      %v2759 = vrot.slane %v2757, 5
      %v2760 = vsel %vm1125, %v2755, %v2759
      %v2761 = vshrl.u32 %v2679, 16
      %v2763 = vrot.slane %v2761, 4
      %v2764 = vor.u32 %v2763, %v2759
      %v2765 = vrot.slane %v2764, 4
      %v2767 = vshll.u32 %v2680, 16
      %v2769 = vrot.slane %v2767, 5
      %v2770 = vsel %vm1125, %v2765, %v2769
      %v2772 = vshrl.u32 %v2681, 16
      %v2774 = vrot.slane %v2772, 4
      %v2775 = vshll.u32 %v2681, 16
      %v2777 = vrot.slane %v2775, 5
      %v2778 = vor.u32 %v2774, %v2777
      %v2779 = vrot.slane %v2778, 4
      %v2781 = vshll.u32 %v2682, 16
      %v2783 = vrot.slane %v2781, 5
      %v2784 = vsel %vm1125, %v2779, %v2783
      %v2785 = vshrl.u32 %v2682, 16
      %v2787 = vrot.slane %v2785, 4
      %v2788 = vor.u32 %v2787, %v2783
      %v2789 = vrot.slane %v2788, 4
      %v2791 = vshll.u32 %v2683, 16
      %v2793 = vrot.slane %v2791, 5
      %v2794 = vsel %vm1125, %v2789, %v2793
      %v2796 = vshrl.u32 %v2684, 16
      %v2798 = vrot.slane %v2796, 4
      %v2799 = vshll.u32 %v2684, 16
      %v2801 = vrot.slane %v2799, 5
      %v2802 = vor.u32 %v2798, %v2801
      %v2803 = vrot.slane %v2802, 4
      %v2805 = vshll.u32 %v2685, 16
      %v2807 = vrot.slane %v2805, 5
      %v2808 = vsel %vm1125, %v2803, %v2807
      %v2809 = vshrl.u32 %v2685, 16
      %v2811 = vrot.slane %v2809, 4
      %v2812 = vor.u32 %v2811, %v2807
      %v2813 = vrot.slane %v2812, 4
      %v2815 = vshll.u32 %v2686, 16
      %v2817 = vrot.slane %v2815, 5
      %v2818 = vsel %vm1125, %v2813, %v2817
      %v2820 = vshrl.u32 %v2687, 16
      %v2822 = vrot.slane %v2820, 4
      %v2823 = vshll.u32 %v2687, 16
      %v2825 = vrot.slane %v2823, 5
      %v2826 = vor.u32 %v2822, %v2825
      %v2827 = vrot.slane %v2826, 4
      %v2829 = vshll.u32 %v2688, 16
      %v2831 = vrot.slane %v2829, 5
      %v2832 = vsel %vm1125, %v2827, %v2831
      %v2833 = vshrl.u32 %v2688, 16
      %v2835 = vrot.slane %v2833, 4
      %v2836 = vor.u32 %v2835, %v2831
      %v2837 = vrot.slane %v2836, 4
      %v2839 = vshll.u32 %v2689, 16
      %v2841 = vrot.slane %v2839, 5
      %v2842 = vsel %vm1125, %v2837, %v2841
      %v2844 = vshrl.u32 %v2690, 16
      %v2846 = vrot.slane %v2844, 4
      %v2847 = vshll.u32 %v2690, 16
      %v2849 = vrot.slane %v2847, 5
      %v2850 = vor.u32 %v2846, %v2849
      %v2851 = vrot.slane %v2850, 4
      %v2853 = vshll.u32 %v2691, 16
      %v2855 = vrot.slane %v2853, 5
      %v2856 = vsel %vm1125, %v2851, %v2855
      %v2857 = vshrl.u32 %v2691, 16
      %v2859 = vrot.slane %v2857, 4
      %v2860 = vor.u32 %v2859, %v2855
      %v2861 = vrot.slane %v2860, 4
      %v2863 = vshll.u32 %v2692, 16
      %v2865 = vrot.slane %v2863, 5
      %v2866 = vsel %vm1125, %v2861, %v2865
      %v2868 = vshrl.u32 %v2693, 16
      %v2870 = vrot.slane %v2868, 4
      %v2871 = vshll.u32 %v2693, 16
      %v2873 = vrot.slane %v2871, 5
      %v2874 = vor.u32 %v2870, %v2873
      %v2875 = vrot.slane %v2874, 4
      %v2877 = vshll.u32 %v2694, 16
      %v2879 = vrot.slane %v2877, 5
      %v2880 = vsel %vm1125, %v2875, %v2879
      %v2881 = vshrl.u32 %v2694, 16
      %v2883 = vrot.slane %v2881, 4
      %v2884 = vor.u32 %v2883, %v2879
      %v2885 = vrot.slane %v2884, 4
      %v2887 = vshll.u32 %v2695, 16
      %v2889 = vrot.slane %v2887, 5
      %v2890 = vsel %vm1125, %v2885, %v2889
      %v2892 = vshrl.u32 %v2696, 16
      %v2894 = vrot.slane %v2892, 4
      %v2895 = vshll.u32 %v2696, 16
      %v2897 = vrot.slane %v2895, 5
      %v2898 = vor.u32 %v2894, %v2897
      %v2899 = vrot.slane %v2898, 4
      %v2901 = vshll.u32 %v2697, 16
      %v2903 = vrot.slane %v2901, 5
      %v2904 = vsel %vm1125, %v2899, %v2903
      %v2905 = vshrl.u32 %v2697, 16
      %v2907 = vrot.slane %v2905, 4
      %v2908 = vor.u32 %v2907, %v2903
      %v2909 = vrot.slane %v2908, 4
      %v2911 = vshll.u32 %v2698, 16
      %v2913 = vrot.slane %v2911, 5
      %v2914 = vsel %vm1125, %v2909, %v2913
      %v2916 = vshrl.u32 %v2699, 16
      %v2918 = vrot.slane %v2916, 4
      %v2919 = vshll.u32 %v2699, 16
      %v2921 = vrot.slane %v2919, 5
      %v2922 = vor.u32 %v2918, %v2921
      %v2923 = vrot.slane %v2922, 4
      %v2925 = vshll.u32 %v2700, 16
      %v2927 = vrot.slane %v2925, 5
      %v2928 = vsel %vm1125, %v2923, %v2927
      %v2929 = vshrl.u32 %v2700, 16
      %v2931 = vrot.slane %v2929, 4
      %v2932 = vor.u32 %v2931, %v2927
      %v2933 = vrot.slane %v2932, 4
      %v2935 = vshll.u32 %v2701, 16
      %v2937 = vrot.slane %v2935, 5
      %v2938 = vsel %vm1125, %v2933, %v2937
      %v2940 = vshrl.u32 %v2702, 16
      %v2942 = vrot.slane %v2940, 4
      %v2943 = vshll.u32 %v2702, 16
      %v2945 = vrot.slane %v2943, 5
      %v2946 = vor.u32 %v2942, %v2945
      %v2947 = vrot.slane %v2946, 4
      %v2949 = vshll.u32 %v2703, 16
      %v2951 = vrot.slane %v2949, 5
      %v2952 = vsel %vm1125, %v2947, %v2951
      %v2953 = vshrl.u32 %v2703, 16
      %v2955 = vrot.slane %v2953, 4
      %v2956 = vor.u32 %v2955, %v2951
      %v2957 = vrot.slane %v2956, 4
      %v2959 = vshll.u32 %v2704, 16
      %v2961 = vrot.slane %v2959, 5
      %v2962 = vsel %vm1125, %v2957, %v2961
      %v2964 = vshrl.u32 %v2705, 16
      %v2966 = vrot.slane %v2964, 4
      %v2967 = vshll.u32 %v2705, 16
      %v2969 = vrot.slane %v2967, 5
      %v2970 = vor.u32 %v2966, %v2969
      %v2971 = vrot.slane %v2970, 4
      %v2973 = vshll.u32 %v2706, 16
      %v2975 = vrot.slane %v2973, 5
      %v2976 = vsel %vm1125, %v2971, %v2975
      %v2977 = vshrl.u32 %v2706, 16
      %v2979 = vrot.slane %v2977, 4
      %v2980 = vor.u32 %v2979, %v2975
      %v2981 = vrot.slane %v2980, 4
      %v2983 = vshll.u32 %v2707, 16
      %v2985 = vrot.slane %v2983, 5
      %v2986 = vsel %vm1125, %v2981, %v2985
      %v2988 = vshrl.u32 %v2708, 16
      %v2990 = vrot.slane %v2988, 4
      %v2991 = vshll.u32 %v2708, 16
      %v2993 = vrot.slane %v2991, 5
      %v2994 = vor.u32 %v2990, %v2993
      %v2995 = vrot.slane %v2994, 4
      %v2997 = vshll.u32 %v2709, 16
      %v2999 = vrot.slane %v2997, 5
      %v3000 = vsel %vm1125, %v2995, %v2999
      %v3001 = vshrl.u32 %v2709, 16
      %v3003 = vrot.slane %v3001, 4
      %v3004 = vor.u32 %v3003, %v2999
      %v3005 = vrot.slane %v3004, 4
      %v3007 = vshll.u32 %v2710, 16
      %v3009 = vrot.slane %v3007, 5
      %v3010 = vsel %vm1125, %v3005, %v3009
      %v3012 = vshrl.u32 %v2711, 16
      %v3014 = vrot.slane %v3012, 4
      %v3015 = vshll.u32 %v2711, 16
      %v3017 = vrot.slane %v3015, 5
      %v3018 = vor.u32 %v3014, %v3017
      %v3019 = vrot.slane %v3018, 4
      %v3021 = vshll.u32 %v2712, 16
      %v3023 = vrot.slane %v3021, 5
      %v3024 = vsel %vm1125, %v3019, %v3023
      %v3025 = vshrl.u32 %v2712, 16
      %v3027 = vrot.slane %v3025, 4
      %v3028 = vor.u32 %v3027, %v3023
      %v3029 = vrot.slane %v3028, 4
      %v3031 = vshll.u32 %v2713, 16
      %v3033 = vrot.slane %v3031, 5
      %v3034 = vsel %vm1125, %v3029, %v3033
      %v3036 = vshrl.u32 %v2714, 16
      %v3038 = vrot.slane %v3036, 4
      %v3039 = vshll.u32 %v2714, 16
      %v3041 = vrot.slane %v3039, 5
      %v3042 = vor.u32 %v3038, %v3041
      %v3043 = vrot.slane %v3042, 4
      %v3045 = vshll.u32 %v2715, 16
      %v3047 = vrot.slane %v3045, 5
      %v3048 = vsel %vm1125, %v3043, %v3047
      %v3049 = vshrl.u32 %v2715, 16
      %v3051 = vrot.slane %v3049, 4
      %v3052 = vor.u32 %v3051, %v3047
      %v3053 = vrot.slane %v3052, 4
      %v3055 = vshll.u32 %v2716, 16
      %v3057 = vrot.slane %v3055, 5
      %v3058 = vsel %vm1125, %v3053, %v3057
      %v3060 = vshrl.u32 %v2717, 16
      %v3062 = vrot.slane %v3060, 4
      %v3063 = vshll.u32 %v2717, 16
      %v3065 = vrot.slane %v3063, 5
      %v3066 = vor.u32 %v3062, %v3065
      %v3067 = vrot.slane %v3066, 4
      %v3069 = vshll.u32 %v2718, 16
      %v3071 = vrot.slane %v3069, 5
      %v3072 = vsel %vm1125, %v3067, %v3071
      %v3073 = vshrl.u32 %v2718, 16
      %v3075 = vrot.slane %v3073, 4
      %v3076 = vor.u32 %v3075, %v3071
      %v3077 = vrot.slane %v3076, 4
      %v3079 = vshll.u32 %v2719, 16
      %v3081 = vrot.slane %v3079, 5
      %v3082 = vsel %vm1125, %v3077, %v3081
      %v3084 = vshrl.u32 %v2720, 16
      %v3086 = vrot.slane %v3084, 4
      %v3087 = vshll.u32 %v2720, 16
      %v3089 = vrot.slane %v3087, 5
      %v3090 = vor.u32 %v3086, %v3089
      %v3091 = vrot.slane %v3090, 4
      %v3093 = vshll.u32 %v2721, 16
      %v3095 = vrot.slane %v3093, 5
      %v3096 = vsel %vm1125, %v3091, %v3095
      %v3097 = vshrl.u32 %v2721, 16
      %v3099 = vrot.slane %v3097, 4
      %v3100 = vor.u32 %v3099, %v3095
      %v3101 = vrot.slane %v3100, 4
      %v3103 = vshll.u32 %v2722, 16
      %v3105 = vrot.slane %v3103, 5
      %v3106 = vsel %vm1125, %v3101, %v3105
      %s3107 = scalar_lea.vmem %s4, 64
      %v3108 = vld [vmem:[%s3107] sm:$0xf]
      %v3109 = vld [vmem:[%s3107 + $0x4] sm:$0xf]
      %v3110 = vld [vmem:[%s3107 + $0x8] sm:$0xf]
      %v3111 = vld [vmem:[%s3107 + $0xc] sm:$0xf]
      %v3112 = vunpack.c.l.b16 %v2736
      %v3113 = vunpack.c.l.b16 %v2746
      %v3114 = vunpack.c.l.b16 %v2760
      %v3115 = vunpack.c.l.b16 %v2770
      %v3116 = vunpack.c.l.b16 %v2784
      %v3117 = vunpack.c.l.b16 %v2794
      %v3118 = vunpack.c.l.b16 %v2808
      %v3119 = vunpack.c.l.b16 %v2818
      %v3120 = vunpack.c.l.b16 %v2832
      %v3121 = vunpack.c.l.b16 %v2842
      %v3122 = vunpack.c.l.b16 %v2856
      %v3123 = vunpack.c.l.b16 %v2866
      %v3124 = vunpack.c.l.b16 %v2880
      %v3125 = vunpack.c.l.b16 %v2890
      %v3126 = vunpack.c.l.b16 %v2904
      %v3127 = vunpack.c.l.b16 %v2914
      %v3128 = vunpack.c.l.b16 %v2928
      %v3129 = vunpack.c.l.b16 %v2938
      %v3130 = vunpack.c.l.b16 %v2952
      %v3131 = vunpack.c.l.b16 %v2962
      %v3132 = vunpack.c.l.b16 %v2976
      %v3133 = vunpack.c.l.b16 %v2986
      %v3134 = vunpack.c.l.b16 %v3000
      %v3135 = vunpack.c.l.b16 %v3010
      %v3136 = vunpack.c.l.b16 %v3024
      %v3137 = vunpack.c.l.b16 %v3034
      %v3138 = vunpack.c.l.b16 %v3048
      %v3139 = vunpack.c.l.b16 %v3058
      %v3140 = vunpack.c.l.b16 %v3072
      %v3141 = vunpack.c.l.b16 %v3082
      %v3142 = vunpack.c.l.b16 %v3096
      %v3143 = vunpack.c.l.b16 %v3106
      %v3144 = vpack.c.b16 %v3113, %v3112
      %v3145 = vpack.c.b16 %v3115, %v3114
      %v3146 = vpack.c.b16 %v3117, %v3116
      %v3147 = vpack.c.b16 %v3119, %v3118
      %v3148 = vpack.c.b16 %v3121, %v3120
      %v3149 = vpack.c.b16 %v3123, %v3122
      %v3150 = vpack.c.b16 %v3125, %v3124
      %v3151 = vpack.c.b16 %v3127, %v3126
      %v3152 = vpack.c.b16 %v3129, %v3128
      %v3153 = vpack.c.b16 %v3131, %v3130
      %v3154 = vpack.c.b16 %v3133, %v3132
      %v3155 = vpack.c.b16 %v3135, %v3134
      %v3156 = vpack.c.b16 %v3137, %v3136
      %v3157 = vpack.c.b16 %v3139, %v3138
      %v3158 = vpack.c.b16 %v3141, %v3140
      %v3159 = vpack.c.b16 %v3143, %v3142
      %v3164 = vunpack.c.l.b16 %v3108
      %v3165 = vunpack.c.l.b16 %v3109
      %v3166 = vunpack.c.l.b16 %v3110
      %v3167 = vunpack.c.l.b16 %v3111
      %v3168 = vpack.c.b16 %v3165, %v3164
      %v3169 = vpack.c.b16 %v3167, %v3166
      %v3173 = vsel %vm833, %v3144, 0
      %v3176 = vsel %vm833, %v3145, 0
      %v3179 = vsel %vm833, %v3146, 0
      %v3182 = vsel %vm833, %v3147, 0
      %v3185 = vsel %vm833, %v3148, 0
      %v3188 = vsel %vm833, %v3149, 0
      %v3191 = vsel %vm833, %v3150, 0
      %v3194 = vsel %vm833, %v3151, 0
      %v3197 = vsel %vm833, %v3152, 0
      %v3200 = vsel %vm833, %v3153, 0
      %v3203 = vsel %vm833, %v3154, 0
      %v3206 = vsel %vm833, %v3155, 0
      %v3209 = vsel %vm833, %v3156, 0
      %v3212 = vsel %vm833, %v3157, 0
      %v3215 = vsel %vm833, %v3158, 0
      %v3218 = vsel %vm833, %v3159, 0
      %3220 = vmatprep.subr.bf16.mxu0 0
      %3221 = vmatpush1.bf16.msra.mxu0 %v3168
      %3222 = vmatprep.subr.bf16.mxu0 0
      %3223 = vmatpush1.bf16.msra.mxu0 %v3169
      %3224 = vmatprep.subr.bf16.mxu0 0
      %3225 = vmatpush1.bf16.msra.mxu0 0
      %3226 = vmatprep.subr.bf16.mxu0 0
      %3227 = vmatpush1.bf16.msra.mxu0 0
      %3228 = vmatprep.subr.bf16.mxu0 0
      %3229 = vmatpush1.bf16.msra.mxu0 0
      %3230 = vmatprep.subr.bf16.mxu0 0
      %3231 = vmatpush1.bf16.msra.mxu0 0
      %3232 = vmatprep.subr.bf16.mxu0 0
      %3233 = vmatpush1.bf16.msra.mxu0 0
      %3234 = vmatprep.subr.bf16.mxu0 0
      %3235 = vmatpush1.bf16.msra.mxu0 0
      %3236 = vmatprep.subr.bf16.mxu0 0
      %3237 = vmatpush1.bf16.msra.mxu0 0
      %3238 = vmatprep.subr.bf16.mxu0 0
      %3239 = vmatpush1.bf16.msra.mxu0 0
      %3240 = vmatprep.subr.bf16.mxu0 0
      %3241 = vmatpush1.bf16.msra.mxu0 0
      %3242 = vmatprep.subr.bf16.mxu0 0
      %3243 = vmatpush1.bf16.msra.mxu0 0
      %3244 = vmatprep.subr.bf16.mxu0 0
      %3245 = vmatpush1.bf16.msra.mxu0 0
      %3246 = vmatprep.subr.bf16.mxu0 0
      %3247 = vmatpush1.bf16.msra.mxu0 0
      %3248 = vmatprep.subr.bf16.mxu0 0
      %3249 = vmatpush1.bf16.msra.mxu0 0
      %3250 = vmatprep.subr.bf16.mxu0 0
      %3251 = vmatpush1.bf16.msra.mxu0 0
      %3252 = vmatprep.mubr.bf16.mxu0 0
      %3253 = vmatmul.mubr.bf16.gmra.mrb[0].mxu0 %v3173
      %v3254 = vpop.f32.mrb[0].mxu0
      %v3255 = vadd.f32 0.0, %v3254
      %v3256 = vpop.f32.mrb[0].mxu0
      %v3257 = vpop.f32.mrb[0].mxu0
      %v3258 = vadd.f32 0.0, %v3257
      %v3259 = vpop.f32.mrb[0].mxu0
      %3260 = vmatprep.mubr.bf16.mxu0 0
      %3261 = vmatmul.mubr.bf16.gmra.mrb[0].mxu0 %v3176
      %v3262 = vpop.f32.mrb[0].mxu0
      %v3263 = vadd.f32 0.0, %v3262
      %v3264 = vpop.f32.mrb[0].mxu0
      %v3265 = vpop.f32.mrb[0].mxu0
      %v3266 = vadd.f32 0.0, %v3265
      %v3267 = vpop.f32.mrb[0].mxu0
      %3268 = vmatprep.mubr.bf16.mxu0 0
      %3269 = vmatmul.mubr.bf16.gmra.mrb[0].mxu0 %v3179
      %v3270 = vpop.f32.mrb[0].mxu0
      %v3271 = vadd.f32 0.0, %v3270
      %v3272 = vpop.f32.mrb[0].mxu0
      %v3273 = vpop.f32.mrb[0].mxu0
      %v3274 = vadd.f32 0.0, %v3273
      %v3275 = vpop.f32.mrb[0].mxu0
      %3276 = vmatprep.mubr.bf16.mxu0 0
      %3277 = vmatmul.mubr.bf16.gmra.mrb[0].mxu0 %v3182
      %v3278 = vpop.f32.mrb[0].mxu0
      %v3279 = vadd.f32 0.0, %v3278
      %v3280 = vpop.f32.mrb[0].mxu0
      %v3281 = vpop.f32.mrb[0].mxu0
      %v3282 = vadd.f32 0.0, %v3281
      %v3283 = vpop.f32.mrb[0].mxu0
      %3284 = vmatprep.mubr.bf16.mxu0 0
      %3285 = vmatmul.mubr.bf16.gmra.mrb[0].mxu0 %v3185
      %v3286 = vpop.f32.mrb[0].mxu0
      %v3287 = vadd.f32 0.0, %v3286
      %v3288 = vpop.f32.mrb[0].mxu0
      %v3289 = vpop.f32.mrb[0].mxu0
      %v3290 = vadd.f32 0.0, %v3289
      %v3291 = vpop.f32.mrb[0].mxu0
      %3292 = vmatprep.mubr.bf16.mxu0 0
      %3293 = vmatmul.mubr.bf16.gmra.mrb[0].mxu0 %v3188
      %v3294 = vpop.f32.mrb[0].mxu0
      %v3295 = vadd.f32 0.0, %v3294
      %v3296 = vpop.f32.mrb[0].mxu0
      %v3297 = vpop.f32.mrb[0].mxu0
      %v3298 = vadd.f32 0.0, %v3297
      %v3299 = vpop.f32.mrb[0].mxu0
      %3300 = vmatprep.mubr.bf16.mxu0 0
      %3301 = vmatmul.mubr.bf16.gmra.mrb[0].mxu0 %v3191
      %v3302 = vpop.f32.mrb[0].mxu0
      %v3303 = vadd.f32 0.0, %v3302
      %v3304 = vpop.f32.mrb[0].mxu0
      %v3305 = vpop.f32.mrb[0].mxu0
      %v3306 = vadd.f32 0.0, %v3305
      %v3307 = vpop.f32.mrb[0].mxu0
      %3308 = vmatprep.mubr.bf16.mxu0 0
      %3309 = vmatmul.mubr.bf16.gmra.mrb[0].mxu0 %v3194
      %v3310 = vpop.f32.mrb[0].mxu0
      %v3311 = vadd.f32 0.0, %v3310
      %v3312 = vpop.f32.mrb[0].mxu0
      %v3313 = vpop.f32.mrb[0].mxu0
      %v3314 = vadd.f32 0.0, %v3313
      %v3315 = vpop.f32.mrb[0].mxu0
      %3316 = vmatprep.mubr.bf16.mxu0 0
      %3317 = vmatmul.mubr.bf16.gmra.mrb[0].mxu0 %v3197
      %v3318 = vpop.f32.mrb[0].mxu0
      %v3319 = vadd.f32 0.0, %v3318
      %v3320 = vpop.f32.mrb[0].mxu0
      %v3321 = vpop.f32.mrb[0].mxu0
      %v3322 = vadd.f32 0.0, %v3321
      %v3323 = vpop.f32.mrb[0].mxu0
      %3324 = vmatprep.mubr.bf16.mxu0 0
      %3325 = vmatmul.mubr.bf16.gmra.mrb[0].mxu0 %v3200
      %v3326 = vpop.f32.mrb[0].mxu0
      %v3327 = vadd.f32 0.0, %v3326
      %v3328 = vpop.f32.mrb[0].mxu0
      %v3329 = vpop.f32.mrb[0].mxu0
      %v3330 = vadd.f32 0.0, %v3329
      %v3331 = vpop.f32.mrb[0].mxu0
      %3332 = vmatprep.mubr.bf16.mxu0 0
      %3333 = vmatmul.mubr.bf16.gmra.mrb[0].mxu0 %v3203
      %v3334 = vpop.f32.mrb[0].mxu0
      %v3335 = vadd.f32 0.0, %v3334
      %v3336 = vpop.f32.mrb[0].mxu0
      %v3337 = vpop.f32.mrb[0].mxu0
      %v3338 = vadd.f32 0.0, %v3337
      %v3339 = vpop.f32.mrb[0].mxu0
      %3340 = vmatprep.mubr.bf16.mxu0 0
      %3341 = vmatmul.mubr.bf16.gmra.mrb[0].mxu0 %v3206
      %v3342 = vpop.f32.mrb[0].mxu0
      %v3343 = vadd.f32 0.0, %v3342
      %v3344 = vpop.f32.mrb[0].mxu0
      %v3345 = vpop.f32.mrb[0].mxu0
      %v3346 = vadd.f32 0.0, %v3345
      %v3347 = vpop.f32.mrb[0].mxu0
      %3348 = vmatprep.mubr.bf16.mxu0 0
      %3349 = vmatmul.mubr.bf16.gmra.mrb[0].mxu0 %v3209
      %v3350 = vpop.f32.mrb[0].mxu0
      %v3351 = vadd.f32 0.0, %v3350
      %v3352 = vpop.f32.mrb[0].mxu0
      %v3353 = vpop.f32.mrb[0].mxu0
      %v3354 = vadd.f32 0.0, %v3353
      %v3355 = vpop.f32.mrb[0].mxu0
      %3356 = vmatprep.mubr.bf16.mxu0 0
      %3357 = vmatmul.mubr.bf16.gmra.mrb[0].mxu0 %v3212
      %v3358 = vpop.f32.mrb[0].mxu0
      %v3359 = vadd.f32 0.0, %v3358
      %v3360 = vpop.f32.mrb[0].mxu0
      %v3361 = vpop.f32.mrb[0].mxu0
      %v3362 = vadd.f32 0.0, %v3361
      %v3363 = vpop.f32.mrb[0].mxu0
      %3364 = vmatprep.mubr.bf16.mxu0 0
      %3365 = vmatmul.mubr.bf16.gmra.mrb[0].mxu0 %v3215
      %v3366 = vpop.f32.mrb[0].mxu0
      %v3367 = vadd.f32 0.0, %v3366
      %v3368 = vpop.f32.mrb[0].mxu0
      %v3369 = vpop.f32.mrb[0].mxu0
      %v3370 = vadd.f32 0.0, %v3369
      %v3371 = vpop.f32.mrb[0].mxu0
      %3372 = vmatprep.mubr.bf16.mxu0 0
      %3373 = vmatmul.mubr.bf16.gmra.mrb[0].mxu0 %v3218
      %v3374 = vpop.f32.mrb[0].mxu0
      %v3375 = vadd.f32 0.0, %v3374
      %v3376 = vpop.f32.mrb[0].mxu0
      %v3377 = vpop.f32.mrb[0].mxu0
      %v3378 = vadd.f32 0.0, %v3377
      %v3379 = vpop.f32.mrb[0].mxu0
      %3380 = vdwg.mxu0
      %v3381 = vadd.f32 %v2643, %v3255
      %v3382 = vadd.f32 %v2644, %v3258
      %v3383 = vadd.f32 %v2645, %v3263
      %v3384 = vadd.f32 %v2646, %v3266
      %v3385 = vadd.f32 %v2647, %v3271
      %v3386 = vadd.f32 %v2648, %v3274
      %v3387 = vadd.f32 %v2649, %v3279
      %v3388 = vadd.f32 %v2650, %v3282
      %v3389 = vadd.f32 %v2651, %v3287
      %v3390 = vadd.f32 %v2652, %v3290
      %v3391 = vadd.f32 %v2653, %v3295
      %v3392 = vadd.f32 %v2654, %v3298
      %v3393 = vadd.f32 %v2655, %v3303
      %v3394 = vadd.f32 %v2656, %v3306
      %v3395 = vadd.f32 %v2657, %v3311
      %v3396 = vadd.f32 %v2658, %v3314
      %v3397 = vadd.f32 %v2659, %v3319
      %v3398 = vadd.f32 %v2660, %v3322
      %v3399 = vadd.f32 %v2661, %v3327
      %v3400 = vadd.f32 %v2662, %v3330
      %v3401 = vadd.f32 %v2663, %v3335
      %v3402 = vadd.f32 %v2664, %v3338
      %v3403 = vadd.f32 %v2665, %v3343
      %v3404 = vadd.f32 %v2666, %v3346
      %v3405 = vadd.f32 %v2667, %v3351
      %v3406 = vadd.f32 %v2668, %v3354
      %v3407 = vadd.f32 %v2669, %v3359
      %v3408 = vadd.f32 %v2670, %v3362
      %v3409 = vadd.f32 %v2671, %v3367
      %v3410 = vadd.f32 %v2672, %v3370
      %v3411 = vadd.f32 %v2673, %v3375
      %v3412 = vadd.f32 %v2674, %v3378
      %v3413 = vld [vmem:[%s2304] sm:$0xe]
      %v3414 = vld [vmem:[%s2304 + $0xc] sm:$0xe]
      %v3415 = vld [vmem:[%s2304 + $0x18] sm:$0xe]
      %v3416 = vld [vmem:[%s2304 + $0x24] sm:$0xe]
      %v3417 = vld [vmem:[%s2304 + $0x30] sm:$0xe]
      %v3418 = vld [vmem:[%s2304 + $0x3c] sm:$0xe]
      %v3419 = vld [vmem:[%s2304 + $0x48] sm:$0xe]
      %v3420 = vld [vmem:[%s2304 + $0x54] sm:$0xe]
      %v3421 = vld [vmem:[%s2304 + $0x60] sm:$0xe]
      %v3422 = vld [vmem:[%s2304 + $0x6c] sm:$0xe]
      %v3423 = vld [vmem:[%s2304 + $0x78] sm:$0xe]
      %v3424 = vld [vmem:[%s2304 + $0x84] sm:$0xe]
      %v3425 = vld [vmem:[%s2304 + $0x90] sm:$0xe]
      %v3426 = vld [vmem:[%s2304 + $0x9c] sm:$0xe]
      %v3427 = vld [vmem:[%s2304 + $0xa8] sm:$0xe]
      %v3428 = vld [vmem:[%s2304 + $0xb4] sm:$0xe]
      %v3477 = vrot.slane %v3413, 5
      %v3478 = vrot.slane %v3477, 4
      %v3479 = vrot.slane %v2676, 5
      %v3480 = vsel %vm1882, %v3478, %v3479
      %v3481 = vrot.slane %v3479, 4
      %v3482 = vrot.slane %v2677, 5
      %v3483 = vsel %vm1882, %v3481, %v3482
      %v3484 = vrot.slane %v3414, 5
      %v3485 = vrot.slane %v3484, 4
      %v3486 = vrot.slane %v2679, 5
      %v3487 = vsel %vm1882, %v3485, %v3486
      %v3488 = vrot.slane %v3486, 4
      %v3489 = vrot.slane %v2680, 5
      %v3490 = vsel %vm1882, %v3488, %v3489
      %v3491 = vrot.slane %v3415, 5
      %v3492 = vrot.slane %v3491, 4
      %v3493 = vrot.slane %v2682, 5
      %v3494 = vsel %vm1882, %v3492, %v3493
      %v3495 = vrot.slane %v3493, 4
      %v3496 = vrot.slane %v2683, 5
      %v3497 = vsel %vm1882, %v3495, %v3496
      %v3498 = vrot.slane %v3416, 5
      %v3499 = vrot.slane %v3498, 4
      %v3500 = vrot.slane %v2685, 5
      %v3501 = vsel %vm1882, %v3499, %v3500
      %v3502 = vrot.slane %v3500, 4
      %v3503 = vrot.slane %v2686, 5
      %v3504 = vsel %vm1882, %v3502, %v3503
      %v3505 = vrot.slane %v3417, 5
      %v3506 = vrot.slane %v3505, 4
      %v3507 = vrot.slane %v2688, 5
      %v3508 = vsel %vm1882, %v3506, %v3507
      %v3509 = vrot.slane %v3507, 4
      %v3510 = vrot.slane %v2689, 5
      %v3511 = vsel %vm1882, %v3509, %v3510
      %v3512 = vrot.slane %v3418, 5
      %v3513 = vrot.slane %v3512, 4
      %v3514 = vrot.slane %v2691, 5
      %v3515 = vsel %vm1882, %v3513, %v3514
      %v3516 = vrot.slane %v3514, 4
      %v3517 = vrot.slane %v2692, 5
      %v3518 = vsel %vm1882, %v3516, %v3517
      %v3519 = vrot.slane %v3419, 5
      %v3520 = vrot.slane %v3519, 4
      %v3521 = vrot.slane %v2694, 5
      %v3522 = vsel %vm1882, %v3520, %v3521
      %v3523 = vrot.slane %v3521, 4
      %v3524 = vrot.slane %v2695, 5
      %v3525 = vsel %vm1882, %v3523, %v3524
      %v3526 = vrot.slane %v3420, 5
      %v3527 = vrot.slane %v3526, 4
      %v3528 = vrot.slane %v2697, 5
      %v3529 = vsel %vm1882, %v3527, %v3528
      %v3530 = vrot.slane %v3528, 4
      %v3531 = vrot.slane %v2698, 5
      %v3532 = vsel %vm1882, %v3530, %v3531
      %v3533 = vrot.slane %v3421, 5
      %v3534 = vrot.slane %v3533, 4
      %v3535 = vrot.slane %v2700, 5
      %v3536 = vsel %vm1882, %v3534, %v3535
      %v3537 = vrot.slane %v3535, 4
      %v3538 = vrot.slane %v2701, 5
      %v3539 = vsel %vm1882, %v3537, %v3538
      %v3540 = vrot.slane %v3422, 5
      %v3541 = vrot.slane %v3540, 4
      %v3542 = vrot.slane %v2703, 5
      %v3543 = vsel %vm1882, %v3541, %v3542
      %v3544 = vrot.slane %v3542, 4
      %v3545 = vrot.slane %v2704, 5
      %v3546 = vsel %vm1882, %v3544, %v3545
      %v3547 = vrot.slane %v3423, 5
      %v3548 = vrot.slane %v3547, 4
      %v3549 = vrot.slane %v2706, 5
      %v3550 = vsel %vm1882, %v3548, %v3549
      %v3551 = vrot.slane %v3549, 4
      %v3552 = vrot.slane %v2707, 5
      %v3553 = vsel %vm1882, %v3551, %v3552
      %v3554 = vrot.slane %v3424, 5
      %v3555 = vrot.slane %v3554, 4
      %v3556 = vrot.slane %v2709, 5
      %v3557 = vsel %vm1882, %v3555, %v3556
      %v3558 = vrot.slane %v3556, 4
      %v3559 = vrot.slane %v2710, 5
      %v3560 = vsel %vm1882, %v3558, %v3559
      %v3561 = vrot.slane %v3425, 5
      %v3562 = vrot.slane %v3561, 4
      %v3563 = vrot.slane %v2712, 5
      %v3564 = vsel %vm1882, %v3562, %v3563
      %v3565 = vrot.slane %v3563, 4
      %v3566 = vrot.slane %v2713, 5
      %v3567 = vsel %vm1882, %v3565, %v3566
      %v3568 = vrot.slane %v3426, 5
      %v3569 = vrot.slane %v3568, 4
      %v3570 = vrot.slane %v2715, 5
      %v3571 = vsel %vm1882, %v3569, %v3570
      %v3572 = vrot.slane %v3570, 4
      %v3573 = vrot.slane %v2716, 5
      %v3574 = vsel %vm1882, %v3572, %v3573
      %v3575 = vrot.slane %v3427, 5
      %v3576 = vrot.slane %v3575, 4
      %v3577 = vrot.slane %v2718, 5
      %v3578 = vsel %vm1882, %v3576, %v3577
      %v3579 = vrot.slane %v3577, 4
      %v3580 = vrot.slane %v2719, 5
      %v3581 = vsel %vm1882, %v3579, %v3580
      %v3582 = vrot.slane %v3428, 5
      %v3583 = vrot.slane %v3582, 4
      %v3584 = vrot.slane %v2721, 5
      %v3585 = vsel %vm1882, %v3583, %v3584
      %v3586 = vrot.slane %v3584, 4
      %v3587 = vrot.slane %v2722, 5
      %v3588 = vsel %vm1882, %v3586, %v3587
      %s3589 = scalar_lea.vmem %s4, 80
      %v3590 = vld [vmem:[%s3589] sm:$0xf]
      %v3591 = vld [vmem:[%s3589 + $0x4] sm:$0xf]
      %v3592 = vld [vmem:[%s3589 + $0x8] sm:$0xf]
      %v3593 = vld [vmem:[%s3589 + $0xc] sm:$0xf]
      %v3594 = vunpack.c.l.b16 %v3480
      %v3595 = vunpack.c.l.b16 %v3483
      %v3596 = vunpack.c.l.b16 %v3487
      %v3597 = vunpack.c.l.b16 %v3490
      %v3598 = vunpack.c.l.b16 %v3494
      %v3599 = vunpack.c.l.b16 %v3497
      %v3600 = vunpack.c.l.b16 %v3501
      %v3601 = vunpack.c.l.b16 %v3504
      %v3602 = vunpack.c.l.b16 %v3508
      %v3603 = vunpack.c.l.b16 %v3511
      %v3604 = vunpack.c.l.b16 %v3515
      %v3605 = vunpack.c.l.b16 %v3518
      %v3606 = vunpack.c.l.b16 %v3522
      %v3607 = vunpack.c.l.b16 %v3525
      %v3608 = vunpack.c.l.b16 %v3529
      %v3609 = vunpack.c.l.b16 %v3532
      %v3610 = vunpack.c.l.b16 %v3536
      %v3611 = vunpack.c.l.b16 %v3539
      %v3612 = vunpack.c.l.b16 %v3543
      %v3613 = vunpack.c.l.b16 %v3546
      %v3614 = vunpack.c.l.b16 %v3550
      %v3615 = vunpack.c.l.b16 %v3553
      %v3616 = vunpack.c.l.b16 %v3557
      %v3617 = vunpack.c.l.b16 %v3560
      %v3618 = vunpack.c.l.b16 %v3564
      %v3619 = vunpack.c.l.b16 %v3567
      %v3620 = vunpack.c.l.b16 %v3571
      %v3621 = vunpack.c.l.b16 %v3574
      %v3622 = vunpack.c.l.b16 %v3578
      %v3623 = vunpack.c.l.b16 %v3581
      %v3624 = vunpack.c.l.b16 %v3585
      %v3625 = vunpack.c.l.b16 %v3588
      %v3626 = vpack.c.b16 %v3595, %v3594
      %v3627 = vpack.c.b16 %v3597, %v3596
      %v3628 = vpack.c.b16 %v3599, %v3598
      %v3629 = vpack.c.b16 %v3601, %v3600
      %v3630 = vpack.c.b16 %v3603, %v3602
      %v3631 = vpack.c.b16 %v3605, %v3604
      %v3632 = vpack.c.b16 %v3607, %v3606
      %v3633 = vpack.c.b16 %v3609, %v3608
      %v3634 = vpack.c.b16 %v3611, %v3610
      %v3635 = vpack.c.b16 %v3613, %v3612
      %v3636 = vpack.c.b16 %v3615, %v3614
      %v3637 = vpack.c.b16 %v3617, %v3616
      %v3638 = vpack.c.b16 %v3619, %v3618
      %v3639 = vpack.c.b16 %v3621, %v3620
      %v3640 = vpack.c.b16 %v3623, %v3622
      %v3641 = vpack.c.b16 %v3625, %v3624
      %v3646 = vunpack.c.l.b16 %v3590
      %v3647 = vunpack.c.l.b16 %v3591
      %v3648 = vunpack.c.l.b16 %v3592
      %v3649 = vunpack.c.l.b16 %v3593
      %v3650 = vpack.c.b16 %v3647, %v3646
      %v3651 = vpack.c.b16 %v3649, %v3648
      %v3655 = vsel %vm833, %v3626, 0
      %v3658 = vsel %vm833, %v3627, 0
      %v3661 = vsel %vm833, %v3628, 0
      %v3664 = vsel %vm833, %v3629, 0
      %v3667 = vsel %vm833, %v3630, 0
      %v3670 = vsel %vm833, %v3631, 0
      %v3673 = vsel %vm833, %v3632, 0
      %v3676 = vsel %vm833, %v3633, 0
      %v3679 = vsel %vm833, %v3634, 0
      %v3682 = vsel %vm833, %v3635, 0
      %v3685 = vsel %vm833, %v3636, 0
      %v3688 = vsel %vm833, %v3637, 0
      %v3691 = vsel %vm833, %v3638, 0
      %v3694 = vsel %vm833, %v3639, 0
      %v3697 = vsel %vm833, %v3640, 0
      %v3700 = vsel %vm833, %v3641, 0
      %3702 = vmatprep.subr.bf16.mxu0 0
      %3703 = vmatpush1.bf16.msra.mxu0 %v3650
      %3704 = vmatprep.subr.bf16.mxu0 0
      %3705 = vmatpush1.bf16.msra.mxu0 %v3651
      %3706 = vmatprep.subr.bf16.mxu0 0
      %3707 = vmatpush1.bf16.msra.mxu0 0
      %3708 = vmatprep.subr.bf16.mxu0 0
      %3709 = vmatpush1.bf16.msra.mxu0 0
      %3710 = vmatprep.subr.bf16.mxu0 0
      %3711 = vmatpush1.bf16.msra.mxu0 0
      %3712 = vmatprep.subr.bf16.mxu0 0
      %3713 = vmatpush1.bf16.msra.mxu0 0
      %3714 = vmatprep.subr.bf16.mxu0 0
      %3715 = vmatpush1.bf16.msra.mxu0 0
      %3716 = vmatprep.subr.bf16.mxu0 0
      %3717 = vmatpush1.bf16.msra.mxu0 0
      %3718 = vmatprep.subr.bf16.mxu0 0
      %3719 = vmatpush1.bf16.msra.mxu0 0
      %3720 = vmatprep.subr.bf16.mxu0 0
      %3721 = vmatpush1.bf16.msra.mxu0 0
      %3722 = vmatprep.subr.bf16.mxu0 0
      %3723 = vmatpush1.bf16.msra.mxu0 0
      %3724 = vmatprep.subr.bf16.mxu0 0
      %3725 = vmatpush1.bf16.msra.mxu0 0
      %3726 = vmatprep.subr.bf16.mxu0 0
      %3727 = vmatpush1.bf16.msra.mxu0 0
      %3728 = vmatprep.subr.bf16.mxu0 0
      %3729 = vmatpush1.bf16.msra.mxu0 0
      %3730 = vmatprep.subr.bf16.mxu0 0
      %3731 = vmatpush1.bf16.msra.mxu0 0
      %3732 = vmatprep.subr.bf16.mxu0 0
      %3733 = vmatpush1.bf16.msra.mxu0 0
      %3734 = vmatprep.mubr.bf16.mxu0 0
      %3735 = vmatmul.mubr.bf16.gmra.mrb[0].mxu0 %v3655
      %v3736 = vpop.f32.mrb[0].mxu0
      %v3737 = vadd.f32 0.0, %v3736
      %v3738 = vpop.f32.mrb[0].mxu0
      %v3739 = vpop.f32.mrb[0].mxu0
      %v3740 = vadd.f32 0.0, %v3739
      %v3741 = vpop.f32.mrb[0].mxu0
      %3742 = vmatprep.mubr.bf16.mxu0 0
      %3743 = vmatmul.mubr.bf16.gmra.mrb[0].mxu0 %v3658
      %v3744 = vpop.f32.mrb[0].mxu0
      %v3745 = vadd.f32 0.0, %v3744
      %v3746 = vpop.f32.mrb[0].mxu0
      %v3747 = vpop.f32.mrb[0].mxu0
      %v3748 = vadd.f32 0.0, %v3747
      %v3749 = vpop.f32.mrb[0].mxu0
      %3750 = vmatprep.mubr.bf16.mxu0 0
      %3751 = vmatmul.mubr.bf16.gmra.mrb[0].mxu0 %v3661
      %v3752 = vpop.f32.mrb[0].mxu0
      %v3753 = vadd.f32 0.0, %v3752
      %v3754 = vpop.f32.mrb[0].mxu0
      %v3755 = vpop.f32.mrb[0].mxu0
      %v3756 = vadd.f32 0.0, %v3755
      %v3757 = vpop.f32.mrb[0].mxu0
      %3758 = vmatprep.mubr.bf16.mxu0 0
      %3759 = vmatmul.mubr.bf16.gmra.mrb[0].mxu0 %v3664
      %v3760 = vpop.f32.mrb[0].mxu0
      %v3761 = vadd.f32 0.0, %v3760
      %v3762 = vpop.f32.mrb[0].mxu0
      %v3763 = vpop.f32.mrb[0].mxu0
      %v3764 = vadd.f32 0.0, %v3763
      %v3765 = vpop.f32.mrb[0].mxu0
      %3766 = vmatprep.mubr.bf16.mxu0 0
      %3767 = vmatmul.mubr.bf16.gmra.mrb[0].mxu0 %v3667
      %v3768 = vpop.f32.mrb[0].mxu0
      %v3769 = vadd.f32 0.0, %v3768
      %v3770 = vpop.f32.mrb[0].mxu0
      %v3771 = vpop.f32.mrb[0].mxu0
      %v3772 = vadd.f32 0.0, %v3771
      %v3773 = vpop.f32.mrb[0].mxu0
      %3774 = vmatprep.mubr.bf16.mxu0 0
      %3775 = vmatmul.mubr.bf16.gmra.mrb[0].mxu0 %v3670
      %v3776 = vpop.f32.mrb[0].mxu0
      %v3777 = vadd.f32 0.0, %v3776
      %v3778 = vpop.f32.mrb[0].mxu0
      %v3779 = vpop.f32.mrb[0].mxu0
      %v3780 = vadd.f32 0.0, %v3779
      %v3781 = vpop.f32.mrb[0].mxu0
      %3782 = vmatprep.mubr.bf16.mxu0 0
      %3783 = vmatmul.mubr.bf16.gmra.mrb[0].mxu0 %v3673
      %v3784 = vpop.f32.mrb[0].mxu0
      %v3785 = vadd.f32 0.0, %v3784
      %v3786 = vpop.f32.mrb[0].mxu0
      %v3787 = vpop.f32.mrb[0].mxu0
      %v3788 = vadd.f32 0.0, %v3787
      %v3789 = vpop.f32.mrb[0].mxu0
      %3790 = vmatprep.mubr.bf16.mxu0 0
      %3791 = vmatmul.mubr.bf16.gmra.mrb[0].mxu0 %v3676
      %v3792 = vpop.f32.mrb[0].mxu0
      %v3793 = vadd.f32 0.0, %v3792
      %v3794 = vpop.f32.mrb[0].mxu0
      %v3795 = vpop.f32.mrb[0].mxu0
      %v3796 = vadd.f32 0.0, %v3795
      %v3797 = vpop.f32.mrb[0].mxu0
      %3798 = vmatprep.mubr.bf16.mxu0 0
      %3799 = vmatmul.mubr.bf16.gmra.mrb[0].mxu0 %v3679
      %v3800 = vpop.f32.mrb[0].mxu0
      %v3801 = vadd.f32 0.0, %v3800
      %v3802 = vpop.f32.mrb[0].mxu0
      %v3803 = vpop.f32.mrb[0].mxu0
      %v3804 = vadd.f32 0.0, %v3803
      %v3805 = vpop.f32.mrb[0].mxu0
      %3806 = vmatprep.mubr.bf16.mxu0 0
      %3807 = vmatmul.mubr.bf16.gmra.mrb[0].mxu0 %v3682
      %v3808 = vpop.f32.mrb[0].mxu0
      %v3809 = vadd.f32 0.0, %v3808
      %v3810 = vpop.f32.mrb[0].mxu0
      %v3811 = vpop.f32.mrb[0].mxu0
      %v3812 = vadd.f32 0.0, %v3811
      %v3813 = vpop.f32.mrb[0].mxu0
      %3814 = vmatprep.mubr.bf16.mxu0 0
      %3815 = vmatmul.mubr.bf16.gmra.mrb[0].mxu0 %v3685
      %v3816 = vpop.f32.mrb[0].mxu0
      %v3817 = vadd.f32 0.0, %v3816
      %v3818 = vpop.f32.mrb[0].mxu0
      %v3819 = vpop.f32.mrb[0].mxu0
      %v3820 = vadd.f32 0.0, %v3819
      %v3821 = vpop.f32.mrb[0].mxu0
      %3822 = vmatprep.mubr.bf16.mxu0 0
      %3823 = vmatmul.mubr.bf16.gmra.mrb[0].mxu0 %v3688
      %v3824 = vpop.f32.mrb[0].mxu0
      %v3825 = vadd.f32 0.0, %v3824
      %v3826 = vpop.f32.mrb[0].mxu0
      %v3827 = vpop.f32.mrb[0].mxu0
      %v3828 = vadd.f32 0.0, %v3827
      %v3829 = vpop.f32.mrb[0].mxu0
      %3830 = vmatprep.mubr.bf16.mxu0 0
      %3831 = vmatmul.mubr.bf16.gmra.mrb[0].mxu0 %v3691
      %v3832 = vpop.f32.mrb[0].mxu0
      %v3833 = vadd.f32 0.0, %v3832
      %v3834 = vpop.f32.mrb[0].mxu0
      %v3835 = vpop.f32.mrb[0].mxu0
      %v3836 = vadd.f32 0.0, %v3835
      %v3837 = vpop.f32.mrb[0].mxu0
      %3838 = vmatprep.mubr.bf16.mxu0 0
      %3839 = vmatmul.mubr.bf16.gmra.mrb[0].mxu0 %v3694
      %v3840 = vpop.f32.mrb[0].mxu0
      %v3841 = vadd.f32 0.0, %v3840
      %v3842 = vpop.f32.mrb[0].mxu0
      %v3843 = vpop.f32.mrb[0].mxu0
      %v3844 = vadd.f32 0.0, %v3843
      %v3845 = vpop.f32.mrb[0].mxu0
      %3846 = vmatprep.mubr.bf16.mxu0 0
      %3847 = vmatmul.mubr.bf16.gmra.mrb[0].mxu0 %v3697
      %v3848 = vpop.f32.mrb[0].mxu0
      %v3849 = vadd.f32 0.0, %v3848
      %v3850 = vpop.f32.mrb[0].mxu0
      %v3851 = vpop.f32.mrb[0].mxu0
      %v3852 = vadd.f32 0.0, %v3851
      %v3853 = vpop.f32.mrb[0].mxu0
      %3854 = vmatprep.mubr.bf16.mxu0 0
      %3855 = vmatmul.mubr.bf16.gmra.mrb[0].mxu0 %v3700
      %v3856 = vpop.f32.mrb[0].mxu0
      %v3857 = vadd.f32 0.0, %v3856
      %v3858 = vpop.f32.mrb[0].mxu0
      %v3859 = vpop.f32.mrb[0].mxu0
      %v3860 = vadd.f32 0.0, %v3859
      %v3861 = vpop.f32.mrb[0].mxu0
      %3862 = vdwg.mxu0
      %v3863 = vadd.f32 %v3381, %v3737
      %v3864 = vadd.f32 %v3382, %v3740
      %v3865 = vadd.f32 %v3383, %v3745
      %v3866 = vadd.f32 %v3384, %v3748
      %v3867 = vadd.f32 %v3385, %v3753
      %v3868 = vadd.f32 %v3386, %v3756
      %v3869 = vadd.f32 %v3387, %v3761
      %v3870 = vadd.f32 %v3388, %v3764
      %v3871 = vadd.f32 %v3389, %v3769
      %v3872 = vadd.f32 %v3390, %v3772
      %v3873 = vadd.f32 %v3391, %v3777
      %v3874 = vadd.f32 %v3392, %v3780
      %v3875 = vadd.f32 %v3393, %v3785
      %v3876 = vadd.f32 %v3394, %v3788
      %v3877 = vadd.f32 %v3395, %v3793
      %v3878 = vadd.f32 %v3396, %v3796
      %v3879 = vadd.f32 %v3397, %v3801
      %v3880 = vadd.f32 %v3398, %v3804
      %v3881 = vadd.f32 %v3399, %v3809
      %v3882 = vadd.f32 %v3400, %v3812
      %v3883 = vadd.f32 %v3401, %v3817
      %v3884 = vadd.f32 %v3402, %v3820
      %v3885 = vadd.f32 %v3403, %v3825
      %v3886 = vadd.f32 %v3404, %v3828
      %v3887 = vadd.f32 %v3405, %v3833
      %v3888 = vadd.f32 %v3406, %v3836
      %v3889 = vadd.f32 %v3407, %v3841
      %v3890 = vadd.f32 %v3408, %v3844
      %v3891 = vadd.f32 %v3409, %v3849
      %v3892 = vadd.f32 %v3410, %v3852
      %v3893 = vadd.f32 %v3411, %v3857
      %v3894 = vadd.f32 %v3412, %v3860
      %s3895 = sadd.s32 %s348, 2
      %s3896 = smul.u32 %s3895, 3
      %s3897 = smul.addr %s3896, 4
      %s3898 = scalar_lea.vmem %s326, %s3897
      %v3899 = vld [vmem:[%s3898] sm:$0xf]
      %v3900 = vld [vmem:[%s3898 + $0x4] sm:$0xf]
      %v3901 = vld [vmem:[%s3898 + $0xc] sm:$0xf]
      %v3902 = vld [vmem:[%s3898 + $0x10] sm:$0xf]
      %v3903 = vld [vmem:[%s3898 + $0x18] sm:$0xf]
      %v3904 = vld [vmem:[%s3898 + $0x1c] sm:$0xf]
      %v3905 = vld [vmem:[%s3898 + $0x24] sm:$0xf]
      %v3906 = vld [vmem:[%s3898 + $0x28] sm:$0xf]
      %v3907 = vld [vmem:[%s3898 + $0x30] sm:$0xf]
      %v3908 = vld [vmem:[%s3898 + $0x34] sm:$0xf]
      %v3909 = vld [vmem:[%s3898 + $0x3c] sm:$0xf]
      %v3910 = vld [vmem:[%s3898 + $0x40] sm:$0xf]
      %v3911 = vld [vmem:[%s3898 + $0x48] sm:$0xf]
      %v3912 = vld [vmem:[%s3898 + $0x4c] sm:$0xf]
      %v3913 = vld [vmem:[%s3898 + $0x54] sm:$0xf]
      %v3914 = vld [vmem:[%s3898 + $0x58] sm:$0xf]
      %v3915 = vld [vmem:[%s3898 + $0x60] sm:$0xf]
      %v3916 = vld [vmem:[%s3898 + $0x64] sm:$0xf]
      %v3917 = vld [vmem:[%s3898 + $0x6c] sm:$0xf]
      %v3918 = vld [vmem:[%s3898 + $0x70] sm:$0xf]
      %v3919 = vld [vmem:[%s3898 + $0x78] sm:$0xf]
      %v3920 = vld [vmem:[%s3898 + $0x7c] sm:$0xf]
      %v3921 = vld [vmem:[%s3898 + $0x84] sm:$0xf]
      %v3922 = vld [vmem:[%s3898 + $0x88] sm:$0xf]
      %v3923 = vld [vmem:[%s3898 + $0x90] sm:$0xf]
      %v3924 = vld [vmem:[%s3898 + $0x94] sm:$0xf]
      %v3925 = vld [vmem:[%s3898 + $0x9c] sm:$0xf]
      %v3926 = vld [vmem:[%s3898 + $0xa0] sm:$0xf]
      %v3927 = vld [vmem:[%s3898 + $0xa8] sm:$0xf]
      %v3928 = vld [vmem:[%s3898 + $0xac] sm:$0xf]
      %v3929 = vld [vmem:[%s3898 + $0xb4] sm:$0xf]
      %v3930 = vld [vmem:[%s3898 + $0xb8] sm:$0xf]
      %s3931 = scalar_lea.vmem %s4, 96
      %v3932 = vld [vmem:[%s3931] sm:$0xf]
      %v3933 = vld [vmem:[%s3931 + $0x4] sm:$0xf]
      %v3934 = vld [vmem:[%s3931 + $0x8] sm:$0xf]
      %v3935 = vld [vmem:[%s3931 + $0xc] sm:$0xf]
      %v3968 = vunpack.c.l.b16 %v3899
      %v3969 = vunpack.c.l.b16 %v3900
      %v3970 = vunpack.c.l.b16 %v3901
      %v3971 = vunpack.c.l.b16 %v3902
      %v3972 = vunpack.c.l.b16 %v3903
      %v3973 = vunpack.c.l.b16 %v3904
      %v3974 = vunpack.c.l.b16 %v3905
      %v3975 = vunpack.c.l.b16 %v3906
      %v3976 = vunpack.c.l.b16 %v3907
      %v3977 = vunpack.c.l.b16 %v3908
      %v3978 = vunpack.c.l.b16 %v3909
      %v3979 = vunpack.c.l.b16 %v3910
      %v3980 = vunpack.c.l.b16 %v3911
      %v3981 = vunpack.c.l.b16 %v3912
      %v3982 = vunpack.c.l.b16 %v3913
      %v3983 = vunpack.c.l.b16 %v3914
      %v3984 = vunpack.c.l.b16 %v3915
      %v3985 = vunpack.c.l.b16 %v3916
      %v3986 = vunpack.c.l.b16 %v3917
      %v3987 = vunpack.c.l.b16 %v3918
      %v3988 = vunpack.c.l.b16 %v3919
      %v3989 = vunpack.c.l.b16 %v3920
      %v3990 = vunpack.c.l.b16 %v3921
      %v3991 = vunpack.c.l.b16 %v3922
      %v3992 = vunpack.c.l.b16 %v3923
      %v3993 = vunpack.c.l.b16 %v3924
      %v3994 = vunpack.c.l.b16 %v3925
      %v3995 = vunpack.c.l.b16 %v3926
      %v3996 = vunpack.c.l.b16 %v3927
      %v3997 = vunpack.c.l.b16 %v3928
      %v3998 = vunpack.c.l.b16 %v3929
      %v3999 = vunpack.c.l.b16 %v3930
      %v4000 = vpack.c.b16 %v3969, %v3968
      %v4001 = vpack.c.b16 %v3971, %v3970
      %v4002 = vpack.c.b16 %v3973, %v3972
      %v4003 = vpack.c.b16 %v3975, %v3974
      %v4004 = vpack.c.b16 %v3977, %v3976
      %v4005 = vpack.c.b16 %v3979, %v3978
      %v4006 = vpack.c.b16 %v3981, %v3980
      %v4007 = vpack.c.b16 %v3983, %v3982
      %v4008 = vpack.c.b16 %v3985, %v3984
      %v4009 = vpack.c.b16 %v3987, %v3986
      %v4010 = vpack.c.b16 %v3989, %v3988
      %v4011 = vpack.c.b16 %v3991, %v3990
      %v4012 = vpack.c.b16 %v3993, %v3992
      %v4013 = vpack.c.b16 %v3995, %v3994
      %v4014 = vpack.c.b16 %v3997, %v3996
      %v4015 = vpack.c.b16 %v3999, %v3998
      %v4020 = vunpack.c.l.b16 %v3932
      %v4021 = vunpack.c.l.b16 %v3933
      %v4022 = vunpack.c.l.b16 %v3934
      %v4023 = vunpack.c.l.b16 %v3935
      %v4024 = vpack.c.b16 %v4021, %v4020
      %v4025 = vpack.c.b16 %v4023, %v4022
      %v4029 = vsel %vm833, %v4000, 0
      %v4032 = vsel %vm833, %v4001, 0
      %v4035 = vsel %vm833, %v4002, 0
      %v4038 = vsel %vm833, %v4003, 0
      %v4041 = vsel %vm833, %v4004, 0
      %v4044 = vsel %vm833, %v4005, 0
      %v4047 = vsel %vm833, %v4006, 0
      %v4050 = vsel %vm833, %v4007, 0
      %v4053 = vsel %vm833, %v4008, 0
      %v4056 = vsel %vm833, %v4009, 0
      %v4059 = vsel %vm833, %v4010, 0
      %v4062 = vsel %vm833, %v4011, 0
      %v4065 = vsel %vm833, %v4012, 0
      %v4068 = vsel %vm833, %v4013, 0
      %v4071 = vsel %vm833, %v4014, 0
      %v4074 = vsel %vm833, %v4015, 0
      %4076 = vmatprep.subr.bf16.mxu0 0
      %4077 = vmatpush1.bf16.msra.mxu0 %v4024
      %4078 = vmatprep.subr.bf16.mxu0 0
      %4079 = vmatpush1.bf16.msra.mxu0 %v4025
      %4080 = vmatprep.subr.bf16.mxu0 0
      %4081 = vmatpush1.bf16.msra.mxu0 0
      %4082 = vmatprep.subr.bf16.mxu0 0
      %4083 = vmatpush1.bf16.msra.mxu0 0
      %4084 = vmatprep.subr.bf16.mxu0 0
      %4085 = vmatpush1.bf16.msra.mxu0 0
      %4086 = vmatprep.subr.bf16.mxu0 0
      %4087 = vmatpush1.bf16.msra.mxu0 0
      %4088 = vmatprep.subr.bf16.mxu0 0
      %4089 = vmatpush1.bf16.msra.mxu0 0
      %4090 = vmatprep.subr.bf16.mxu0 0
      %4091 = vmatpush1.bf16.msra.mxu0 0
      %4092 = vmatprep.subr.bf16.mxu0 0
      %4093 = vmatpush1.bf16.msra.mxu0 0
      %4094 = vmatprep.subr.bf16.mxu0 0
      %4095 = vmatpush1.bf16.msra.mxu0 0
      %4096 = vmatprep.subr.bf16.mxu0 0
      %4097 = vmatpush1.bf16.msra.mxu0 0
      %4098 = vmatprep.subr.bf16.mxu0 0
      %4099 = vmatpush1.bf16.msra.mxu0 0
      %4100 = vmatprep.subr.bf16.mxu0 0
      %4101 = vmatpush1.bf16.msra.mxu0 0
      %4102 = vmatprep.subr.bf16.mxu0 0
      %4103 = vmatpush1.bf16.msra.mxu0 0
      %4104 = vmatprep.subr.bf16.mxu0 0
      %4105 = vmatpush1.bf16.msra.mxu0 0
      %4106 = vmatprep.subr.bf16.mxu0 0
      %4107 = vmatpush1.bf16.msra.mxu0 0
      %4108 = vmatprep.mubr.bf16.mxu0 0
      %4109 = vmatmul.mubr.bf16.gmra.mrb[0].mxu0 %v4029
      %v4110 = vpop.f32.mrb[0].mxu0
      %v4111 = vadd.f32 0.0, %v4110
      %v4112 = vpop.f32.mrb[0].mxu0
      %v4113 = vpop.f32.mrb[0].mxu0
      %v4114 = vadd.f32 0.0, %v4113
      %v4115 = vpop.f32.mrb[0].mxu0
      %4116 = vmatprep.mubr.bf16.mxu0 0
      %4117 = vmatmul.mubr.bf16.gmra.mrb[0].mxu0 %v4032
      %v4118 = vpop.f32.mrb[0].mxu0
      %v4119 = vadd.f32 0.0, %v4118
      %v4120 = vpop.f32.mrb[0].mxu0
      %v4121 = vpop.f32.mrb[0].mxu0
      %v4122 = vadd.f32 0.0, %v4121
      %v4123 = vpop.f32.mrb[0].mxu0
      %4124 = vmatprep.mubr.bf16.mxu0 0
      %4125 = vmatmul.mubr.bf16.gmra.mrb[0].mxu0 %v4035
      %v4126 = vpop.f32.mrb[0].mxu0
      %v4127 = vadd.f32 0.0, %v4126
      %v4128 = vpop.f32.mrb[0].mxu0
      %v4129 = vpop.f32.mrb[0].mxu0
      %v4130 = vadd.f32 0.0, %v4129
      %v4131 = vpop.f32.mrb[0].mxu0
      %4132 = vmatprep.mubr.bf16.mxu0 0
      %4133 = vmatmul.mubr.bf16.gmra.mrb[0].mxu0 %v4038
      %v4134 = vpop.f32.mrb[0].mxu0
      %v4135 = vadd.f32 0.0, %v4134
      %v4136 = vpop.f32.mrb[0].mxu0
      %v4137 = vpop.f32.mrb[0].mxu0
      %v4138 = vadd.f32 0.0, %v4137
      %v4139 = vpop.f32.mrb[0].mxu0
      %4140 = vmatprep.mubr.bf16.mxu0 0
      %4141 = vmatmul.mubr.bf16.gmra.mrb[0].mxu0 %v4041
      %v4142 = vpop.f32.mrb[0].mxu0
      %v4143 = vadd.f32 0.0, %v4142
      %v4144 = vpop.f32.mrb[0].mxu0
      %v4145 = vpop.f32.mrb[0].mxu0
      %v4146 = vadd.f32 0.0, %v4145
      %v4147 = vpop.f32.mrb[0].mxu0
      %4148 = vmatprep.mubr.bf16.mxu0 0
      %4149 = vmatmul.mubr.bf16.gmra.mrb[0].mxu0 %v4044
      %v4150 = vpop.f32.mrb[0].mxu0
      %v4151 = vadd.f32 0.0, %v4150
      %v4152 = vpop.f32.mrb[0].mxu0
      %v4153 = vpop.f32.mrb[0].mxu0
      %v4154 = vadd.f32 0.0, %v4153
      %v4155 = vpop.f32.mrb[0].mxu0
      %4156 = vmatprep.mubr.bf16.mxu0 0
      %4157 = vmatmul.mubr.bf16.gmra.mrb[0].mxu0 %v4047
      %v4158 = vpop.f32.mrb[0].mxu0
      %v4159 = vadd.f32 0.0, %v4158
      %v4160 = vpop.f32.mrb[0].mxu0
      %v4161 = vpop.f32.mrb[0].mxu0
      %v4162 = vadd.f32 0.0, %v4161
      %v4163 = vpop.f32.mrb[0].mxu0
      %4164 = vmatprep.mubr.bf16.mxu0 0
      %4165 = vmatmul.mubr.bf16.gmra.mrb[0].mxu0 %v4050
      %v4166 = vpop.f32.mrb[0].mxu0
      %v4167 = vadd.f32 0.0, %v4166
      %v4168 = vpop.f32.mrb[0].mxu0
      %v4169 = vpop.f32.mrb[0].mxu0
      %v4170 = vadd.f32 0.0, %v4169
      %v4171 = vpop.f32.mrb[0].mxu0
      %4172 = vmatprep.mubr.bf16.mxu0 0
      %4173 = vmatmul.mubr.bf16.gmra.mrb[0].mxu0 %v4053
      %v4174 = vpop.f32.mrb[0].mxu0
      %v4175 = vadd.f32 0.0, %v4174
      %v4176 = vpop.f32.mrb[0].mxu0
      %v4177 = vpop.f32.mrb[0].mxu0
      %v4178 = vadd.f32 0.0, %v4177
      %v4179 = vpop.f32.mrb[0].mxu0
      %4180 = vmatprep.mubr.bf16.mxu0 0
      %4181 = vmatmul.mubr.bf16.gmra.mrb[0].mxu0 %v4056
      %v4182 = vpop.f32.mrb[0].mxu0
      %v4183 = vadd.f32 0.0, %v4182
      %v4184 = vpop.f32.mrb[0].mxu0
      %v4185 = vpop.f32.mrb[0].mxu0
      %v4186 = vadd.f32 0.0, %v4185
      %v4187 = vpop.f32.mrb[0].mxu0
      %4188 = vmatprep.mubr.bf16.mxu0 0
      %4189 = vmatmul.mubr.bf16.gmra.mrb[0].mxu0 %v4059
      %v4190 = vpop.f32.mrb[0].mxu0
      %v4191 = vadd.f32 0.0, %v4190
      %v4192 = vpop.f32.mrb[0].mxu0
      %v4193 = vpop.f32.mrb[0].mxu0
      %v4194 = vadd.f32 0.0, %v4193
      %v4195 = vpop.f32.mrb[0].mxu0
      %4196 = vmatprep.mubr.bf16.mxu0 0
      %4197 = vmatmul.mubr.bf16.gmra.mrb[0].mxu0 %v4062
      %v4198 = vpop.f32.mrb[0].mxu0
      %v4199 = vadd.f32 0.0, %v4198
      %v4200 = vpop.f32.mrb[0].mxu0
      %v4201 = vpop.f32.mrb[0].mxu0
      %v4202 = vadd.f32 0.0, %v4201
      %v4203 = vpop.f32.mrb[0].mxu0
      %4204 = vmatprep.mubr.bf16.mxu0 0
      %4205 = vmatmul.mubr.bf16.gmra.mrb[0].mxu0 %v4065
      %v4206 = vpop.f32.mrb[0].mxu0
      %v4207 = vadd.f32 0.0, %v4206
      %v4208 = vpop.f32.mrb[0].mxu0
      %v4209 = vpop.f32.mrb[0].mxu0
      %v4210 = vadd.f32 0.0, %v4209
      %v4211 = vpop.f32.mrb[0].mxu0
      %4212 = vmatprep.mubr.bf16.mxu0 0
      %4213 = vmatmul.mubr.bf16.gmra.mrb[0].mxu0 %v4068
      %v4214 = vpop.f32.mrb[0].mxu0
      %v4215 = vadd.f32 0.0, %v4214
      %v4216 = vpop.f32.mrb[0].mxu0
      %v4217 = vpop.f32.mrb[0].mxu0
      %v4218 = vadd.f32 0.0, %v4217
      %v4219 = vpop.f32.mrb[0].mxu0
      %4220 = vmatprep.mubr.bf16.mxu0 0
      %4221 = vmatmul.mubr.bf16.gmra.mrb[0].mxu0 %v4071
      %v4222 = vpop.f32.mrb[0].mxu0
      %v4223 = vadd.f32 0.0, %v4222
      %v4224 = vpop.f32.mrb[0].mxu0
      %v4225 = vpop.f32.mrb[0].mxu0
      %v4226 = vadd.f32 0.0, %v4225
      %v4227 = vpop.f32.mrb[0].mxu0
      %4228 = vmatprep.mubr.bf16.mxu0 0
      %4229 = vmatmul.mubr.bf16.gmra.mrb[0].mxu0 %v4074
      %v4230 = vpop.f32.mrb[0].mxu0
      %v4231 = vadd.f32 0.0, %v4230
      %v4232 = vpop.f32.mrb[0].mxu0
      %v4233 = vpop.f32.mrb[0].mxu0
      %v4234 = vadd.f32 0.0, %v4233
      %v4235 = vpop.f32.mrb[0].mxu0
      %4236 = vdwg.mxu0
      %v4237 = vadd.f32 %v3863, %v4111
      %v4238 = vadd.f32 %v3864, %v4114
      %v4239 = vadd.f32 %v3865, %v4119
      %v4240 = vadd.f32 %v3866, %v4122
      %v4241 = vadd.f32 %v3867, %v4127
      %v4242 = vadd.f32 %v3868, %v4130
      %v4243 = vadd.f32 %v3869, %v4135
      %v4244 = vadd.f32 %v3870, %v4138
      %v4245 = vadd.f32 %v3871, %v4143
      %v4246 = vadd.f32 %v3872, %v4146
      %v4247 = vadd.f32 %v3873, %v4151
      %v4248 = vadd.f32 %v3874, %v4154
      %v4249 = vadd.f32 %v3875, %v4159
      %v4250 = vadd.f32 %v3876, %v4162
      %v4251 = vadd.f32 %v3877, %v4167
      %v4252 = vadd.f32 %v3878, %v4170
      %v4253 = vadd.f32 %v3879, %v4175
      %v4254 = vadd.f32 %v3880, %v4178
      %v4255 = vadd.f32 %v3881, %v4183
      %v4256 = vadd.f32 %v3882, %v4186
      %v4257 = vadd.f32 %v3883, %v4191
      %v4258 = vadd.f32 %v3884, %v4194
      %v4259 = vadd.f32 %v3885, %v4199
      %v4260 = vadd.f32 %v3886, %v4202
      %v4261 = vadd.f32 %v3887, %v4207
      %v4262 = vadd.f32 %v3888, %v4210
      %v4263 = vadd.f32 %v3889, %v4215
      %v4264 = vadd.f32 %v3890, %v4218
      %v4265 = vadd.f32 %v3891, %v4223
      %v4266 = vadd.f32 %v3892, %v4226
      %v4267 = vadd.f32 %v3893, %v4231
      %v4268 = vadd.f32 %v3894, %v4234
      %v4269 = vld [vmem:[%s3898] sm:$0xf]
      %v4270 = vld [vmem:[%s3898 + $0x4] sm:$0xf]
      %v4271 = vld [vmem:[%s3898 + $0x8] sm:$0x1]
      %v4272 = vld [vmem:[%s3898 + $0xc] sm:$0xf]
      %v4273 = vld [vmem:[%s3898 + $0x10] sm:$0xf]
      %v4274 = vld [vmem:[%s3898 + $0x14] sm:$0x1]
      %v4275 = vld [vmem:[%s3898 + $0x18] sm:$0xf]
      %v4276 = vld [vmem:[%s3898 + $0x1c] sm:$0xf]
      %v4277 = vld [vmem:[%s3898 + $0x20] sm:$0x1]
      %v4278 = vld [vmem:[%s3898 + $0x24] sm:$0xf]
      %v4279 = vld [vmem:[%s3898 + $0x28] sm:$0xf]
      %v4280 = vld [vmem:[%s3898 + $0x2c] sm:$0x1]
      %v4281 = vld [vmem:[%s3898 + $0x30] sm:$0xf]
      %v4282 = vld [vmem:[%s3898 + $0x34] sm:$0xf]
      %v4283 = vld [vmem:[%s3898 + $0x38] sm:$0x1]
      %v4284 = vld [vmem:[%s3898 + $0x3c] sm:$0xf]
      %v4285 = vld [vmem:[%s3898 + $0x40] sm:$0xf]
      %v4286 = vld [vmem:[%s3898 + $0x44] sm:$0x1]
      %v4287 = vld [vmem:[%s3898 + $0x48] sm:$0xf]
      %v4288 = vld [vmem:[%s3898 + $0x4c] sm:$0xf]
      %v4289 = vld [vmem:[%s3898 + $0x50] sm:$0x1]
      %v4290 = vld [vmem:[%s3898 + $0x54] sm:$0xf]
      %v4291 = vld [vmem:[%s3898 + $0x58] sm:$0xf]
      %v4292 = vld [vmem:[%s3898 + $0x5c] sm:$0x1]
      %v4293 = vld [vmem:[%s3898 + $0x60] sm:$0xf]
      %v4294 = vld [vmem:[%s3898 + $0x64] sm:$0xf]
      %v4295 = vld [vmem:[%s3898 + $0x68] sm:$0x1]
      %v4296 = vld [vmem:[%s3898 + $0x6c] sm:$0xf]
      %v4297 = vld [vmem:[%s3898 + $0x70] sm:$0xf]
      %v4298 = vld [vmem:[%s3898 + $0x74] sm:$0x1]
      %v4299 = vld [vmem:[%s3898 + $0x78] sm:$0xf]
      %v4300 = vld [vmem:[%s3898 + $0x7c] sm:$0xf]
      %v4301 = vld [vmem:[%s3898 + $0x80] sm:$0x1]
      %v4302 = vld [vmem:[%s3898 + $0x84] sm:$0xf]
      %v4303 = vld [vmem:[%s3898 + $0x88] sm:$0xf]
      %v4304 = vld [vmem:[%s3898 + $0x8c] sm:$0x1]
      %v4305 = vld [vmem:[%s3898 + $0x90] sm:$0xf]
      %v4306 = vld [vmem:[%s3898 + $0x94] sm:$0xf]
      %v4307 = vld [vmem:[%s3898 + $0x98] sm:$0x1]
      %v4308 = vld [vmem:[%s3898 + $0x9c] sm:$0xf]
      %v4309 = vld [vmem:[%s3898 + $0xa0] sm:$0xf]
      %v4310 = vld [vmem:[%s3898 + $0xa4] sm:$0x1]
      %v4311 = vld [vmem:[%s3898 + $0xa8] sm:$0xf]
      %v4312 = vld [vmem:[%s3898 + $0xac] sm:$0xf]
      %v4313 = vld [vmem:[%s3898 + $0xb0] sm:$0x1]
      %v4314 = vld [vmem:[%s3898 + $0xb4] sm:$0xf]
      %v4315 = vld [vmem:[%s3898 + $0xb8] sm:$0xf]
      %v4316 = vld [vmem:[%s3898 + $0xbc] sm:$0x1]
      %v4318 = vshrl.u32 %v4269, 16
      %v4320 = vrot.slane %v4318, 4
      %v4321 = vshll.u32 %v4269, 16
      %v4323 = vrot.slane %v4321, 5
      %v4324 = vor.u32 %v4320, %v4323
      %v4325 = vrot.slane %v4324, 4
      %v4327 = vshll.u32 %v4270, 16
      %v4329 = vrot.slane %v4327, 5
      %v4330 = vsel %vm1125, %v4325, %v4329
      %v4331 = vshrl.u32 %v4270, 16
      %v4333 = vrot.slane %v4331, 4
      %v4334 = vor.u32 %v4333, %v4329
      %v4335 = vrot.slane %v4334, 4
      %v4337 = vshll.u32 %v4271, 16
      %v4339 = vrot.slane %v4337, 5
      %v4340 = vsel %vm1125, %v4335, %v4339
      %v4342 = vshrl.u32 %v4272, 16
      %v4344 = vrot.slane %v4342, 4
      %v4345 = vshll.u32 %v4272, 16
      %v4347 = vrot.slane %v4345, 5
      %v4348 = vor.u32 %v4344, %v4347
      %v4349 = vrot.slane %v4348, 4
      %v4351 = vshll.u32 %v4273, 16
      %v4353 = vrot.slane %v4351, 5
      %v4354 = vsel %vm1125, %v4349, %v4353
      %v4355 = vshrl.u32 %v4273, 16
      %v4357 = vrot.slane %v4355, 4
      %v4358 = vor.u32 %v4357, %v4353
      %v4359 = vrot.slane %v4358, 4
      %v4361 = vshll.u32 %v4274, 16
      %v4363 = vrot.slane %v4361, 5
      %v4364 = vsel %vm1125, %v4359, %v4363
      %v4366 = vshrl.u32 %v4275, 16
      %v4368 = vrot.slane %v4366, 4
      %v4369 = vshll.u32 %v4275, 16
      %v4371 = vrot.slane %v4369, 5
      %v4372 = vor.u32 %v4368, %v4371
      %v4373 = vrot.slane %v4372, 4
      %v4375 = vshll.u32 %v4276, 16
      %v4377 = vrot.slane %v4375, 5
      %v4378 = vsel %vm1125, %v4373, %v4377
      %v4379 = vshrl.u32 %v4276, 16
      %v4381 = vrot.slane %v4379, 4
      %v4382 = vor.u32 %v4381, %v4377
      %v4383 = vrot.slane %v4382, 4
      %v4385 = vshll.u32 %v4277, 16
      %v4387 = vrot.slane %v4385, 5
      %v4388 = vsel %vm1125, %v4383, %v4387
      %v4390 = vshrl.u32 %v4278, 16
      %v4392 = vrot.slane %v4390, 4
      %v4393 = vshll.u32 %v4278, 16
      %v4395 = vrot.slane %v4393, 5
      %v4396 = vor.u32 %v4392, %v4395
      %v4397 = vrot.slane %v4396, 4
      %v4399 = vshll.u32 %v4279, 16
      %v4401 = vrot.slane %v4399, 5
      %v4402 = vsel %vm1125, %v4397, %v4401
      %v4403 = vshrl.u32 %v4279, 16
      %v4405 = vrot.slane %v4403, 4
      %v4406 = vor.u32 %v4405, %v4401
      %v4407 = vrot.slane %v4406, 4
      %v4409 = vshll.u32 %v4280, 16
      %v4411 = vrot.slane %v4409, 5
      %v4412 = vsel %vm1125, %v4407, %v4411
      %v4414 = vshrl.u32 %v4281, 16
      %v4416 = vrot.slane %v4414, 4
      %v4417 = vshll.u32 %v4281, 16
      %v4419 = vrot.slane %v4417, 5
      %v4420 = vor.u32 %v4416, %v4419
      %v4421 = vrot.slane %v4420, 4
      %v4423 = vshll.u32 %v4282, 16
      %v4425 = vrot.slane %v4423, 5
      %v4426 = vsel %vm1125, %v4421, %v4425
      %v4427 = vshrl.u32 %v4282, 16
      %v4429 = vrot.slane %v4427, 4
      %v4430 = vor.u32 %v4429, %v4425
      %v4431 = vrot.slane %v4430, 4
      %v4433 = vshll.u32 %v4283, 16
      %v4435 = vrot.slane %v4433, 5
      %v4436 = vsel %vm1125, %v4431, %v4435
      %v4438 = vshrl.u32 %v4284, 16
      %v4440 = vrot.slane %v4438, 4
      %v4441 = vshll.u32 %v4284, 16
      %v4443 = vrot.slane %v4441, 5
      %v4444 = vor.u32 %v4440, %v4443
      %v4445 = vrot.slane %v4444, 4
      %v4447 = vshll.u32 %v4285, 16
      %v4449 = vrot.slane %v4447, 5
      %v4450 = vsel %vm1125, %v4445, %v4449
      %v4451 = vshrl.u32 %v4285, 16
      %v4453 = vrot.slane %v4451, 4
      %v4454 = vor.u32 %v4453, %v4449
      %v4455 = vrot.slane %v4454, 4
      %v4457 = vshll.u32 %v4286, 16
      %v4459 = vrot.slane %v4457, 5
      %v4460 = vsel %vm1125, %v4455, %v4459
      %v4462 = vshrl.u32 %v4287, 16
      %v4464 = vrot.slane %v4462, 4
      %v4465 = vshll.u32 %v4287, 16
      %v4467 = vrot.slane %v4465, 5
      %v4468 = vor.u32 %v4464, %v4467
      %v4469 = vrot.slane %v4468, 4
      %v4471 = vshll.u32 %v4288, 16
      %v4473 = vrot.slane %v4471, 5
      %v4474 = vsel %vm1125, %v4469, %v4473
      %v4475 = vshrl.u32 %v4288, 16
      %v4477 = vrot.slane %v4475, 4
      %v4478 = vor.u32 %v4477, %v4473
      %v4479 = vrot.slane %v4478, 4
      %v4481 = vshll.u32 %v4289, 16
      %v4483 = vrot.slane %v4481, 5
      %v4484 = vsel %vm1125, %v4479, %v4483
      %v4486 = vshrl.u32 %v4290, 16
      %v4488 = vrot.slane %v4486, 4
      %v4489 = vshll.u32 %v4290, 16
      %v4491 = vrot.slane %v4489, 5
      %v4492 = vor.u32 %v4488, %v4491
      %v4493 = vrot.slane %v4492, 4
      %v4495 = vshll.u32 %v4291, 16
      %v4497 = vrot.slane %v4495, 5
      %v4498 = vsel %vm1125, %v4493, %v4497
      %v4499 = vshrl.u32 %v4291, 16
      %v4501 = vrot.slane %v4499, 4
      %v4502 = vor.u32 %v4501, %v4497
      %v4503 = vrot.slane %v4502, 4
      %v4505 = vshll.u32 %v4292, 16
      %v4507 = vrot.slane %v4505, 5
      %v4508 = vsel %vm1125, %v4503, %v4507
      %v4510 = vshrl.u32 %v4293, 16
      %v4512 = vrot.slane %v4510, 4
      %v4513 = vshll.u32 %v4293, 16
      %v4515 = vrot.slane %v4513, 5
      %v4516 = vor.u32 %v4512, %v4515
      %v4517 = vrot.slane %v4516, 4
      %v4519 = vshll.u32 %v4294, 16
      %v4521 = vrot.slane %v4519, 5
      %v4522 = vsel %vm1125, %v4517, %v4521
      %v4523 = vshrl.u32 %v4294, 16
      %v4525 = vrot.slane %v4523, 4
      %v4526 = vor.u32 %v4525, %v4521
      %v4527 = vrot.slane %v4526, 4
      %v4529 = vshll.u32 %v4295, 16
      %v4531 = vrot.slane %v4529, 5
      %v4532 = vsel %vm1125, %v4527, %v4531
      %v4534 = vshrl.u32 %v4296, 16
      %v4536 = vrot.slane %v4534, 4
      %v4537 = vshll.u32 %v4296, 16
      %v4539 = vrot.slane %v4537, 5
      %v4540 = vor.u32 %v4536, %v4539
      %v4541 = vrot.slane %v4540, 4
      %v4543 = vshll.u32 %v4297, 16
      %v4545 = vrot.slane %v4543, 5
      %v4546 = vsel %vm1125, %v4541, %v4545
      %v4547 = vshrl.u32 %v4297, 16
      %v4549 = vrot.slane %v4547, 4
      %v4550 = vor.u32 %v4549, %v4545
      %v4551 = vrot.slane %v4550, 4
      %v4553 = vshll.u32 %v4298, 16
      %v4555 = vrot.slane %v4553, 5
      %v4556 = vsel %vm1125, %v4551, %v4555
      %v4558 = vshrl.u32 %v4299, 16
      %v4560 = vrot.slane %v4558, 4
      %v4561 = vshll.u32 %v4299, 16
      %v4563 = vrot.slane %v4561, 5
      %v4564 = vor.u32 %v4560, %v4563
      %v4565 = vrot.slane %v4564, 4
      %v4567 = vshll.u32 %v4300, 16
      %v4569 = vrot.slane %v4567, 5
      %v4570 = vsel %vm1125, %v4565, %v4569
      %v4571 = vshrl.u32 %v4300, 16
      %v4573 = vrot.slane %v4571, 4
      %v4574 = vor.u32 %v4573, %v4569
      %v4575 = vrot.slane %v4574, 4
      %v4577 = vshll.u32 %v4301, 16
      %v4579 = vrot.slane %v4577, 5
      %v4580 = vsel %vm1125, %v4575, %v4579
      %v4582 = vshrl.u32 %v4302, 16
      %v4584 = vrot.slane %v4582, 4
      %v4585 = vshll.u32 %v4302, 16
      %v4587 = vrot.slane %v4585, 5
      %v4588 = vor.u32 %v4584, %v4587
      %v4589 = vrot.slane %v4588, 4
      %v4591 = vshll.u32 %v4303, 16
      %v4593 = vrot.slane %v4591, 5
      %v4594 = vsel %vm1125, %v4589, %v4593
      %v4595 = vshrl.u32 %v4303, 16
      %v4597 = vrot.slane %v4595, 4
      %v4598 = vor.u32 %v4597, %v4593
      %v4599 = vrot.slane %v4598, 4
      %v4601 = vshll.u32 %v4304, 16
      %v4603 = vrot.slane %v4601, 5
      %v4604 = vsel %vm1125, %v4599, %v4603
      %v4606 = vshrl.u32 %v4305, 16
      %v4608 = vrot.slane %v4606, 4
      %v4609 = vshll.u32 %v4305, 16
      %v4611 = vrot.slane %v4609, 5
      %v4612 = vor.u32 %v4608, %v4611
      %v4613 = vrot.slane %v4612, 4
      %v4615 = vshll.u32 %v4306, 16
      %v4617 = vrot.slane %v4615, 5
      %v4618 = vsel %vm1125, %v4613, %v4617
      %v4619 = vshrl.u32 %v4306, 16
      %v4621 = vrot.slane %v4619, 4
      %v4622 = vor.u32 %v4621, %v4617
      %v4623 = vrot.slane %v4622, 4
      %v4625 = vshll.u32 %v4307, 16
      %v4627 = vrot.slane %v4625, 5
      %v4628 = vsel %vm1125, %v4623, %v4627
      %v4630 = vshrl.u32 %v4308, 16
      %v4632 = vrot.slane %v4630, 4
      %v4633 = vshll.u32 %v4308, 16
      %v4635 = vrot.slane %v4633, 5
      %v4636 = vor.u32 %v4632, %v4635
      %v4637 = vrot.slane %v4636, 4
      %v4639 = vshll.u32 %v4309, 16
      %v4641 = vrot.slane %v4639, 5
      %v4642 = vsel %vm1125, %v4637, %v4641
      %v4643 = vshrl.u32 %v4309, 16
      %v4645 = vrot.slane %v4643, 4
      %v4646 = vor.u32 %v4645, %v4641
      %v4647 = vrot.slane %v4646, 4
      %v4649 = vshll.u32 %v4310, 16
      %v4651 = vrot.slane %v4649, 5
      %v4652 = vsel %vm1125, %v4647, %v4651
      %v4654 = vshrl.u32 %v4311, 16
      %v4656 = vrot.slane %v4654, 4
      %v4657 = vshll.u32 %v4311, 16
      %v4659 = vrot.slane %v4657, 5
      %v4660 = vor.u32 %v4656, %v4659
      %v4661 = vrot.slane %v4660, 4
      %v4663 = vshll.u32 %v4312, 16
      %v4665 = vrot.slane %v4663, 5
      %v4666 = vsel %vm1125, %v4661, %v4665
      %v4667 = vshrl.u32 %v4312, 16
      %v4669 = vrot.slane %v4667, 4
      %v4670 = vor.u32 %v4669, %v4665
      %v4671 = vrot.slane %v4670, 4
      %v4673 = vshll.u32 %v4313, 16
      %v4675 = vrot.slane %v4673, 5
      %v4676 = vsel %vm1125, %v4671, %v4675
      %v4678 = vshrl.u32 %v4314, 16
      %v4680 = vrot.slane %v4678, 4
      %v4681 = vshll.u32 %v4314, 16
      %v4683 = vrot.slane %v4681, 5
      %v4684 = vor.u32 %v4680, %v4683
      %v4685 = vrot.slane %v4684, 4
      %v4687 = vshll.u32 %v4315, 16
      %v4689 = vrot.slane %v4687, 5
      %v4690 = vsel %vm1125, %v4685, %v4689
      %v4691 = vshrl.u32 %v4315, 16
      %v4693 = vrot.slane %v4691, 4
      %v4694 = vor.u32 %v4693, %v4689
      %v4695 = vrot.slane %v4694, 4
      %v4697 = vshll.u32 %v4316, 16
      %v4699 = vrot.slane %v4697, 5
      %v4700 = vsel %vm1125, %v4695, %v4699
      %s4701 = scalar_lea.vmem %s4, 112
      %v4702 = vld [vmem:[%s4701] sm:$0xf]
      %v4703 = vld [vmem:[%s4701 + $0x4] sm:$0xf]
      %v4704 = vld [vmem:[%s4701 + $0x8] sm:$0xf]
      %v4705 = vld [vmem:[%s4701 + $0xc] sm:$0xf]
      %v4706 = vunpack.c.l.b16 %v4330
      %v4707 = vunpack.c.l.b16 %v4340
      %v4708 = vunpack.c.l.b16 %v4354
      %v4709 = vunpack.c.l.b16 %v4364
      %v4710 = vunpack.c.l.b16 %v4378
      %v4711 = vunpack.c.l.b16 %v4388
      %v4712 = vunpack.c.l.b16 %v4402
      %v4713 = vunpack.c.l.b16 %v4412
      %v4714 = vunpack.c.l.b16 %v4426
      %v4715 = vunpack.c.l.b16 %v4436
      %v4716 = vunpack.c.l.b16 %v4450
      %v4717 = vunpack.c.l.b16 %v4460
      %v4718 = vunpack.c.l.b16 %v4474
      %v4719 = vunpack.c.l.b16 %v4484
      %v4720 = vunpack.c.l.b16 %v4498
      %v4721 = vunpack.c.l.b16 %v4508
      %v4722 = vunpack.c.l.b16 %v4522
      %v4723 = vunpack.c.l.b16 %v4532
      %v4724 = vunpack.c.l.b16 %v4546
      %v4725 = vunpack.c.l.b16 %v4556
      %v4726 = vunpack.c.l.b16 %v4570
      %v4727 = vunpack.c.l.b16 %v4580
      %v4728 = vunpack.c.l.b16 %v4594
      %v4729 = vunpack.c.l.b16 %v4604
      %v4730 = vunpack.c.l.b16 %v4618
      %v4731 = vunpack.c.l.b16 %v4628
      %v4732 = vunpack.c.l.b16 %v4642
      %v4733 = vunpack.c.l.b16 %v4652
      %v4734 = vunpack.c.l.b16 %v4666
      %v4735 = vunpack.c.l.b16 %v4676
      %v4736 = vunpack.c.l.b16 %v4690
      %v4737 = vunpack.c.l.b16 %v4700
      %v4738 = vpack.c.b16 %v4707, %v4706
      %v4739 = vpack.c.b16 %v4709, %v4708
      %v4740 = vpack.c.b16 %v4711, %v4710
      %v4741 = vpack.c.b16 %v4713, %v4712
      %v4742 = vpack.c.b16 %v4715, %v4714
      %v4743 = vpack.c.b16 %v4717, %v4716
      %v4744 = vpack.c.b16 %v4719, %v4718
      %v4745 = vpack.c.b16 %v4721, %v4720
      %v4746 = vpack.c.b16 %v4723, %v4722
      %v4747 = vpack.c.b16 %v4725, %v4724
      %v4748 = vpack.c.b16 %v4727, %v4726
      %v4749 = vpack.c.b16 %v4729, %v4728
      %v4750 = vpack.c.b16 %v4731, %v4730
      %v4751 = vpack.c.b16 %v4733, %v4732
      %v4752 = vpack.c.b16 %v4735, %v4734
      %v4753 = vpack.c.b16 %v4737, %v4736
      %v4758 = vunpack.c.l.b16 %v4702
      %v4759 = vunpack.c.l.b16 %v4703
      %v4760 = vunpack.c.l.b16 %v4704
      %v4761 = vunpack.c.l.b16 %v4705
      %v4762 = vpack.c.b16 %v4759, %v4758
      %v4763 = vpack.c.b16 %v4761, %v4760
      %v4767 = vsel %vm833, %v4738, 0
      %v4770 = vsel %vm833, %v4739, 0
      %v4773 = vsel %vm833, %v4740, 0
      %v4776 = vsel %vm833, %v4741, 0
      %v4779 = vsel %vm833, %v4742, 0
      %v4782 = vsel %vm833, %v4743, 0
      %v4785 = vsel %vm833, %v4744, 0
      %v4788 = vsel %vm833, %v4745, 0
      %v4791 = vsel %vm833, %v4746, 0
      %v4794 = vsel %vm833, %v4747, 0
      %v4797 = vsel %vm833, %v4748, 0
      %v4800 = vsel %vm833, %v4749, 0
      %v4803 = vsel %vm833, %v4750, 0
      %v4806 = vsel %vm833, %v4751, 0
      %v4809 = vsel %vm833, %v4752, 0
      %v4812 = vsel %vm833, %v4753, 0
      %4814 = vmatprep.subr.bf16.mxu0 0
      %4815 = vmatpush1.bf16.msra.mxu0 %v4762
      %4816 = vmatprep.subr.bf16.mxu0 0
      %4817 = vmatpush1.bf16.msra.mxu0 %v4763
      %4818 = vmatprep.subr.bf16.mxu0 0
      %4819 = vmatpush1.bf16.msra.mxu0 0
      %4820 = vmatprep.subr.bf16.mxu0 0
      %4821 = vmatpush1.bf16.msra.mxu0 0
      %4822 = vmatprep.subr.bf16.mxu0 0
      %4823 = vmatpush1.bf16.msra.mxu0 0
      %4824 = vmatprep.subr.bf16.mxu0 0
      %4825 = vmatpush1.bf16.msra.mxu0 0
      %4826 = vmatprep.subr.bf16.mxu0 0
      %4827 = vmatpush1.bf16.msra.mxu0 0
      %4828 = vmatprep.subr.bf16.mxu0 0
      %4829 = vmatpush1.bf16.msra.mxu0 0
      %4830 = vmatprep.subr.bf16.mxu0 0
      %4831 = vmatpush1.bf16.msra.mxu0 0
      %4832 = vmatprep.subr.bf16.mxu0 0
      %4833 = vmatpush1.bf16.msra.mxu0 0
      %4834 = vmatprep.subr.bf16.mxu0 0
      %4835 = vmatpush1.bf16.msra.mxu0 0
      %4836 = vmatprep.subr.bf16.mxu0 0
      %4837 = vmatpush1.bf16.msra.mxu0 0
      %4838 = vmatprep.subr.bf16.mxu0 0
      %4839 = vmatpush1.bf16.msra.mxu0 0
      %4840 = vmatprep.subr.bf16.mxu0 0
      %4841 = vmatpush1.bf16.msra.mxu0 0
      %4842 = vmatprep.subr.bf16.mxu0 0
      %4843 = vmatpush1.bf16.msra.mxu0 0
      %4844 = vmatprep.subr.bf16.mxu0 0
      %4845 = vmatpush1.bf16.msra.mxu0 0
      %4846 = vmatprep.mubr.bf16.mxu0 0
      %4847 = vmatmul.mubr.bf16.gmra.mrb[0].mxu0 %v4767
      %v4848 = vpop.f32.mrb[0].mxu0
      %v4849 = vadd.f32 0.0, %v4848
      %v4850 = vpop.f32.mrb[0].mxu0
      %v4851 = vpop.f32.mrb[0].mxu0
      %v4852 = vadd.f32 0.0, %v4851
      %v4853 = vpop.f32.mrb[0].mxu0
      %4854 = vmatprep.mubr.bf16.mxu0 0
      %4855 = vmatmul.mubr.bf16.gmra.mrb[0].mxu0 %v4770
      %v4856 = vpop.f32.mrb[0].mxu0
      %v4857 = vadd.f32 0.0, %v4856
      %v4858 = vpop.f32.mrb[0].mxu0
      %v4859 = vpop.f32.mrb[0].mxu0
      %v4860 = vadd.f32 0.0, %v4859
      %v4861 = vpop.f32.mrb[0].mxu0
      %4862 = vmatprep.mubr.bf16.mxu0 0
      %4863 = vmatmul.mubr.bf16.gmra.mrb[0].mxu0 %v4773
      %v4864 = vpop.f32.mrb[0].mxu0
      %v4865 = vadd.f32 0.0, %v4864
      %v4866 = vpop.f32.mrb[0].mxu0
      %v4867 = vpop.f32.mrb[0].mxu0
      %v4868 = vadd.f32 0.0, %v4867
      %v4869 = vpop.f32.mrb[0].mxu0
      %4870 = vmatprep.mubr.bf16.mxu0 0
      %4871 = vmatmul.mubr.bf16.gmra.mrb[0].mxu0 %v4776
      %v4872 = vpop.f32.mrb[0].mxu0
      %v4873 = vadd.f32 0.0, %v4872
      %v4874 = vpop.f32.mrb[0].mxu0
      %v4875 = vpop.f32.mrb[0].mxu0
      %v4876 = vadd.f32 0.0, %v4875
      %v4877 = vpop.f32.mrb[0].mxu0
      %4878 = vmatprep.mubr.bf16.mxu0 0
      %4879 = vmatmul.mubr.bf16.gmra.mrb[0].mxu0 %v4779
      %v4880 = vpop.f32.mrb[0].mxu0
      %v4881 = vadd.f32 0.0, %v4880
      %v4882 = vpop.f32.mrb[0].mxu0
      %v4883 = vpop.f32.mrb[0].mxu0
      %v4884 = vadd.f32 0.0, %v4883
      %v4885 = vpop.f32.mrb[0].mxu0
      %4886 = vmatprep.mubr.bf16.mxu0 0
      %4887 = vmatmul.mubr.bf16.gmra.mrb[0].mxu0 %v4782
      %v4888 = vpop.f32.mrb[0].mxu0
      %v4889 = vadd.f32 0.0, %v4888
      %v4890 = vpop.f32.mrb[0].mxu0
      %v4891 = vpop.f32.mrb[0].mxu0
      %v4892 = vadd.f32 0.0, %v4891
      %v4893 = vpop.f32.mrb[0].mxu0
      %4894 = vmatprep.mubr.bf16.mxu0 0
      %4895 = vmatmul.mubr.bf16.gmra.mrb[0].mxu0 %v4785
      %v4896 = vpop.f32.mrb[0].mxu0
      %v4897 = vadd.f32 0.0, %v4896
      %v4898 = vpop.f32.mrb[0].mxu0
      %v4899 = vpop.f32.mrb[0].mxu0
      %v4900 = vadd.f32 0.0, %v4899
      %v4901 = vpop.f32.mrb[0].mxu0
      %4902 = vmatprep.mubr.bf16.mxu0 0
      %4903 = vmatmul.mubr.bf16.gmra.mrb[0].mxu0 %v4788
      %v4904 = vpop.f32.mrb[0].mxu0
      %v4905 = vadd.f32 0.0, %v4904
      %v4906 = vpop.f32.mrb[0].mxu0
      %v4907 = vpop.f32.mrb[0].mxu0
      %v4908 = vadd.f32 0.0, %v4907
      %v4909 = vpop.f32.mrb[0].mxu0
      %4910 = vmatprep.mubr.bf16.mxu0 0
      %4911 = vmatmul.mubr.bf16.gmra.mrb[0].mxu0 %v4791
      %v4912 = vpop.f32.mrb[0].mxu0
      %v4913 = vadd.f32 0.0, %v4912
      %v4914 = vpop.f32.mrb[0].mxu0
      %v4915 = vpop.f32.mrb[0].mxu0
      %v4916 = vadd.f32 0.0, %v4915
      %v4917 = vpop.f32.mrb[0].mxu0
      %4918 = vmatprep.mubr.bf16.mxu0 0
      %4919 = vmatmul.mubr.bf16.gmra.mrb[0].mxu0 %v4794
      %v4920 = vpop.f32.mrb[0].mxu0
      %v4921 = vadd.f32 0.0, %v4920
      %v4922 = vpop.f32.mrb[0].mxu0
      %v4923 = vpop.f32.mrb[0].mxu0
      %v4924 = vadd.f32 0.0, %v4923
      %v4925 = vpop.f32.mrb[0].mxu0
      %4926 = vmatprep.mubr.bf16.mxu0 0
      %4927 = vmatmul.mubr.bf16.gmra.mrb[0].mxu0 %v4797
      %v4928 = vpop.f32.mrb[0].mxu0
      %v4929 = vadd.f32 0.0, %v4928
      %v4930 = vpop.f32.mrb[0].mxu0
      %v4931 = vpop.f32.mrb[0].mxu0
      %v4932 = vadd.f32 0.0, %v4931
      %v4933 = vpop.f32.mrb[0].mxu0
      %4934 = vmatprep.mubr.bf16.mxu0 0
      %4935 = vmatmul.mubr.bf16.gmra.mrb[0].mxu0 %v4800
      %v4936 = vpop.f32.mrb[0].mxu0
      %v4937 = vadd.f32 0.0, %v4936
      %v4938 = vpop.f32.mrb[0].mxu0
      %v4939 = vpop.f32.mrb[0].mxu0
      %v4940 = vadd.f32 0.0, %v4939
      %v4941 = vpop.f32.mrb[0].mxu0
      %4942 = vmatprep.mubr.bf16.mxu0 0
      %4943 = vmatmul.mubr.bf16.gmra.mrb[0].mxu0 %v4803
      %v4944 = vpop.f32.mrb[0].mxu0
      %v4945 = vadd.f32 0.0, %v4944
      %v4946 = vpop.f32.mrb[0].mxu0
      %v4947 = vpop.f32.mrb[0].mxu0
      %v4948 = vadd.f32 0.0, %v4947
      %v4949 = vpop.f32.mrb[0].mxu0
      %4950 = vmatprep.mubr.bf16.mxu0 0
      %4951 = vmatmul.mubr.bf16.gmra.mrb[0].mxu0 %v4806
      %v4952 = vpop.f32.mrb[0].mxu0
      %v4953 = vadd.f32 0.0, %v4952
      %v4954 = vpop.f32.mrb[0].mxu0
      %v4955 = vpop.f32.mrb[0].mxu0
      %v4956 = vadd.f32 0.0, %v4955
      %v4957 = vpop.f32.mrb[0].mxu0
      %4958 = vmatprep.mubr.bf16.mxu0 0
      %4959 = vmatmul.mubr.bf16.gmra.mrb[0].mxu0 %v4809
      %v4960 = vpop.f32.mrb[0].mxu0
      %v4961 = vadd.f32 0.0, %v4960
      %v4962 = vpop.f32.mrb[0].mxu0
      %v4963 = vpop.f32.mrb[0].mxu0
      %v4964 = vadd.f32 0.0, %v4963
      %v4965 = vpop.f32.mrb[0].mxu0
      %4966 = vmatprep.mubr.bf16.mxu0 0
      %4967 = vmatmul.mubr.bf16.gmra.mrb[0].mxu0 %v4812
      %v4968 = vpop.f32.mrb[0].mxu0
      %v4969 = vadd.f32 0.0, %v4968
      %v4970 = vpop.f32.mrb[0].mxu0
      %v4971 = vpop.f32.mrb[0].mxu0
      %v4972 = vadd.f32 0.0, %v4971
      %v4973 = vpop.f32.mrb[0].mxu0
      %4974 = vdwg.mxu0
      %v4975 = vadd.f32 %v4237, %v4849
      %v4976 = vadd.f32 %v4238, %v4852
      %v4977 = vadd.f32 %v4239, %v4857
      %v4978 = vadd.f32 %v4240, %v4860
      %v4979 = vadd.f32 %v4241, %v4865
      %v4980 = vadd.f32 %v4242, %v4868
      %v4981 = vadd.f32 %v4243, %v4873
      %v4982 = vadd.f32 %v4244, %v4876
      %v4983 = vadd.f32 %v4245, %v4881
      %v4984 = vadd.f32 %v4246, %v4884
      %v4985 = vadd.f32 %v4247, %v4889
      %v4986 = vadd.f32 %v4248, %v4892
      %v4987 = vadd.f32 %v4249, %v4897
      %v4988 = vadd.f32 %v4250, %v4900
      %v4989 = vadd.f32 %v4251, %v4905
      %v4990 = vadd.f32 %v4252, %v4908
      %v4991 = vadd.f32 %v4253, %v4913
      %v4992 = vadd.f32 %v4254, %v4916
      %v4993 = vadd.f32 %v4255, %v4921
      %v4994 = vadd.f32 %v4256, %v4924
      %v4995 = vadd.f32 %v4257, %v4929
      %v4996 = vadd.f32 %v4258, %v4932
      %v4997 = vadd.f32 %v4259, %v4937
      %v4998 = vadd.f32 %v4260, %v4940
      %v4999 = vadd.f32 %v4261, %v4945
      %v5000 = vadd.f32 %v4262, %v4948
      %v5001 = vadd.f32 %v4263, %v4953
      %v5002 = vadd.f32 %v4264, %v4956
      %v5003 = vadd.f32 %v4265, %v4961
      %v5004 = vadd.f32 %v4266, %v4964
      %v5005 = vadd.f32 %v4267, %v4969
      %v5006 = vadd.f32 %v4268, %v4972
      %v5007 = vld [vmem:[%s3898] sm:$0xe]
      %v5008 = vld [vmem:[%s3898 + $0xc] sm:$0xe]
      %v5009 = vld [vmem:[%s3898 + $0x18] sm:$0xe]
      %v5010 = vld [vmem:[%s3898 + $0x24] sm:$0xe]
      %v5011 = vld [vmem:[%s3898 + $0x30] sm:$0xe]
      %v5012 = vld [vmem:[%s3898 + $0x3c] sm:$0xe]
      %v5013 = vld [vmem:[%s3898 + $0x48] sm:$0xe]
      %v5014 = vld [vmem:[%s3898 + $0x54] sm:$0xe]
      %v5015 = vld [vmem:[%s3898 + $0x60] sm:$0xe]
      %v5016 = vld [vmem:[%s3898 + $0x6c] sm:$0xe]
      %v5017 = vld [vmem:[%s3898 + $0x78] sm:$0xe]
      %v5018 = vld [vmem:[%s3898 + $0x84] sm:$0xe]
      %v5019 = vld [vmem:[%s3898 + $0x90] sm:$0xe]
      %v5020 = vld [vmem:[%s3898 + $0x9c] sm:$0xe]
      %v5021 = vld [vmem:[%s3898 + $0xa8] sm:$0xe]
      %v5022 = vld [vmem:[%s3898 + $0xb4] sm:$0xe]
      %v5071 = vrot.slane %v5007, 5
      %v5072 = vrot.slane %v5071, 4
      %v5073 = vrot.slane %v4270, 5
      %v5074 = vsel %vm1882, %v5072, %v5073
      %v5075 = vrot.slane %v5073, 4
      %v5076 = vrot.slane %v4271, 5
      %v5077 = vsel %vm1882, %v5075, %v5076
      %v5078 = vrot.slane %v5008, 5
      %v5079 = vrot.slane %v5078, 4
      %v5080 = vrot.slane %v4273, 5
      %v5081 = vsel %vm1882, %v5079, %v5080
      %v5082 = vrot.slane %v5080, 4
      %v5083 = vrot.slane %v4274, 5
      %v5084 = vsel %vm1882, %v5082, %v5083
      %v5085 = vrot.slane %v5009, 5
      %v5086 = vrot.slane %v5085, 4
      %v5087 = vrot.slane %v4276, 5
      %v5088 = vsel %vm1882, %v5086, %v5087
      %v5089 = vrot.slane %v5087, 4
      %v5090 = vrot.slane %v4277, 5
      %v5091 = vsel %vm1882, %v5089, %v5090
      %v5092 = vrot.slane %v5010, 5
      %v5093 = vrot.slane %v5092, 4
      %v5094 = vrot.slane %v4279, 5
      %v5095 = vsel %vm1882, %v5093, %v5094
      %v5096 = vrot.slane %v5094, 4
      %v5097 = vrot.slane %v4280, 5
      %v5098 = vsel %vm1882, %v5096, %v5097
      %v5099 = vrot.slane %v5011, 5
      %v5100 = vrot.slane %v5099, 4
      %v5101 = vrot.slane %v4282, 5
      %v5102 = vsel %vm1882, %v5100, %v5101
      %v5103 = vrot.slane %v5101, 4
      %v5104 = vrot.slane %v4283, 5
      %v5105 = vsel %vm1882, %v5103, %v5104
      %v5106 = vrot.slane %v5012, 5
      %v5107 = vrot.slane %v5106, 4
      %v5108 = vrot.slane %v4285, 5
      %v5109 = vsel %vm1882, %v5107, %v5108
      %v5110 = vrot.slane %v5108, 4
      %v5111 = vrot.slane %v4286, 5
      %v5112 = vsel %vm1882, %v5110, %v5111
      %v5113 = vrot.slane %v5013, 5
      %v5114 = vrot.slane %v5113, 4
      %v5115 = vrot.slane %v4288, 5
      %v5116 = vsel %vm1882, %v5114, %v5115
      %v5117 = vrot.slane %v5115, 4
      %v5118 = vrot.slane %v4289, 5
      %v5119 = vsel %vm1882, %v5117, %v5118
      %v5120 = vrot.slane %v5014, 5
      %v5121 = vrot.slane %v5120, 4
      %v5122 = vrot.slane %v4291, 5
      %v5123 = vsel %vm1882, %v5121, %v5122
      %v5124 = vrot.slane %v5122, 4
      %v5125 = vrot.slane %v4292, 5
      %v5126 = vsel %vm1882, %v5124, %v5125
      %v5127 = vrot.slane %v5015, 5
      %v5128 = vrot.slane %v5127, 4
      %v5129 = vrot.slane %v4294, 5
      %v5130 = vsel %vm1882, %v5128, %v5129
      %v5131 = vrot.slane %v5129, 4
      %v5132 = vrot.slane %v4295, 5
      %v5133 = vsel %vm1882, %v5131, %v5132
      %v5134 = vrot.slane %v5016, 5
      %v5135 = vrot.slane %v5134, 4
      %v5136 = vrot.slane %v4297, 5
      %v5137 = vsel %vm1882, %v5135, %v5136
      %v5138 = vrot.slane %v5136, 4
      %v5139 = vrot.slane %v4298, 5
      %v5140 = vsel %vm1882, %v5138, %v5139
      %v5141 = vrot.slane %v5017, 5
      %v5142 = vrot.slane %v5141, 4
      %v5143 = vrot.slane %v4300, 5
      %v5144 = vsel %vm1882, %v5142, %v5143
      %v5145 = vrot.slane %v5143, 4
      %v5146 = vrot.slane %v4301, 5
      %v5147 = vsel %vm1882, %v5145, %v5146
      %v5148 = vrot.slane %v5018, 5
      %v5149 = vrot.slane %v5148, 4
      %v5150 = vrot.slane %v4303, 5
      %v5151 = vsel %vm1882, %v5149, %v5150
      %v5152 = vrot.slane %v5150, 4
      %v5153 = vrot.slane %v4304, 5
      %v5154 = vsel %vm1882, %v5152, %v5153
      %v5155 = vrot.slane %v5019, 5
      %v5156 = vrot.slane %v5155, 4
      %v5157 = vrot.slane %v4306, 5
      %v5158 = vsel %vm1882, %v5156, %v5157
      %v5159 = vrot.slane %v5157, 4
      %v5160 = vrot.slane %v4307, 5
      %v5161 = vsel %vm1882, %v5159, %v5160
      %v5162 = vrot.slane %v5020, 5
      %v5163 = vrot.slane %v5162, 4
      %v5164 = vrot.slane %v4309, 5
      %v5165 = vsel %vm1882, %v5163, %v5164
      %v5166 = vrot.slane %v5164, 4
      %v5167 = vrot.slane %v4310, 5
      %v5168 = vsel %vm1882, %v5166, %v5167
      %v5169 = vrot.slane %v5021, 5
      %v5170 = vrot.slane %v5169, 4
      %v5171 = vrot.slane %v4312, 5
      %v5172 = vsel %vm1882, %v5170, %v5171
      %v5173 = vrot.slane %v5171, 4
      %v5174 = vrot.slane %v4313, 5
      %v5175 = vsel %vm1882, %v5173, %v5174
      %v5176 = vrot.slane %v5022, 5
      %v5177 = vrot.slane %v5176, 4
      %v5178 = vrot.slane %v4315, 5
      %v5179 = vsel %vm1882, %v5177, %v5178
      %v5180 = vrot.slane %v5178, 4
      %v5181 = vrot.slane %v4316, 5
      %v5182 = vsel %vm1882, %v5180, %v5181
      %s5183 = scalar_lea.vmem %s4, 128
      %v5184 = vld [vmem:[%s5183] sm:$0xf]
      %v5185 = vld [vmem:[%s5183 + $0x4] sm:$0xf]
      %v5186 = vld [vmem:[%s5183 + $0x8] sm:$0xf]
      %v5187 = vld [vmem:[%s5183 + $0xc] sm:$0xf]
      %v5188 = vunpack.c.l.b16 %v5074
      %v5189 = vunpack.c.l.b16 %v5077
      %v5190 = vunpack.c.l.b16 %v5081
      %v5191 = vunpack.c.l.b16 %v5084
      %v5192 = vunpack.c.l.b16 %v5088
      %v5193 = vunpack.c.l.b16 %v5091
      %v5194 = vunpack.c.l.b16 %v5095
      %v5195 = vunpack.c.l.b16 %v5098
      %v5196 = vunpack.c.l.b16 %v5102
      %v5197 = vunpack.c.l.b16 %v5105
      %v5198 = vunpack.c.l.b16 %v5109
      %v5199 = vunpack.c.l.b16 %v5112
      %v5200 = vunpack.c.l.b16 %v5116
      %v5201 = vunpack.c.l.b16 %v5119
      %v5202 = vunpack.c.l.b16 %v5123
      %v5203 = vunpack.c.l.b16 %v5126
      %v5204 = vunpack.c.l.b16 %v5130
      %v5205 = vunpack.c.l.b16 %v5133
      %v5206 = vunpack.c.l.b16 %v5137
      %v5207 = vunpack.c.l.b16 %v5140
      %v5208 = vunpack.c.l.b16 %v5144
      %v5209 = vunpack.c.l.b16 %v5147
      %v5210 = vunpack.c.l.b16 %v5151
      %v5211 = vunpack.c.l.b16 %v5154
      %v5212 = vunpack.c.l.b16 %v5158
      %v5213 = vunpack.c.l.b16 %v5161
      %v5214 = vunpack.c.l.b16 %v5165
      %v5215 = vunpack.c.l.b16 %v5168
      %v5216 = vunpack.c.l.b16 %v5172
      %v5217 = vunpack.c.l.b16 %v5175
      %v5218 = vunpack.c.l.b16 %v5179
      %v5219 = vunpack.c.l.b16 %v5182
      %v5220 = vpack.c.b16 %v5189, %v5188
      %v5221 = vpack.c.b16 %v5191, %v5190
      %v5222 = vpack.c.b16 %v5193, %v5192
      %v5223 = vpack.c.b16 %v5195, %v5194
      %v5224 = vpack.c.b16 %v5197, %v5196
      %v5225 = vpack.c.b16 %v5199, %v5198
      %v5226 = vpack.c.b16 %v5201, %v5200
      %v5227 = vpack.c.b16 %v5203, %v5202
      %v5228 = vpack.c.b16 %v5205, %v5204
      %v5229 = vpack.c.b16 %v5207, %v5206
      %v5230 = vpack.c.b16 %v5209, %v5208
      %v5231 = vpack.c.b16 %v5211, %v5210
      %v5232 = vpack.c.b16 %v5213, %v5212
      %v5233 = vpack.c.b16 %v5215, %v5214
      %v5234 = vpack.c.b16 %v5217, %v5216
      %v5235 = vpack.c.b16 %v5219, %v5218
      %v5240 = vunpack.c.l.b16 %v5184
      %v5241 = vunpack.c.l.b16 %v5185
      %v5242 = vunpack.c.l.b16 %v5186
      %v5243 = vunpack.c.l.b16 %v5187
      %v5244 = vpack.c.b16 %v5241, %v5240
      %v5245 = vpack.c.b16 %v5243, %v5242
      %v5249 = vsel %vm833, %v5220, 0
      %v5252 = vsel %vm833, %v5221, 0
      %v5255 = vsel %vm833, %v5222, 0
      %v5258 = vsel %vm833, %v5223, 0
      %v5261 = vsel %vm833, %v5224, 0
      %v5264 = vsel %vm833, %v5225, 0
      %v5267 = vsel %vm833, %v5226, 0
      %v5270 = vsel %vm833, %v5227, 0
      %v5273 = vsel %vm833, %v5228, 0
      %v5276 = vsel %vm833, %v5229, 0
      %v5279 = vsel %vm833, %v5230, 0
      %v5282 = vsel %vm833, %v5231, 0
      %v5285 = vsel %vm833, %v5232, 0
      %v5288 = vsel %vm833, %v5233, 0
      %v5291 = vsel %vm833, %v5234, 0
      %v5294 = vsel %vm833, %v5235, 0
      %5296 = vmatprep.subr.bf16.mxu0 0
      %5297 = vmatpush1.bf16.msra.mxu0 %v5244
      %5298 = vmatprep.subr.bf16.mxu0 0
      %5299 = vmatpush1.bf16.msra.mxu0 %v5245
      %5300 = vmatprep.subr.bf16.mxu0 0
      %5301 = vmatpush1.bf16.msra.mxu0 0
      %5302 = vmatprep.subr.bf16.mxu0 0
      %5303 = vmatpush1.bf16.msra.mxu0 0
      %5304 = vmatprep.subr.bf16.mxu0 0
      %5305 = vmatpush1.bf16.msra.mxu0 0
      %5306 = vmatprep.subr.bf16.mxu0 0
      %5307 = vmatpush1.bf16.msra.mxu0 0
      %5308 = vmatprep.subr.bf16.mxu0 0
      %5309 = vmatpush1.bf16.msra.mxu0 0
      %5310 = vmatprep.subr.bf16.mxu0 0
      %5311 = vmatpush1.bf16.msra.mxu0 0
      %5312 = vmatprep.subr.bf16.mxu0 0
      %5313 = vmatpush1.bf16.msra.mxu0 0
      %5314 = vmatprep.subr.bf16.mxu0 0
      %5315 = vmatpush1.bf16.msra.mxu0 0
      %5316 = vmatprep.subr.bf16.mxu0 0
      %5317 = vmatpush1.bf16.msra.mxu0 0
      %5318 = vmatprep.subr.bf16.mxu0 0
      %5319 = vmatpush1.bf16.msra.mxu0 0
      %5320 = vmatprep.subr.bf16.mxu0 0
      %5321 = vmatpush1.bf16.msra.mxu0 0
      %5322 = vmatprep.subr.bf16.mxu0 0
      %5323 = vmatpush1.bf16.msra.mxu0 0
      %5324 = vmatprep.subr.bf16.mxu0 0
      %5325 = vmatpush1.bf16.msra.mxu0 0
      %5326 = vmatprep.subr.bf16.mxu0 0
      %5327 = vmatpush1.bf16.msra.mxu0 0
      %5328 = vmatprep.mubr.bf16.mxu0 0
      %5329 = vmatmul.mubr.bf16.gmra.mrb[0].mxu0 %v5249
      %v5330 = vpop.f32.mrb[0].mxu0
      %v5331 = vadd.f32 0.0, %v5330
      %v5332 = vpop.f32.mrb[0].mxu0
      %v5333 = vpop.f32.mrb[0].mxu0
      %v5334 = vadd.f32 0.0, %v5333
      %v5335 = vpop.f32.mrb[0].mxu0
      %5336 = vmatprep.mubr.bf16.mxu0 0
      %5337 = vmatmul.mubr.bf16.gmra.mrb[0].mxu0 %v5252
      %v5338 = vpop.f32.mrb[0].mxu0
      %v5339 = vadd.f32 0.0, %v5338
      %v5340 = vpop.f32.mrb[0].mxu0
      %v5341 = vpop.f32.mrb[0].mxu0
      %v5342 = vadd.f32 0.0, %v5341
      %v5343 = vpop.f32.mrb[0].mxu0
      %5344 = vmatprep.mubr.bf16.mxu0 0
      %5345 = vmatmul.mubr.bf16.gmra.mrb[0].mxu0 %v5255
      %v5346 = vpop.f32.mrb[0].mxu0
      %v5347 = vadd.f32 0.0, %v5346
      %v5348 = vpop.f32.mrb[0].mxu0
      %v5349 = vpop.f32.mrb[0].mxu0
      %v5350 = vadd.f32 0.0, %v5349
      %v5351 = vpop.f32.mrb[0].mxu0
      %5352 = vmatprep.mubr.bf16.mxu0 0
      %5353 = vmatmul.mubr.bf16.gmra.mrb[0].mxu0 %v5258
      %v5354 = vpop.f32.mrb[0].mxu0
      %v5355 = vadd.f32 0.0, %v5354
      %v5356 = vpop.f32.mrb[0].mxu0
      %v5357 = vpop.f32.mrb[0].mxu0
      %v5358 = vadd.f32 0.0, %v5357
      %v5359 = vpop.f32.mrb[0].mxu0
      %5360 = vmatprep.mubr.bf16.mxu0 0
      %5361 = vmatmul.mubr.bf16.gmra.mrb[0].mxu0 %v5261
      %v5362 = vpop.f32.mrb[0].mxu0
      %v5363 = vadd.f32 0.0, %v5362
      %v5364 = vpop.f32.mrb[0].mxu0
      %v5365 = vpop.f32.mrb[0].mxu0
      %v5366 = vadd.f32 0.0, %v5365
      %v5367 = vpop.f32.mrb[0].mxu0
      %5368 = vmatprep.mubr.bf16.mxu0 0
      %5369 = vmatmul.mubr.bf16.gmra.mrb[0].mxu0 %v5264
      %v5370 = vpop.f32.mrb[0].mxu0
      %v5371 = vadd.f32 0.0, %v5370
      %v5372 = vpop.f32.mrb[0].mxu0
      %v5373 = vpop.f32.mrb[0].mxu0
      %v5374 = vadd.f32 0.0, %v5373
      %v5375 = vpop.f32.mrb[0].mxu0
      %5376 = vmatprep.mubr.bf16.mxu0 0
      %5377 = vmatmul.mubr.bf16.gmra.mrb[0].mxu0 %v5267
      %v5378 = vpop.f32.mrb[0].mxu0
      %v5379 = vadd.f32 0.0, %v5378
      %v5380 = vpop.f32.mrb[0].mxu0
      %v5381 = vpop.f32.mrb[0].mxu0
      %v5382 = vadd.f32 0.0, %v5381
      %v5383 = vpop.f32.mrb[0].mxu0
      %5384 = vmatprep.mubr.bf16.mxu0 0
      %5385 = vmatmul.mubr.bf16.gmra.mrb[0].mxu0 %v5270
      %v5386 = vpop.f32.mrb[0].mxu0
      %v5387 = vadd.f32 0.0, %v5386
      %v5388 = vpop.f32.mrb[0].mxu0
      %v5389 = vpop.f32.mrb[0].mxu0
      %v5390 = vadd.f32 0.0, %v5389
      %v5391 = vpop.f32.mrb[0].mxu0
      %5392 = vmatprep.mubr.bf16.mxu0 0
      %5393 = vmatmul.mubr.bf16.gmra.mrb[0].mxu0 %v5273
      %v5394 = vpop.f32.mrb[0].mxu0
      %v5395 = vadd.f32 0.0, %v5394
      %v5396 = vpop.f32.mrb[0].mxu0
      %v5397 = vpop.f32.mrb[0].mxu0
      %v5398 = vadd.f32 0.0, %v5397
      %v5399 = vpop.f32.mrb[0].mxu0
      %5400 = vmatprep.mubr.bf16.mxu0 0
      %5401 = vmatmul.mubr.bf16.gmra.mrb[0].mxu0 %v5276
      %v5402 = vpop.f32.mrb[0].mxu0
      %v5403 = vadd.f32 0.0, %v5402
      %v5404 = vpop.f32.mrb[0].mxu0
      %v5405 = vpop.f32.mrb[0].mxu0
      %v5406 = vadd.f32 0.0, %v5405
      %v5407 = vpop.f32.mrb[0].mxu0
      %5408 = vmatprep.mubr.bf16.mxu0 0
      %5409 = vmatmul.mubr.bf16.gmra.mrb[0].mxu0 %v5279
      %v5410 = vpop.f32.mrb[0].mxu0
      %v5411 = vadd.f32 0.0, %v5410
      %v5412 = vpop.f32.mrb[0].mxu0
      %v5413 = vpop.f32.mrb[0].mxu0
      %v5414 = vadd.f32 0.0, %v5413
      %v5415 = vpop.f32.mrb[0].mxu0
      %5416 = vmatprep.mubr.bf16.mxu0 0
      %5417 = vmatmul.mubr.bf16.gmra.mrb[0].mxu0 %v5282
      %v5418 = vpop.f32.mrb[0].mxu0
      %v5419 = vadd.f32 0.0, %v5418
      %v5420 = vpop.f32.mrb[0].mxu0
      %v5421 = vpop.f32.mrb[0].mxu0
      %v5422 = vadd.f32 0.0, %v5421
      %v5423 = vpop.f32.mrb[0].mxu0
      %5424 = vmatprep.mubr.bf16.mxu0 0
      %5425 = vmatmul.mubr.bf16.gmra.mrb[0].mxu0 %v5285
      %v5426 = vpop.f32.mrb[0].mxu0
      %v5427 = vadd.f32 0.0, %v5426
      %v5428 = vpop.f32.mrb[0].mxu0
      %v5429 = vpop.f32.mrb[0].mxu0
      %v5430 = vadd.f32 0.0, %v5429
      %v5431 = vpop.f32.mrb[0].mxu0
      %5432 = vmatprep.mubr.bf16.mxu0 0
      %5433 = vmatmul.mubr.bf16.gmra.mrb[0].mxu0 %v5288
      %v5434 = vpop.f32.mrb[0].mxu0
      %v5435 = vadd.f32 0.0, %v5434
      %v5436 = vpop.f32.mrb[0].mxu0
      %v5437 = vpop.f32.mrb[0].mxu0
      %v5438 = vadd.f32 0.0, %v5437
      %v5439 = vpop.f32.mrb[0].mxu0
      %5440 = vmatprep.mubr.bf16.mxu0 0
      %5441 = vmatmul.mubr.bf16.gmra.mrb[0].mxu0 %v5291
      %v5442 = vpop.f32.mrb[0].mxu0
      %v5443 = vadd.f32 0.0, %v5442
      %v5444 = vpop.f32.mrb[0].mxu0
      %v5445 = vpop.f32.mrb[0].mxu0
      %v5446 = vadd.f32 0.0, %v5445
      %v5447 = vpop.f32.mrb[0].mxu0
      %5448 = vmatprep.mubr.bf16.mxu0 0
      %5449 = vmatmul.mubr.bf16.gmra.mrb[0].mxu0 %v5294
      %v5450 = vpop.f32.mrb[0].mxu0
      %v5451 = vadd.f32 0.0, %v5450
      %v5452 = vpop.f32.mrb[0].mxu0
      %v5453 = vpop.f32.mrb[0].mxu0
      %v5454 = vadd.f32 0.0, %v5453
      %v5455 = vpop.f32.mrb[0].mxu0
      %5456 = vdwg.mxu0
      %v5457 = vadd.f32 %v4975, %v5331
      %v5458 = vadd.f32 %v4976, %v5334
      %v5459 = vadd.f32 %v4977, %v5339
      %v5460 = vadd.f32 %v4978, %v5342
      %v5461 = vadd.f32 %v4979, %v5347
      %v5462 = vadd.f32 %v4980, %v5350
      %v5463 = vadd.f32 %v4981, %v5355
      %v5464 = vadd.f32 %v4982, %v5358
      %v5465 = vadd.f32 %v4983, %v5363
      %v5466 = vadd.f32 %v4984, %v5366
      %v5467 = vadd.f32 %v4985, %v5371
      %v5468 = vadd.f32 %v4986, %v5374
      %v5469 = vadd.f32 %v4987, %v5379
      %v5470 = vadd.f32 %v4988, %v5382
      %v5471 = vadd.f32 %v4989, %v5387
      %v5472 = vadd.f32 %v4990, %v5390
      %v5473 = vadd.f32 %v4991, %v5395
      %v5474 = vadd.f32 %v4992, %v5398
      %v5475 = vadd.f32 %v4993, %v5403
      %v5476 = vadd.f32 %v4994, %v5406
      %v5477 = vadd.f32 %v4995, %v5411
      %v5478 = vadd.f32 %v4996, %v5414
      %v5479 = vadd.f32 %v4997, %v5419
      %v5480 = vadd.f32 %v4998, %v5422
      %v5481 = vadd.f32 %v4999, %v5427
      %v5482 = vadd.f32 %v5000, %v5430
      %v5483 = vadd.f32 %v5001, %v5435
      %v5484 = vadd.f32 %v5002, %v5438
      %v5485 = vadd.f32 %v5003, %v5443
      %v5486 = vadd.f32 %v5004, %v5446
      %v5487 = vadd.f32 %v5005, %v5451
      %v5488 = vadd.f32 %v5006, %v5454
      %v5489 = vxor.u32 %v5457, 2147483648
      %v5490 = vxor.u32 %v5458, 2147483648
      %v5491 = vxor.u32 %v5459, 2147483648
      %v5492 = vxor.u32 %v5460, 2147483648
      %v5493 = vxor.u32 %v5461, 2147483648
      %v5494 = vxor.u32 %v5462, 2147483648
      %v5495 = vxor.u32 %v5463, 2147483648
      %v5496 = vxor.u32 %v5464, 2147483648
      %v5497 = vxor.u32 %v5465, 2147483648
      %v5498 = vxor.u32 %v5466, 2147483648
      %v5499 = vxor.u32 %v5467, 2147483648
      %v5500 = vxor.u32 %v5468, 2147483648
      %v5501 = vxor.u32 %v5469, 2147483648
      %v5502 = vxor.u32 %v5470, 2147483648
      %v5503 = vxor.u32 %v5471, 2147483648
      %v5504 = vxor.u32 %v5472, 2147483648
      %v5505 = vxor.u32 %v5473, 2147483648
      %v5506 = vxor.u32 %v5474, 2147483648
      %v5507 = vxor.u32 %v5475, 2147483648
      %v5508 = vxor.u32 %v5476, 2147483648
      %v5509 = vxor.u32 %v5477, 2147483648
      %v5510 = vxor.u32 %v5478, 2147483648
      %v5511 = vxor.u32 %v5479, 2147483648
      %v5512 = vxor.u32 %v5480, 2147483648
      %v5513 = vxor.u32 %v5481, 2147483648
      %v5514 = vxor.u32 %v5482, 2147483648
      %v5515 = vxor.u32 %v5483, 2147483648
      %v5516 = vxor.u32 %v5484, 2147483648
      %v5517 = vxor.u32 %v5485, 2147483648
      %v5518 = vxor.u32 %v5486, 2147483648
      %v5519 = vxor.u32 %v5487, 2147483648
      %v5520 = vxor.u32 %v5488, 2147483648
      %v5521 = vmul.f32 %v5489, 1.442695
      %v5522 = vpow.pop %v5521
      %v5523 = vmul.f32 %v5490, 1.442695
      %v5524 = vpow.pop %v5523
      %v5525 = vmul.f32 %v5491, 1.442695
      %v5526 = vpow.pop %v5525
      %v5527 = vmul.f32 %v5492, 1.442695
      %v5528 = vpow.pop %v5527
      %v5529 = vmul.f32 %v5493, 1.442695
      %v5530 = vpow.pop %v5529
      %v5531 = vmul.f32 %v5494, 1.442695
      %v5532 = vpow.pop %v5531
      %v5533 = vmul.f32 %v5495, 1.442695
      %v5534 = vpow.pop %v5533
      %v5535 = vmul.f32 %v5496, 1.442695
      %v5536 = vpow.pop %v5535
      %v5537 = vmul.f32 %v5497, 1.442695
      %v5538 = vpow.pop %v5537
      %v5539 = vmul.f32 %v5498, 1.442695
      %v5540 = vpow.pop %v5539
      %v5541 = vmul.f32 %v5499, 1.442695
      %v5542 = vpow.pop %v5541
      %v5543 = vmul.f32 %v5500, 1.442695
      %v5544 = vpow.pop %v5543
      %v5545 = vmul.f32 %v5501, 1.442695
      %v5546 = vpow.pop %v5545
      %v5547 = vmul.f32 %v5502, 1.442695
      %v5548 = vpow.pop %v5547
      %v5549 = vmul.f32 %v5503, 1.442695
      %v5550 = vpow.pop %v5549
      %v5551 = vmul.f32 %v5504, 1.442695
      %v5552 = vpow.pop %v5551
      %v5553 = vmul.f32 %v5505, 1.442695
      %v5554 = vpow.pop %v5553
      %v5555 = vmul.f32 %v5506, 1.442695
      %v5556 = vpow.pop %v5555
      %v5557 = vmul.f32 %v5507, 1.442695
      %v5558 = vpow.pop %v5557
      %v5559 = vmul.f32 %v5508, 1.442695
      %v5560 = vpow.pop %v5559
      %v5561 = vmul.f32 %v5509, 1.442695
      %v5562 = vpow.pop %v5561
      %v5563 = vmul.f32 %v5510, 1.442695
      %v5564 = vpow.pop %v5563
      %v5565 = vmul.f32 %v5511, 1.442695
      %v5566 = vpow.pop %v5565
      %v5567 = vmul.f32 %v5512, 1.442695
      %v5568 = vpow.pop %v5567
      %v5569 = vmul.f32 %v5513, 1.442695
      %v5570 = vpow.pop %v5569
      %v5571 = vmul.f32 %v5514, 1.442695
      %v5572 = vpow.pop %v5571
      %v5573 = vmul.f32 %v5515, 1.442695
      %v5574 = vpow.pop %v5573
      %v5575 = vmul.f32 %v5516, 1.442695
      %v5576 = vpow.pop %v5575
      %v5577 = vmul.f32 %v5517, 1.442695
      %v5578 = vpow.pop %v5577
      %v5579 = vmul.f32 %v5518, 1.442695
      %v5580 = vpow.pop %v5579
      %v5581 = vmul.f32 %v5519, 1.442695
      %v5582 = vpow.pop %v5581
      %v5583 = vmul.f32 %v5520, 1.442695
      %v5584 = vpow.pop %v5583
      %v5585 = vadd.f32 %v5522, 1.0
      %v5586 = vadd.f32 %v5524, 1.0
      %v5587 = vadd.f32 %v5526, 1.0
      %v5588 = vadd.f32 %v5528, 1.0
      %v5589 = vadd.f32 %v5530, 1.0
      %v5590 = vadd.f32 %v5532, 1.0
      %v5591 = vadd.f32 %v5534, 1.0
      %v5592 = vadd.f32 %v5536, 1.0
      %v5593 = vadd.f32 %v5538, 1.0
      %v5594 = vadd.f32 %v5540, 1.0
      %v5595 = vadd.f32 %v5542, 1.0
      %v5596 = vadd.f32 %v5544, 1.0
      %v5597 = vadd.f32 %v5546, 1.0
      %v5598 = vadd.f32 %v5548, 1.0
      %v5599 = vadd.f32 %v5550, 1.0
      %v5600 = vadd.f32 %v5552, 1.0
      %v5601 = vadd.f32 %v5554, 1.0
      %v5602 = vadd.f32 %v5556, 1.0
      %v5603 = vadd.f32 %v5558, 1.0
      %v5604 = vadd.f32 %v5560, 1.0
      %v5605 = vadd.f32 %v5562, 1.0
      %v5606 = vadd.f32 %v5564, 1.0
      %v5607 = vadd.f32 %v5566, 1.0
      %v5608 = vadd.f32 %v5568, 1.0
      %v5609 = vadd.f32 %v5570, 1.0
      %v5610 = vadd.f32 %v5572, 1.0
      %v5611 = vadd.f32 %v5574, 1.0
      %v5612 = vadd.f32 %v5576, 1.0
      %v5613 = vadd.f32 %v5578, 1.0
      %v5614 = vadd.f32 %v5580, 1.0
      %v5615 = vadd.f32 %v5582, 1.0
      %v5616 = vadd.f32 %v5584, 1.0
      %v5617 = vrcp.pop %v5585
      %v5618 = vmul.f32 1.0, %v5617
      %v5619 = vrcp.pop %v5586
      %v5620 = vmul.f32 1.0, %v5619
      %v5621 = vrcp.pop %v5587
      %v5622 = vmul.f32 1.0, %v5621
      %v5623 = vrcp.pop %v5588
      %v5624 = vmul.f32 1.0, %v5623
      %v5625 = vrcp.pop %v5589
      %v5626 = vmul.f32 1.0, %v5625
      %v5627 = vrcp.pop %v5590
      %v5628 = vmul.f32 1.0, %v5627
      %v5629 = vrcp.pop %v5591
      %v5630 = vmul.f32 1.0, %v5629
      %v5631 = vrcp.pop %v5592
      %v5632 = vmul.f32 1.0, %v5631
      %v5633 = vrcp.pop %v5593
      %v5634 = vmul.f32 1.0, %v5633
      %v5635 = vrcp.pop %v5594
      %v5636 = vmul.f32 1.0, %v5635
      %v5637 = vrcp.pop %v5595
      %v5638 = vmul.f32 1.0, %v5637
      %v5639 = vrcp.pop %v5596
      %v5640 = vmul.f32 1.0, %v5639
      %v5641 = vrcp.pop %v5597
      %v5642 = vmul.f32 1.0, %v5641
      %v5643 = vrcp.pop %v5598
      %v5644 = vmul.f32 1.0, %v5643
      %v5645 = vrcp.pop %v5599
      %v5646 = vmul.f32 1.0, %v5645
      %v5647 = vrcp.pop %v5600
      %v5648 = vmul.f32 1.0, %v5647
      %v5649 = vrcp.pop %v5601
      %v5650 = vmul.f32 1.0, %v5649
      %v5651 = vrcp.pop %v5602
      %v5652 = vmul.f32 1.0, %v5651
      %v5653 = vrcp.pop %v5603
      %v5654 = vmul.f32 1.0, %v5653
      %v5655 = vrcp.pop %v5604
      %v5656 = vmul.f32 1.0, %v5655
      %v5657 = vrcp.pop %v5605
      %v5658 = vmul.f32 1.0, %v5657
      %v5659 = vrcp.pop %v5606
      %v5660 = vmul.f32 1.0, %v5659
      %v5661 = vrcp.pop %v5607
      %v5662 = vmul.f32 1.0, %v5661
      %v5663 = vrcp.pop %v5608
      %v5664 = vmul.f32 1.0, %v5663
      %v5665 = vrcp.pop %v5609
      %v5666 = vmul.f32 1.0, %v5665
      %v5667 = vrcp.pop %v5610
      %v5668 = vmul.f32 1.0, %v5667
      %v5669 = vrcp.pop %v5611
      %v5670 = vmul.f32 1.0, %v5669
      %v5671 = vrcp.pop %v5612
      %v5672 = vmul.f32 1.0, %v5671
      %v5673 = vrcp.pop %v5613
      %v5674 = vmul.f32 1.0, %v5673
      %v5675 = vrcp.pop %v5614
      %v5676 = vmul.f32 1.0, %v5675
      %v5677 = vrcp.pop %v5615
      %v5678 = vmul.f32 1.0, %v5677
      %v5679 = vrcp.pop %v5616
      %v5680 = vmul.f32 1.0, %v5679
      %v5681 = vtanh.pop %v5457
      %v5682 = vtanh.pop %v5458
      %v5683 = vtanh.pop %v5459
      %v5684 = vtanh.pop %v5460
      %v5685 = vtanh.pop %v5461
      %v5686 = vtanh.pop %v5462
      %v5687 = vtanh.pop %v5463
      %v5688 = vtanh.pop %v5464
      %v5689 = vtanh.pop %v5465
      %v5690 = vtanh.pop %v5466
      %v5691 = vtanh.pop %v5467
      %v5692 = vtanh.pop %v5468
      %v5693 = vtanh.pop %v5469
      %v5694 = vtanh.pop %v5470
      %v5695 = vtanh.pop %v5471
      %v5696 = vtanh.pop %v5472
      %v5697 = vtanh.pop %v5473
      %v5698 = vtanh.pop %v5474
      %v5699 = vtanh.pop %v5475
      %v5700 = vtanh.pop %v5476
      %v5701 = vtanh.pop %v5477
      %v5702 = vtanh.pop %v5478
      %v5703 = vtanh.pop %v5479
      %v5704 = vtanh.pop %v5480
      %v5705 = vtanh.pop %v5481
      %v5706 = vtanh.pop %v5482
      %v5707 = vtanh.pop %v5483
      %v5708 = vtanh.pop %v5484
      %v5709 = vtanh.pop %v5485
      %v5710 = vtanh.pop %v5486
      %v5711 = vtanh.pop %v5487
      %v5712 = vtanh.pop %v5488
      %v5713 = vld [vmem:[%s335] sm:$0xff]
      %v5714 = vld [vmem:[%s335 + $0x8] sm:$0xff]
      %v5715 = vld [vmem:[%s335 + $0x10] sm:$0xff]
      %v5716 = vld [vmem:[%s335 + $0x18] sm:$0xff]
      %v5717 = vld [vmem:[%s335 + $0x20] sm:$0xff]
      %v5718 = vld [vmem:[%s335 + $0x28] sm:$0xff]
      %v5719 = vld [vmem:[%s335 + $0x30] sm:$0xff]
      %v5720 = vld [vmem:[%s335 + $0x38] sm:$0xff]
      %v5721 = vld [vmem:[%s335 + $0x40] sm:$0xff]
      %v5722 = vld [vmem:[%s335 + $0x48] sm:$0xff]
      %v5723 = vld [vmem:[%s335 + $0x50] sm:$0xff]
      %v5724 = vld [vmem:[%s335 + $0x58] sm:$0xff]
      %v5725 = vld [vmem:[%s335 + $0x60] sm:$0xff]
      %v5726 = vld [vmem:[%s335 + $0x68] sm:$0xff]
      %v5727 = vld [vmem:[%s335 + $0x70] sm:$0xff]
      %v5728 = vld [vmem:[%s335 + $0x78] sm:$0xff]
      %v5729 = vld [vmem:[%s335 + $0x80] sm:$0xff]
      %v5730 = vld [vmem:[%s335 + $0x88] sm:$0xff]
      %v5731 = vld [vmem:[%s335 + $0x90] sm:$0xff]
      %v5732 = vld [vmem:[%s335 + $0x98] sm:$0xff]
      %v5733 = vld [vmem:[%s335 + $0xa0] sm:$0xff]
      %v5734 = vld [vmem:[%s335 + $0xa8] sm:$0xff]
      %v5735 = vld [vmem:[%s335 + $0xb0] sm:$0xff]
      %v5736 = vld [vmem:[%s335 + $0xb8] sm:$0xff]
      %v5737 = vld [vmem:[%s335 + $0xc0] sm:$0xff]
      %v5738 = vld [vmem:[%s335 + $0xc8] sm:$0xff]
      %v5739 = vld [vmem:[%s335 + $0xd0] sm:$0xff]
      %v5740 = vld [vmem:[%s335 + $0xd8] sm:$0xff]
      %v5741 = vld [vmem:[%s335 + $0xe0] sm:$0xff]
      %v5742 = vld [vmem:[%s335 + $0xe8] sm:$0xff]
      %v5743 = vld [vmem:[%s335 + $0xf0] sm:$0xff]
      %v5744 = vld [vmem:[%s335 + $0xf8] sm:$0xff]
      %5777 = vrot.lane.b32.xlu0 %v5713, 32
      %v5778 = vpop.permute.xlu0 %5777
      %5779 = vrot.lane.b32.xlu0 %v5714, 32
      %v5780 = vpop.permute.xlu0 %5779
      %5781 = vrot.lane.b32.xlu0 %v5715, 32
      %v5782 = vpop.permute.xlu0 %5781
      %5783 = vrot.lane.b32.xlu0 %v5716, 32
      %v5784 = vpop.permute.xlu0 %5783
      %5785 = vrot.lane.b32.xlu0 %v5717, 32
      %v5786 = vpop.permute.xlu0 %5785
      %5787 = vrot.lane.b32.xlu0 %v5718, 32
      %v5788 = vpop.permute.xlu0 %5787
      %5789 = vrot.lane.b32.xlu0 %v5719, 32
      %v5790 = vpop.permute.xlu0 %5789
      %5791 = vrot.lane.b32.xlu0 %v5720, 32
      %v5792 = vpop.permute.xlu0 %5791
      %5793 = vrot.lane.b32.xlu0 %v5721, 32
      %v5794 = vpop.permute.xlu0 %5793
      %5795 = vrot.lane.b32.xlu0 %v5722, 32
      %v5796 = vpop.permute.xlu0 %5795
      %5797 = vrot.lane.b32.xlu0 %v5723, 32
      %v5798 = vpop.permute.xlu0 %5797
      %5799 = vrot.lane.b32.xlu0 %v5724, 32
      %v5800 = vpop.permute.xlu0 %5799
      %5801 = vrot.lane.b32.xlu0 %v5725, 32
      %v5802 = vpop.permute.xlu0 %5801
      %5803 = vrot.lane.b32.xlu0 %v5726, 32
      %v5804 = vpop.permute.xlu0 %5803
      %5805 = vrot.lane.b32.xlu0 %v5727, 32
      %v5806 = vpop.permute.xlu0 %5805
      %5807 = vrot.lane.b32.xlu0 %v5728, 32
      %v5808 = vpop.permute.xlu0 %5807
      %5809 = vrot.lane.b32.xlu0 %v5729, 32
      %v5810 = vpop.permute.xlu0 %5809
      %5811 = vrot.lane.b32.xlu0 %v5730, 32
      %v5812 = vpop.permute.xlu0 %5811
      %5813 = vrot.lane.b32.xlu0 %v5731, 32
      %v5814 = vpop.permute.xlu0 %5813
      %5815 = vrot.lane.b32.xlu0 %v5732, 32
      %v5816 = vpop.permute.xlu0 %5815
      %5817 = vrot.lane.b32.xlu0 %v5733, 32
      %v5818 = vpop.permute.xlu0 %5817
      %5819 = vrot.lane.b32.xlu0 %v5734, 32
      %v5820 = vpop.permute.xlu0 %5819
      %5821 = vrot.lane.b32.xlu0 %v5735, 32
      %v5822 = vpop.permute.xlu0 %5821
      %5823 = vrot.lane.b32.xlu0 %v5736, 32
      %v5824 = vpop.permute.xlu0 %5823
      %5825 = vrot.lane.b32.xlu0 %v5737, 32
      %v5826 = vpop.permute.xlu0 %5825
      %5827 = vrot.lane.b32.xlu0 %v5738, 32
      %v5828 = vpop.permute.xlu0 %5827
      %5829 = vrot.lane.b32.xlu0 %v5739, 32
      %v5830 = vpop.permute.xlu0 %5829
      %5831 = vrot.lane.b32.xlu0 %v5740, 32
      %v5832 = vpop.permute.xlu0 %5831
      %5833 = vrot.lane.b32.xlu0 %v5741, 32
      %v5834 = vpop.permute.xlu0 %5833
      %5835 = vrot.lane.b32.xlu0 %v5742, 32
      %v5836 = vpop.permute.xlu0 %5835
      %5837 = vrot.lane.b32.xlu0 %v5743, 32
      %v5838 = vpop.permute.xlu0 %5837
      %5839 = vrot.lane.b32.xlu0 %v5744, 32
      %v5840 = vpop.permute.xlu0 %5839
      %v5873 = vmul.f32 %v5618, %v5778
      %v5874 = vmul.f32 %v5620, %v5780
      %v5875 = vmul.f32 %v5622, %v5782
      %v5876 = vmul.f32 %v5624, %v5784
      %v5877 = vmul.f32 %v5626, %v5786
      %v5878 = vmul.f32 %v5628, %v5788
      %v5879 = vmul.f32 %v5630, %v5790
      %v5880 = vmul.f32 %v5632, %v5792
      %v5881 = vmul.f32 %v5634, %v5794
      %v5882 = vmul.f32 %v5636, %v5796
      %v5883 = vmul.f32 %v5638, %v5798
      %v5884 = vmul.f32 %v5640, %v5800
      %v5885 = vmul.f32 %v5642, %v5802
      %v5886 = vmul.f32 %v5644, %v5804
      %v5887 = vmul.f32 %v5646, %v5806
      %v5888 = vmul.f32 %v5648, %v5808
      %v5889 = vmul.f32 %v5650, %v5810
      %v5890 = vmul.f32 %v5652, %v5812
      %v5891 = vmul.f32 %v5654, %v5814
      %v5892 = vmul.f32 %v5656, %v5816
      %v5893 = vmul.f32 %v5658, %v5818
      %v5894 = vmul.f32 %v5660, %v5820
      %v5895 = vmul.f32 %v5662, %v5822
      %v5896 = vmul.f32 %v5664, %v5824
      %v5897 = vmul.f32 %v5666, %v5826
      %v5898 = vmul.f32 %v5668, %v5828
      %v5899 = vmul.f32 %v5670, %v5830
      %v5900 = vmul.f32 %v5672, %v5832
      %v5901 = vmul.f32 %v5674, %v5834
      %v5902 = vmul.f32 %v5676, %v5836
      %v5903 = vmul.f32 %v5678, %v5838
      %v5904 = vmul.f32 %v5680, %v5840
      %5937 = vrot.lane.b32.xlu0 %v5681, 64
      %v5938 = vpop.permute.xlu0 %5937
      %5939 = vrot.lane.b32.xlu0 %v5682, 64
      %v5940 = vpop.permute.xlu0 %5939
      %5941 = vrot.lane.b32.xlu0 %v5683, 64
      %v5942 = vpop.permute.xlu0 %5941
      %5943 = vrot.lane.b32.xlu0 %v5684, 64
      %v5944 = vpop.permute.xlu0 %5943
      %5945 = vrot.lane.b32.xlu0 %v5685, 64
      %v5946 = vpop.permute.xlu0 %5945
      %5947 = vrot.lane.b32.xlu0 %v5686, 64
      %v5948 = vpop.permute.xlu0 %5947
      %5949 = vrot.lane.b32.xlu0 %v5687, 64
      %v5950 = vpop.permute.xlu0 %5949
      %5951 = vrot.lane.b32.xlu0 %v5688, 64
      %v5952 = vpop.permute.xlu0 %5951
      %5953 = vrot.lane.b32.xlu0 %v5689, 64
      %v5954 = vpop.permute.xlu0 %5953
      %5955 = vrot.lane.b32.xlu0 %v5690, 64
      %v5956 = vpop.permute.xlu0 %5955
      %5957 = vrot.lane.b32.xlu0 %v5691, 64
      %v5958 = vpop.permute.xlu0 %5957
      %5959 = vrot.lane.b32.xlu0 %v5692, 64
      %v5960 = vpop.permute.xlu0 %5959
      %5961 = vrot.lane.b32.xlu0 %v5693, 64
      %v5962 = vpop.permute.xlu0 %5961
      %5963 = vrot.lane.b32.xlu0 %v5694, 64
      %v5964 = vpop.permute.xlu0 %5963
      %5965 = vrot.lane.b32.xlu0 %v5695, 64
      %v5966 = vpop.permute.xlu0 %5965
      %5967 = vrot.lane.b32.xlu0 %v5696, 64
      %v5968 = vpop.permute.xlu0 %5967
      %5969 = vrot.lane.b32.xlu0 %v5697, 64
      %v5970 = vpop.permute.xlu0 %5969
      %5971 = vrot.lane.b32.xlu0 %v5698, 64
      %v5972 = vpop.permute.xlu0 %5971
      %5973 = vrot.lane.b32.xlu0 %v5699, 64
      %v5974 = vpop.permute.xlu0 %5973
      %5975 = vrot.lane.b32.xlu0 %v5700, 64
      %v5976 = vpop.permute.xlu0 %5975
      %5977 = vrot.lane.b32.xlu0 %v5701, 64
      %v5978 = vpop.permute.xlu0 %5977
      %5979 = vrot.lane.b32.xlu0 %v5702, 64
      %v5980 = vpop.permute.xlu0 %5979
      %5981 = vrot.lane.b32.xlu0 %v5703, 64
      %v5982 = vpop.permute.xlu0 %5981
      %5983 = vrot.lane.b32.xlu0 %v5704, 64
      %v5984 = vpop.permute.xlu0 %5983
      %5985 = vrot.lane.b32.xlu0 %v5705, 64
      %v5986 = vpop.permute.xlu0 %5985
      %5987 = vrot.lane.b32.xlu0 %v5706, 64
      %v5988 = vpop.permute.xlu0 %5987
      %5989 = vrot.lane.b32.xlu0 %v5707, 64
      %v5990 = vpop.permute.xlu0 %5989
      %5991 = vrot.lane.b32.xlu0 %v5708, 64
      %v5992 = vpop.permute.xlu0 %5991
      %5993 = vrot.lane.b32.xlu0 %v5709, 64
      %v5994 = vpop.permute.xlu0 %5993
      %5995 = vrot.lane.b32.xlu0 %v5710, 64
      %v5996 = vpop.permute.xlu0 %5995
      %5997 = vrot.lane.b32.xlu0 %v5711, 64
      %v5998 = vpop.permute.xlu0 %5997
      %5999 = vrot.lane.b32.xlu0 %v5712, 64
      %v6000 = vpop.permute.xlu0 %5999
      %v6033 = vmul.f32 %v5618, %v5938
      %v6034 = vmul.f32 %v5620, %v5940
      %v6035 = vmul.f32 %v5622, %v5942
      %v6036 = vmul.f32 %v5624, %v5944
      %v6037 = vmul.f32 %v5626, %v5946
      %v6038 = vmul.f32 %v5628, %v5948
      %v6039 = vmul.f32 %v5630, %v5950
      %v6040 = vmul.f32 %v5632, %v5952
      %v6041 = vmul.f32 %v5634, %v5954
      %v6042 = vmul.f32 %v5636, %v5956
      %v6043 = vmul.f32 %v5638, %v5958
      %v6044 = vmul.f32 %v5640, %v5960
      %v6045 = vmul.f32 %v5642, %v5962
      %v6046 = vmul.f32 %v5644, %v5964
      %v6047 = vmul.f32 %v5646, %v5966
      %v6048 = vmul.f32 %v5648, %v5968
      %v6049 = vmul.f32 %v5650, %v5970
      %v6050 = vmul.f32 %v5652, %v5972
      %v6051 = vmul.f32 %v5654, %v5974
      %v6052 = vmul.f32 %v5656, %v5976
      %v6053 = vmul.f32 %v5658, %v5978
      %v6054 = vmul.f32 %v5660, %v5980
      %v6055 = vmul.f32 %v5662, %v5982
      %v6056 = vmul.f32 %v5664, %v5984
      %v6057 = vmul.f32 %v5666, %v5986
      %v6058 = vmul.f32 %v5668, %v5988
      %v6059 = vmul.f32 %v5670, %v5990
      %v6060 = vmul.f32 %v5672, %v5992
      %v6061 = vmul.f32 %v5674, %v5994
      %v6062 = vmul.f32 %v5676, %v5996
      %v6063 = vmul.f32 %v5678, %v5998
      %v6064 = vmul.f32 %v5680, %v6000
      %6097 = vrot.lane.b32.xlu0 %v6033, 32
      %v6098 = vpop.permute.xlu0 %6097
      %6099 = vrot.lane.b32.xlu0 %v6034, 32
      %v6100 = vpop.permute.xlu0 %6099
      %6101 = vrot.lane.b32.xlu0 %v6035, 32
      %v6102 = vpop.permute.xlu0 %6101
      %6103 = vrot.lane.b32.xlu0 %v6036, 32
      %v6104 = vpop.permute.xlu0 %6103
      %6105 = vrot.lane.b32.xlu0 %v6037, 32
      %v6106 = vpop.permute.xlu0 %6105
      %6107 = vrot.lane.b32.xlu0 %v6038, 32
      %v6108 = vpop.permute.xlu0 %6107
      %6109 = vrot.lane.b32.xlu0 %v6039, 32
      %v6110 = vpop.permute.xlu0 %6109
      %6111 = vrot.lane.b32.xlu0 %v6040, 32
      %v6112 = vpop.permute.xlu0 %6111
      %6113 = vrot.lane.b32.xlu0 %v6041, 32
      %v6114 = vpop.permute.xlu0 %6113
      %6115 = vrot.lane.b32.xlu0 %v6042, 32
      %v6116 = vpop.permute.xlu0 %6115
      %6117 = vrot.lane.b32.xlu0 %v6043, 32
      %v6118 = vpop.permute.xlu0 %6117
      %6119 = vrot.lane.b32.xlu0 %v6044, 32
      %v6120 = vpop.permute.xlu0 %6119
      %6121 = vrot.lane.b32.xlu0 %v6045, 32
      %v6122 = vpop.permute.xlu0 %6121
      %6123 = vrot.lane.b32.xlu0 %v6046, 32
      %v6124 = vpop.permute.xlu0 %6123
      %6125 = vrot.lane.b32.xlu0 %v6047, 32
      %v6126 = vpop.permute.xlu0 %6125
      %6127 = vrot.lane.b32.xlu0 %v6048, 32
      %v6128 = vpop.permute.xlu0 %6127
      %6129 = vrot.lane.b32.xlu0 %v6049, 32
      %v6130 = vpop.permute.xlu0 %6129
      %6131 = vrot.lane.b32.xlu0 %v6050, 32
      %v6132 = vpop.permute.xlu0 %6131
      %6133 = vrot.lane.b32.xlu0 %v6051, 32
      %v6134 = vpop.permute.xlu0 %6133
      %6135 = vrot.lane.b32.xlu0 %v6052, 32
      %v6136 = vpop.permute.xlu0 %6135
      %6137 = vrot.lane.b32.xlu0 %v6053, 32
      %v6138 = vpop.permute.xlu0 %6137
      %6139 = vrot.lane.b32.xlu0 %v6054, 32
      %v6140 = vpop.permute.xlu0 %6139
      %6141 = vrot.lane.b32.xlu0 %v6055, 32
      %v6142 = vpop.permute.xlu0 %6141
      %6143 = vrot.lane.b32.xlu0 %v6056, 32
      %v6144 = vpop.permute.xlu0 %6143
      %6145 = vrot.lane.b32.xlu0 %v6057, 32
      %v6146 = vpop.permute.xlu0 %6145
      %6147 = vrot.lane.b32.xlu0 %v6058, 32
      %v6148 = vpop.permute.xlu0 %6147
      %6149 = vrot.lane.b32.xlu0 %v6059, 32
      %v6150 = vpop.permute.xlu0 %6149
      %6151 = vrot.lane.b32.xlu0 %v6060, 32
      %v6152 = vpop.permute.xlu0 %6151
      %6153 = vrot.lane.b32.xlu0 %v6061, 32
      %v6154 = vpop.permute.xlu0 %6153
      %6155 = vrot.lane.b32.xlu0 %v6062, 32
      %v6156 = vpop.permute.xlu0 %6155
      %6157 = vrot.lane.b32.xlu0 %v6063, 32
      %v6158 = vpop.permute.xlu0 %6157
      %6159 = vrot.lane.b32.xlu0 %v6064, 32
      %v6160 = vpop.permute.xlu0 %6159
      %v6193 = vadd.f32 %v5873, %v6098
      %v6194 = vadd.f32 %v5874, %v6100
      %v6195 = vadd.f32 %v5875, %v6102
      %v6196 = vadd.f32 %v5876, %v6104
      %v6197 = vadd.f32 %v5877, %v6106
      %v6198 = vadd.f32 %v5878, %v6108
      %v6199 = vadd.f32 %v5879, %v6110
      %v6200 = vadd.f32 %v5880, %v6112
      %v6201 = vadd.f32 %v5881, %v6114
      %v6202 = vadd.f32 %v5882, %v6116
      %v6203 = vadd.f32 %v5883, %v6118
      %v6204 = vadd.f32 %v5884, %v6120
      %v6205 = vadd.f32 %v5885, %v6122
      %v6206 = vadd.f32 %v5886, %v6124
      %v6207 = vadd.f32 %v5887, %v6126
      %v6208 = vadd.f32 %v5888, %v6128
      %v6209 = vadd.f32 %v5889, %v6130
      %v6210 = vadd.f32 %v5890, %v6132
      %v6211 = vadd.f32 %v5891, %v6134
      %v6212 = vadd.f32 %v5892, %v6136
      %v6213 = vadd.f32 %v5893, %v6138
      %v6214 = vadd.f32 %v5894, %v6140
      %v6215 = vadd.f32 %v5895, %v6142
      %v6216 = vadd.f32 %v5896, %v6144
      %v6217 = vadd.f32 %v5897, %v6146
      %v6218 = vadd.f32 %v5898, %v6148
      %v6219 = vadd.f32 %v5899, %v6150
      %v6220 = vadd.f32 %v5900, %v6152
      %v6221 = vadd.f32 %v5901, %v6154
      %v6222 = vadd.f32 %v5902, %v6156
      %v6223 = vadd.f32 %v5903, %v6158
      %v6224 = vadd.f32 %v5904, %v6160
      %v6225 = vtanh.pop %v6193
      %v6226 = vtanh.pop %v6194
      %v6227 = vtanh.pop %v6195
      %v6228 = vtanh.pop %v6196
      %v6229 = vtanh.pop %v6197
      %v6230 = vtanh.pop %v6198
      %v6231 = vtanh.pop %v6199
      %v6232 = vtanh.pop %v6200
      %v6233 = vtanh.pop %v6201
      %v6234 = vtanh.pop %v6202
      %v6235 = vtanh.pop %v6203
      %v6236 = vtanh.pop %v6204
      %v6237 = vtanh.pop %v6205
      %v6238 = vtanh.pop %v6206
      %v6239 = vtanh.pop %v6207
      %v6240 = vtanh.pop %v6208
      %v6241 = vtanh.pop %v6209
      %v6242 = vtanh.pop %v6210
      %v6243 = vtanh.pop %v6211
      %v6244 = vtanh.pop %v6212
      %v6245 = vtanh.pop %v6213
      %v6246 = vtanh.pop %v6214
      %v6247 = vtanh.pop %v6215
      %v6248 = vtanh.pop %v6216
      %v6249 = vtanh.pop %v6217
      %v6250 = vtanh.pop %v6218
      %v6251 = vtanh.pop %v6219
      %v6252 = vtanh.pop %v6220
      %v6253 = vtanh.pop %v6221
      %v6254 = vtanh.pop %v6222
      %v6255 = vtanh.pop %v6223
      %v6256 = vtanh.pop %v6224
      %6289 = vrot.lane.b32.xlu0 %v6225, 64
      %v6290 = vpop.permute.xlu0 %6289
      %6291 = vrot.lane.b32.xlu0 %v6226, 64
      %v6292 = vpop.permute.xlu0 %6291
      %6293 = vrot.lane.b32.xlu0 %v6227, 64
      %v6294 = vpop.permute.xlu0 %6293
      %6295 = vrot.lane.b32.xlu0 %v6228, 64
      %v6296 = vpop.permute.xlu0 %6295
      %6297 = vrot.lane.b32.xlu0 %v6229, 64
      %v6298 = vpop.permute.xlu0 %6297
      %6299 = vrot.lane.b32.xlu0 %v6230, 64
      %v6300 = vpop.permute.xlu0 %6299
      %6301 = vrot.lane.b32.xlu0 %v6231, 64
      %v6302 = vpop.permute.xlu0 %6301
      %6303 = vrot.lane.b32.xlu0 %v6232, 64
      %v6304 = vpop.permute.xlu0 %6303
      %6305 = vrot.lane.b32.xlu0 %v6233, 64
      %v6306 = vpop.permute.xlu0 %6305
      %6307 = vrot.lane.b32.xlu0 %v6234, 64
      %v6308 = vpop.permute.xlu0 %6307
      %6309 = vrot.lane.b32.xlu0 %v6235, 64
      %v6310 = vpop.permute.xlu0 %6309
      %6311 = vrot.lane.b32.xlu0 %v6236, 64
      %v6312 = vpop.permute.xlu0 %6311
      %6313 = vrot.lane.b32.xlu0 %v6237, 64
      %v6314 = vpop.permute.xlu0 %6313
      %6315 = vrot.lane.b32.xlu0 %v6238, 64
      %v6316 = vpop.permute.xlu0 %6315
      %6317 = vrot.lane.b32.xlu0 %v6239, 64
      %v6318 = vpop.permute.xlu0 %6317
      %6319 = vrot.lane.b32.xlu0 %v6240, 64
      %v6320 = vpop.permute.xlu0 %6319
      %6321 = vrot.lane.b32.xlu0 %v6241, 64
      %v6322 = vpop.permute.xlu0 %6321
      %6323 = vrot.lane.b32.xlu0 %v6242, 64
      %v6324 = vpop.permute.xlu0 %6323
      %6325 = vrot.lane.b32.xlu0 %v6243, 64
      %v6326 = vpop.permute.xlu0 %6325
      %6327 = vrot.lane.b32.xlu0 %v6244, 64
      %v6328 = vpop.permute.xlu0 %6327
      %6329 = vrot.lane.b32.xlu0 %v6245, 64
      %v6330 = vpop.permute.xlu0 %6329
      %6331 = vrot.lane.b32.xlu0 %v6246, 64
      %v6332 = vpop.permute.xlu0 %6331
      %6333 = vrot.lane.b32.xlu0 %v6247, 64
      %v6334 = vpop.permute.xlu0 %6333
      %6335 = vrot.lane.b32.xlu0 %v6248, 64
      %v6336 = vpop.permute.xlu0 %6335
      %6337 = vrot.lane.b32.xlu0 %v6249, 64
      %v6338 = vpop.permute.xlu0 %6337
      %6339 = vrot.lane.b32.xlu0 %v6250, 64
      %v6340 = vpop.permute.xlu0 %6339
      %6341 = vrot.lane.b32.xlu0 %v6251, 64
      %v6342 = vpop.permute.xlu0 %6341
      %6343 = vrot.lane.b32.xlu0 %v6252, 64
      %v6344 = vpop.permute.xlu0 %6343
      %6345 = vrot.lane.b32.xlu0 %v6253, 64
      %v6346 = vpop.permute.xlu0 %6345
      %6347 = vrot.lane.b32.xlu0 %v6254, 64
      %v6348 = vpop.permute.xlu0 %6347
      %6349 = vrot.lane.b32.xlu0 %v6255, 64
      %v6350 = vpop.permute.xlu0 %6349
      %6351 = vrot.lane.b32.xlu0 %v6256, 64
      %v6352 = vpop.permute.xlu0 %6351
      %v6385 = vmul.f32 %v5618, %v6290
      %v6386 = vmul.f32 %v5620, %v6292
      %v6387 = vmul.f32 %v5622, %v6294
      %v6388 = vmul.f32 %v5624, %v6296
      %v6389 = vmul.f32 %v5626, %v6298
      %v6390 = vmul.f32 %v5628, %v6300
      %v6391 = vmul.f32 %v5630, %v6302
      %v6392 = vmul.f32 %v5632, %v6304
      %v6393 = vmul.f32 %v5634, %v6306
      %v6394 = vmul.f32 %v5636, %v6308
      %v6395 = vmul.f32 %v5638, %v6310
      %v6396 = vmul.f32 %v5640, %v6312
      %v6397 = vmul.f32 %v5642, %v6314
      %v6398 = vmul.f32 %v5644, %v6316
      %v6399 = vmul.f32 %v5646, %v6318
      %v6400 = vmul.f32 %v5648, %v6320
      %v6401 = vmul.f32 %v5650, %v6322
      %v6402 = vmul.f32 %v5652, %v6324
      %v6403 = vmul.f32 %v5654, %v6326
      %v6404 = vmul.f32 %v5656, %v6328
      %v6405 = vmul.f32 %v5658, %v6330
      %v6406 = vmul.f32 %v5660, %v6332
      %v6407 = vmul.f32 %v5662, %v6334
      %v6408 = vmul.f32 %v5664, %v6336
      %v6409 = vmul.f32 %v5666, %v6338
      %v6410 = vmul.f32 %v5668, %v6340
      %v6411 = vmul.f32 %v5670, %v6342
      %v6412 = vmul.f32 %v5672, %v6344
      %v6413 = vmul.f32 %v5674, %v6346
      %v6414 = vmul.f32 %v5676, %v6348
      %v6415 = vmul.f32 %v5678, %v6350
      %v6416 = vmul.f32 %v5680, %v6352
      %6449 = vrot.lane.b32.xlu0 %v6385, 32
      %v6450 = vpop.permute.xlu0 %6449
      %6451 = vrot.lane.b32.xlu0 %v6386, 32
      %v6452 = vpop.permute.xlu0 %6451
      %6453 = vrot.lane.b32.xlu0 %v6387, 32
      %v6454 = vpop.permute.xlu0 %6453
      %6455 = vrot.lane.b32.xlu0 %v6388, 32
      %v6456 = vpop.permute.xlu0 %6455
      %6457 = vrot.lane.b32.xlu0 %v6389, 32
      %v6458 = vpop.permute.xlu0 %6457
      %6459 = vrot.lane.b32.xlu0 %v6390, 32
      %v6460 = vpop.permute.xlu0 %6459
      %6461 = vrot.lane.b32.xlu0 %v6391, 32
      %v6462 = vpop.permute.xlu0 %6461
      %6463 = vrot.lane.b32.xlu0 %v6392, 32
      %v6464 = vpop.permute.xlu0 %6463
      %6465 = vrot.lane.b32.xlu0 %v6393, 32
      %v6466 = vpop.permute.xlu0 %6465
      %6467 = vrot.lane.b32.xlu0 %v6394, 32
      %v6468 = vpop.permute.xlu0 %6467
      %6469 = vrot.lane.b32.xlu0 %v6395, 32
      %v6470 = vpop.permute.xlu0 %6469
      %6471 = vrot.lane.b32.xlu0 %v6396, 32
      %v6472 = vpop.permute.xlu0 %6471
      %6473 = vrot.lane.b32.xlu0 %v6397, 32
      %v6474 = vpop.permute.xlu0 %6473
      %6475 = vrot.lane.b32.xlu0 %v6398, 32
      %v6476 = vpop.permute.xlu0 %6475
      %6477 = vrot.lane.b32.xlu0 %v6399, 32
      %v6478 = vpop.permute.xlu0 %6477
      %6479 = vrot.lane.b32.xlu0 %v6400, 32
      %v6480 = vpop.permute.xlu0 %6479
      %6481 = vrot.lane.b32.xlu0 %v6401, 32
      %v6482 = vpop.permute.xlu0 %6481
      %6483 = vrot.lane.b32.xlu0 %v6402, 32
      %v6484 = vpop.permute.xlu0 %6483
      %6485 = vrot.lane.b32.xlu0 %v6403, 32
      %v6486 = vpop.permute.xlu0 %6485
      %6487 = vrot.lane.b32.xlu0 %v6404, 32
      %v6488 = vpop.permute.xlu0 %6487
      %6489 = vrot.lane.b32.xlu0 %v6405, 32
      %v6490 = vpop.permute.xlu0 %6489
      %6491 = vrot.lane.b32.xlu0 %v6406, 32
      %v6492 = vpop.permute.xlu0 %6491
      %6493 = vrot.lane.b32.xlu0 %v6407, 32
      %v6494 = vpop.permute.xlu0 %6493
      %6495 = vrot.lane.b32.xlu0 %v6408, 32
      %v6496 = vpop.permute.xlu0 %6495
      %6497 = vrot.lane.b32.xlu0 %v6409, 32
      %v6498 = vpop.permute.xlu0 %6497
      %6499 = vrot.lane.b32.xlu0 %v6410, 32
      %v6500 = vpop.permute.xlu0 %6499
      %6501 = vrot.lane.b32.xlu0 %v6411, 32
      %v6502 = vpop.permute.xlu0 %6501
      %6503 = vrot.lane.b32.xlu0 %v6412, 32
      %v6504 = vpop.permute.xlu0 %6503
      %6505 = vrot.lane.b32.xlu0 %v6413, 32
      %v6506 = vpop.permute.xlu0 %6505
      %6507 = vrot.lane.b32.xlu0 %v6414, 32
      %v6508 = vpop.permute.xlu0 %6507
      %6509 = vrot.lane.b32.xlu0 %v6415, 32
      %v6510 = vpop.permute.xlu0 %6509
      %6511 = vrot.lane.b32.xlu0 %v6416, 32
      %v6512 = vpop.permute.xlu0 %6511
      %6545 = vst.msk [vmem:[%s345] sm:$0xff] %vm833, %v6450
      %6546 = vst.msk [vmem:[%s345 + $0x8] sm:$0xff] %vm833, %v6452
      %6547 = vst.msk [vmem:[%s345 + $0x10] sm:$0xff] %vm833, %v6454
      %6548 = vst.msk [vmem:[%s345 + $0x18] sm:$0xff] %vm833, %v6456
      %6549 = vst.msk [vmem:[%s345 + $0x20] sm:$0xff] %vm833, %v6458
      %6550 = vst.msk [vmem:[%s345 + $0x28] sm:$0xff] %vm833, %v6460
      %6551 = vst.msk [vmem:[%s345 + $0x30] sm:$0xff] %vm833, %v6462
      %6552 = vst.msk [vmem:[%s345 + $0x38] sm:$0xff] %vm833, %v6464
      %6553 = vst.msk [vmem:[%s345 + $0x40] sm:$0xff] %vm833, %v6466
      %6554 = vst.msk [vmem:[%s345 + $0x48] sm:$0xff] %vm833, %v6468
      %6555 = vst.msk [vmem:[%s345 + $0x50] sm:$0xff] %vm833, %v6470
      %6556 = vst.msk [vmem:[%s345 + $0x58] sm:$0xff] %vm833, %v6472
      %6557 = vst.msk [vmem:[%s345 + $0x60] sm:$0xff] %vm833, %v6474
      %6558 = vst.msk [vmem:[%s345 + $0x68] sm:$0xff] %vm833, %v6476
      %6559 = vst.msk [vmem:[%s345 + $0x70] sm:$0xff] %vm833, %v6478
      %6560 = vst.msk [vmem:[%s345 + $0x78] sm:$0xff] %vm833, %v6480
      %6561 = vst.msk [vmem:[%s345 + $0x80] sm:$0xff] %vm833, %v6482
      %6562 = vst.msk [vmem:[%s345 + $0x88] sm:$0xff] %vm833, %v6484
      %6563 = vst.msk [vmem:[%s345 + $0x90] sm:$0xff] %vm833, %v6486
      %6564 = vst.msk [vmem:[%s345 + $0x98] sm:$0xff] %vm833, %v6488
      %6565 = vst.msk [vmem:[%s345 + $0xa0] sm:$0xff] %vm833, %v6490
      %6566 = vst.msk [vmem:[%s345 + $0xa8] sm:$0xff] %vm833, %v6492
      %6567 = vst.msk [vmem:[%s345 + $0xb0] sm:$0xff] %vm833, %v6494
      %6568 = vst.msk [vmem:[%s345 + $0xb8] sm:$0xff] %vm833, %v6496
      %6569 = vst.msk [vmem:[%s345 + $0xc0] sm:$0xff] %vm833, %v6498
      %6570 = vst.msk [vmem:[%s345 + $0xc8] sm:$0xff] %vm833, %v6500
      %6571 = vst.msk [vmem:[%s345 + $0xd0] sm:$0xff] %vm833, %v6502
      %6572 = vst.msk [vmem:[%s345 + $0xd8] sm:$0xff] %vm833, %v6504
      %6573 = vst.msk [vmem:[%s345 + $0xe0] sm:$0xff] %vm833, %v6506
      %6574 = vst.msk [vmem:[%s345 + $0xe8] sm:$0xff] %vm833, %v6508
      %6575 = vst.msk [vmem:[%s345 + $0xf0] sm:$0xff] %vm833, %v6510
      %6576 = vst.msk [vmem:[%s345 + $0xf8] sm:$0xff] %vm833, %v6512
      %vm6577 = vcmask 523520
      %6578 = vst.msk [vmem:[%s345] sm:$0xff] %vm6577, %v6193
      %6579 = vst.msk [vmem:[%s345 + $0x8] sm:$0xff] %vm6577, %v6194
      %6580 = vst.msk [vmem:[%s345 + $0x10] sm:$0xff] %vm6577, %v6195
      %6581 = vst.msk [vmem:[%s345 + $0x18] sm:$0xff] %vm6577, %v6196
      %6582 = vst.msk [vmem:[%s345 + $0x20] sm:$0xff] %vm6577, %v6197
      %6583 = vst.msk [vmem:[%s345 + $0x28] sm:$0xff] %vm6577, %v6198
      %6584 = vst.msk [vmem:[%s345 + $0x30] sm:$0xff] %vm6577, %v6199
      %6585 = vst.msk [vmem:[%s345 + $0x38] sm:$0xff] %vm6577, %v6200
      %6586 = vst.msk [vmem:[%s345 + $0x40] sm:$0xff] %vm6577, %v6201
      %6587 = vst.msk [vmem:[%s345 + $0x48] sm:$0xff] %vm6577, %v6202
      %6588 = vst.msk [vmem:[%s345 + $0x50] sm:$0xff] %vm6577, %v6203
      %6589 = vst.msk [vmem:[%s345 + $0x58] sm:$0xff] %vm6577, %v6204
      %6590 = vst.msk [vmem:[%s345 + $0x60] sm:$0xff] %vm6577, %v6205
      %6591 = vst.msk [vmem:[%s345 + $0x68] sm:$0xff] %vm6577, %v6206
      %6592 = vst.msk [vmem:[%s345 + $0x70] sm:$0xff] %vm6577, %v6207
      %6593 = vst.msk [vmem:[%s345 + $0x78] sm:$0xff] %vm6577, %v6208
      %6594 = vst.msk [vmem:[%s345 + $0x80] sm:$0xff] %vm6577, %v6209
      %6595 = vst.msk [vmem:[%s345 + $0x88] sm:$0xff] %vm6577, %v6210
      %6596 = vst.msk [vmem:[%s345 + $0x90] sm:$0xff] %vm6577, %v6211
      %6597 = vst.msk [vmem:[%s345 + $0x98] sm:$0xff] %vm6577, %v6212
      %6598 = vst.msk [vmem:[%s345 + $0xa0] sm:$0xff] %vm6577, %v6213
      %6599 = vst.msk [vmem:[%s345 + $0xa8] sm:$0xff] %vm6577, %v6214
      %6600 = vst.msk [vmem:[%s345 + $0xb0] sm:$0xff] %vm6577, %v6215
      %6601 = vst.msk [vmem:[%s345 + $0xb8] sm:$0xff] %vm6577, %v6216
      %6602 = vst.msk [vmem:[%s345 + $0xc0] sm:$0xff] %vm6577, %v6217
      %6603 = vst.msk [vmem:[%s345 + $0xc8] sm:$0xff] %vm6577, %v6218
      %6604 = vst.msk [vmem:[%s345 + $0xd0] sm:$0xff] %vm6577, %v6219
      %6605 = vst.msk [vmem:[%s345 + $0xd8] sm:$0xff] %vm6577, %v6220
      %6606 = vst.msk [vmem:[%s345 + $0xe0] sm:$0xff] %vm6577, %v6221
      %6607 = vst.msk [vmem:[%s345 + $0xe8] sm:$0xff] %vm6577, %v6222
      %6608 = vst.msk [vmem:[%s345 + $0xf0] sm:$0xff] %vm6577, %v6223
      %6609 = vst.msk [vmem:[%s345 + $0xf8] sm:$0xff] %vm6577, %v6224
      %s6610 = smul.u32 32, %s22
      %p6611 = scmp.lt.s32.totalorder %s21, 1
      %s6612 = scalar_select %p6611, %s21, 1
      %p6613 = scmp.lt.s32.totalorder %s6610, 31
      %s6614 = scalar_select %p6613, %s6610, 31
      %s6615 = smul.addr %s6612, 32
      %s6616 = sadd.s32 %s6614, %s6615
      %s6617 = smul.addr %s6616, 8
      %s6618 = scalar_lea.vmem %s6, %s6617
      // Predicated region
      $region45: #{tpu_custom_call.1} parent=43 // pred_check
        %p6619 = pneg %p194
      $region46: #{tpu_custom_call.1} parent=43 // pred_check_branch
        %6621 = sbr.rel (%p6619) target = $region48
      $region47: #{tpu_custom_call.1} parent=43 // pred_region
        %s6622 = smul.u32 32, %s22
      $region48: #{tpu_custom_call.1} parent=43 // pred_fallthru
        _
    $region44: #{tpu_custom_call.1} parent=5 // pred_fallthru
      _
    %p6623 = scmp.le.s32.totalorder 2, %s12
    // Predicated region
    $region49: #{tpu_custom_call.1} parent=5 // pred_check
      %p6624 = pneg %p6623
    $region50: #{tpu_custom_call.1} parent=5 // pred_check_branch
      %6626 = sbr.rel (%p6624) target = $region52
    $region51: #{tpu_custom_call.1} parent=5 // pred_region
      %s6627 = ssub.s32 %s12, 2
      // Predicated region
      $region53: #{tpu_custom_call.1} parent=51 // pred_check
        %p6628 = pneg %p200
      $region54: #{tpu_custom_call.1} parent=51 // pred_check_branch
        %6630 = sbr.rel (%p6628) target = $region56
      $region55: #{tpu_custom_call.1} parent=51 // pred_region
        %s6631 = smul.u32 32, %s24
        %p6632 = scmp.lt.s32.totalorder %s23, 1
        %s6633 = scalar_select %p6632, %s23, 1
        %p6634 = scmp.lt.s32.totalorder %s6631, 31
        %s6635 = scalar_select %p6634, %s6631, 31
        %s6636 = smul.addr %s6633, 32
        %s6637 = sadd.s32 %s6635, %s6636
        %s6638 = smul.addr %s6637, 8
        %s6639 = scalar_lea.vmem %s6, %s6638
      $region56: #{tpu_custom_call.1} parent=51 // pred_fallthru
        _
    $region52: #{tpu_custom_call.1} parent=5 // pred_fallthru
      _
  $region6: #{tpu_custom_call.1} parent=0 // loop_footer
    %s16 = sadd.s32 1, %s12
  $region7: #{tpu_custom_call.1} parent=0 // loop_footer_branch
    %11 = sbr.rel target = $region3
  $region8: #{tpu_custom_call.1} parent=0 // loop_exit
    _

</llo_original>
